<compile_context>
chip_gen: v7x
topology: tpu7x:2x2x1
jax: 0.10.0
libtpu: 0.0.40
codegen_flags: <defaults>
</compile_context>

<pallas_src>
import functools

import jax
import jax.numpy as jnp
from jax.experimental import pallas as pl
from jax.experimental.pallas import tpu as pltpu

NUM_HIDDENS = 256
NUM_HEADS = 4
HEAD_DIM = NUM_HIDDENS // NUM_HEADS      # 64
FFN_HIDDEN = 1024
LN_EPS = 1e-5
NEG_BIG = -1e30                          # finite "minus infinity" for masking


def _layer_norm(x, gamma, beta):
    # x: (R, H) f32; gamma/beta: (1, H) f32. Matches nn.LayerNorm (biased var).
    mean = jnp.mean(x, axis=-1, keepdims=True)
    xc = x - mean
    var = jnp.mean(xc * xc, axis=-1, keepdims=True)
    inv = jax.lax.rsqrt(var + LN_EPS)
    return xc * inv * gamma + beta


def encoder_block_kernel(x_ref, m_ref, wqkv_ref, wo_ref,
                         g1_ref, b1_ref, w1_ref, w2_ref, g2_ref, b2_ref,
                         o_ref, o_scr):
    b_blk, S, H = x_ref.shape
    R = b_blk * S

    x = x_ref[...].reshape(R, H)                 # f32 residual path
    x_bf = x.astype(jnp.bfloat16)                # MXU operand

    # ---- fused Q|K|V projection: one (R,256)x(256,768) bf16 matmul, f32 acc ----
    qkv = jnp.dot(x_bf, wqkv_ref[...], preferred_element_type=jnp.float32)
    qkv_bf = qkv.astype(jnp.bfloat16)            # cast once; q/k/v never needed f32
    q3 = qkv_bf[:, 0 * H:1 * H].reshape(b_blk, S, H)   # lane-aligned 256-wide slices
    k3 = qkv_bf[:, 1 * H:2 * H].reshape(b_blk, S, H)
    v3 = qkv_bf[:, 2 * H:3 * H].reshape(b_blk, S, H)

    key_masked = m_ref[...] == 0                 # (b_blk, 1, S) broadcasts over queries
    scale = jnp.float32(1.0 / (HEAD_DIM ** 0.5))

    # ---- per-head attention (static 4-iter loop, batched over the batch block).
    #      Each head's output is stored at its lane offset in a VMEM scratch so the
    #      output projection is a single full-K Wo matmul. ----
    for h in range(NUM_HEADS):
        lo = h * HEAD_DIM
        hi = lo + HEAD_DIM
        qh = q3[:, :, lo:hi]                     # (b, S, D) bf16
        kh = k3[:, :, lo:hi]
        vh = v3[:, :, lo:hi]

        # Scores without materializing k.T: contract head dim of both operands.
        s = jnp.einsum('bqd,bkd->bqk', qh, kh,
                       preferred_element_type=jnp.float32) * scale      # (b, S, S)
        s = jnp.where(key_masked, jnp.float32(NEG_BIG), s)
        s = s - jnp.max(s, axis=-1, keepdims=True)
        p = jnp.exp(s)
        p = p * pl.reciprocal(jnp.sum(p, axis=-1, keepdims=True), approx=True)

        oh = jnp.einsum('bqk,bkd->bqd', p.astype(jnp.bfloat16), vh,
                        preferred_element_type=jnp.float32)             # (b, S, D)
        o_scr[:, lo:hi] = oh.reshape(R, HEAD_DIM)

    # ---- output projection: one (R,256)x(256,256) full-K matmul ----
    attn = jnp.dot(o_scr[...].astype(jnp.bfloat16), wo_ref[...],
                   preferred_element_type=jnp.float32)

    # ---- AddNorm 1: y1 = X + LayerNorm(attn) ----
    # TODO(synk): nn.Dropout(0.1) in AddNorm is identity in eval mode; not applied.
    y1 = x + _layer_norm(attn, g1_ref[...], b1_ref[...])

    # ---- position-wise FFN: relu(relu(y1 @ W1^T) @ W2^T) (module has both ReLUs) ----
    h1 = jnp.dot(y1.astype(jnp.bfloat16), w1_ref[...],
                 preferred_element_type=jnp.float32)
    h1 = jnp.maximum(h1, 0.0)
    h2 = jnp.dot(h1.astype(jnp.bfloat16), w2_ref[...],
                 preferred_element_type=jnp.float32)
    h2 = jnp.maximum(h2, 0.0)

    # ---- AddNorm 2 ----
    y2 = y1 + _layer_norm(h2, g2_ref[...], b2_ref[...])

    o_ref[...] = y2.reshape(b_blk, S, H).astype(o_ref.dtype)


def _tpu_caps():
    """Best-effort (vmem_bytes, num_tensorcores) for the local TPU device."""
    vmem = 64 << 20                      # conservative default (v7x has the smallest VMEM)
    try:
        info = pltpu.get_tpu_info()
        vmem = int(getattr(info, "vmem_capacity_bytes", vmem)) or vmem
    except Exception:
        pass
    kind = ""
    try:
        kind = jax.devices()[0].device_kind.lower()
    except Exception:
        pass
    # v4 / v5p / v7x expose 2 TensorCores per device; v5e / v6e are single-core.
    cores = 2 if any(t in kind for t in ("v7", "v4", "v5p")) else 1
    return vmem, cores


def _pick_batch_block(B, S, vmem_bytes, num_cores):
    """Rows-per-step (MXU M dim) targeting ~512-1024 rows, VMEM-budgeted,
    split across grid steps only when multiple TensorCores can each get >=256 rows."""
    rows_target = 1024
    # Approx. live VMEM per flattened row inside one step (f32 unless noted):
    #   x + qkv(f32 acc + bf16 copy) + O scratch + attn/y1/h2 + h1(1024) + one
    #   head's scores/probs + double-buffered x/out blocks.
    per_row_bytes = (
        4 * NUM_HIDDENS
        + (4 + 2) * 3 * NUM_HIDDENS
        + 4 * NUM_HIDDENS
        + 3 * 4 * NUM_HIDDENS
        + 4 * FFN_HIDDEN
        + 2 * 4 * S
        + 2 * 2 * 4 * NUM_HIDDENS
    )
    weight_bytes = 2 * 2 * (4 * NUM_HIDDENS * NUM_HIDDENS
                            + 2 * NUM_HIDDENS * FFN_HIDDEN)   # bf16, x2 buffers
    budget = max(int(0.5 * vmem_bytes) - weight_bytes, per_row_bytes * S)
    rows_cap = max(S, budget // per_row_bytes)
    rows = min(rows_target, rows_cap)
    bb = max(1, min(B, rows // S if rows >= S else 1))
    if num_cores >= 2 and B >= num_cores:
        per_core_rows = (B // num_cores) * S
        if per_core_rows >= 256:            # only split when each core stays MXU-full
            bb = min(bb, B // num_cores)
    while B % bb:
        bb -= 1
    return bb


def encoder_block_forward(x, i_m, params, *, batch_block=None):
    """x: (B, S, 256) f32; i_m: (B, S) int32 key-padding mask (0 = masked key)."""
    B, S, H = x.shape
    assert H == NUM_HIDDENS
    wq_t, wk_t, wv_t, wo_t, g1, b1, w1_t, w2_t, g2, b2 = params

    vmem_bytes, num_cores = _tpu_caps()
    if batch_block is None:
        batch_block = _pick_batch_block(B, S, vmem_bytes, num_cores)
    assert B % batch_block == 0
    grid = (B // batch_block,)

    # bf16 weights: halves weight DMA and feeds the MXU natively (f32 accumulate).
    to_bf16 = lambda w: w.astype(jnp.bfloat16)
    wqkv_t = jnp.concatenate([wq_t, wk_t, wv_t], axis=1).astype(jnp.bfloat16)  # (256,768)
    wo_t, w1_t, w2_t = map(to_bf16, (wo_t, w1_t, w2_t))
    g1 = g1.reshape(1, H).astype(jnp.float32)
    b1 = b1.reshape(1, H).astype(jnp.float32)
    g2 = g2.reshape(1, H).astype(jnp.float32)
    b2 = b2.reshape(1, H).astype(jnp.float32)

    m = i_m.reshape(B, 1, S).astype(jnp.int32)   # tiny key mask, one row per batch

    def w_spec(shape):
        return pl.BlockSpec(shape, lambda b: (0, 0))

    # Advisory cost estimate for XLA scheduling around the custom call.
    R_total = B * S
    flops = (2 * R_total * NUM_HIDDENS * (3 * NUM_HIDDENS)            # fused QKV
             + 4 * B * NUM_HEADS * S * S * HEAD_DIM                   # scores + PV
             + 2 * R_total * NUM_HIDDENS * NUM_HIDDENS                # Wo
             + 2 * 2 * R_total * NUM_HIDDENS * FFN_HIDDEN)            # FFN
    transcendentals = B * NUM_HEADS * S * S + 4 * R_total
    weight_bytes = 2 * (4 * NUM_HIDDENS * NUM_HIDDENS + 2 * NUM_HIDDENS * FFN_HIDDEN)
    bytes_accessed = (2 * 4 * R_total * NUM_HIDDENS + weight_bytes
                      + 4 * B * S + 4 * 4 * NUM_HIDDENS)
    cost = pl.CostEstimate(flops=int(flops), transcendentals=int(transcendentals),
                           bytes_accessed=int(bytes_accessed))

    vmem_limit = int(min(int(0.75 * vmem_bytes), 96 << 20))

    return pl.pallas_call(
        encoder_block_kernel,
        out_shape=jax.ShapeDtypeStruct((B, S, H), jnp.float32),
        grid=grid,
        in_specs=[
            pl.BlockSpec((batch_block, S, H), lambda b: (b, 0, 0)),   # X
            pl.BlockSpec((batch_block, 1, S), lambda b: (b, 0, 0)),   # key mask
            w_spec((H, 3 * H)),                                       # Wq|Wk|Wv fused
            w_spec((H, H)),                                           # Wo
            w_spec((1, H)), w_spec((1, H)),                           # LN1 gamma/beta
            w_spec((H, FFN_HIDDEN)), w_spec((FFN_HIDDEN, H)),         # FFN weights
            w_spec((1, H)), w_spec((1, H)),                           # LN2 gamma/beta
        ],
        out_specs=pl.BlockSpec((batch_block, S, H), lambda b: (b, 0, 0)),
        scratch_shapes=[pltpu.VMEM((batch_block * S, H), jnp.float32)],  # head-concat O
        compiler_params=pltpu.CompilerParams(
            dimension_semantics=("parallel",),
            vmem_limit_bytes=vmem_limit),
        cost_estimate=cost,
    )(x, m, wqkv_t, wo_t, g1, b1, w1_t, w2_t, g2, b2)


def reference_forward(x, i_m, params, matmul_dtype=jnp.float32):
    """Pure-JAX mirror of Encoder_block.forward (eval mode: dropout = identity).

    matmul_dtype=f32 reproduces the PyTorch f32 graph; bfloat16 emulates the
    kernel's reduced-precision matmul operands (f32 accumulation either way).
    """
    wq_t, wk_t, wv_t, wo_t, g1, b1, w1_t, w2_t, g2, b2 = params
    B, S, H = x.shape
    c = lambda t: t.astype(matmul_dtype)
    dot = functools.partial(jnp.matmul, preferred_element_type=jnp.float32)

    q = dot(c(x), c(wq_t))
    k = dot(c(x), c(wk_t))
    v = dot(c(x), c(wv_t))

    def split_heads(t):   # transpose_qkv
        return t.reshape(B, S, NUM_HEADS, HEAD_DIM).transpose(0, 2, 1, 3)

    qh, kh, vh = split_heads(q), split_heads(k), split_heads(v)
    a = dot(c(qh), jnp.swapaxes(c(kh), -1, -2)) / (HEAD_DIM ** 0.5)   # (B,4,S,S)
    m = i_m[:, None, None, :]                    # unsqueeze(-2) then unsqueeze(1)
    a = jnp.where(m == 0, NEG_BIG, a)
    a = jax.nn.softmax(a, axis=-1)
    o = dot(c(a), c(vh))                         # (B,4,S,D)
    o = o.transpose(0, 2, 1, 3).reshape(B, S, H)  # transpose_o
    x1 = dot(c(o), c(wo_t))

    def ln(t, g, bb):
        mu = jnp.mean(t, axis=-1, keepdims=True)
        var = jnp.mean((t - mu) ** 2, axis=-1, keepdims=True)
        return (t - mu) * jax.lax.rsqrt(var + LN_EPS) * g + bb

    y1 = x + ln(x1, g1, b1)
    h1 = jnp.maximum(dot(c(y1), c(w1_t)), 0.0)
    h2 = jnp.maximum(dot(c(h1), c(w2_t)), 0.0)
    return y1 + ln(h2, g2, b2)


if __name__ == "__main__":
    B, S, H = 4, 8, NUM_HIDDENS
    key = jax.random.PRNGKey(0)
    kx, kq, kk, kv, ko, k1, k2 = jax.random.split(key, 7)

    x = jax.random.normal(kx, (B, S, H), dtype=jnp.float32)

    # Key-padding mask I_m (B, S): trailing positions of some sequences are padding.
    i_m = jnp.ones((B, S), dtype=jnp.int32)
    i_m = i_m.at[1, 6:].set(0).at[3, 4:].set(0)

    def linear_t(kk_, fan_in, fan_out):
        # nn.Linear(bias=False) weight, stored pre-transposed so y = x @ W^T.
        bound = 1.0 / (fan_in ** 0.5)
        return jax.random.uniform(kk_, (fan_in, fan_out), jnp.float32, -bound, bound)

    params = (
        linear_t(kq, H, H), linear_t(kk, H, H), linear_t(kv, H, H), linear_t(ko, H, H),
        jnp.ones((H,), jnp.float32), jnp.zeros((H,), jnp.float32),       # LayerNorm 1
        linear_t(k1, H, FFN_HIDDEN), linear_t(k2, FFN_HIDDEN, H),        # FFN
        jnp.ones((H,), jnp.float32), jnp.zeros((H,), jnp.float32),       # LayerNorm 2
    )

    out = jax.block_until_ready(encoder_block_forward(x, i_m, params))
    assert out.shape == (B, S, H)
    assert bool(jnp.all(jnp.isfinite(out)))

    # Strict check vs. a numerics-matched (bf16-matmul, f32-accumulate) reference.
    ref_bf16 = reference_forward(x, i_m, params, matmul_dtype=jnp.bfloat16)
    assert jnp.allclose(out, ref_bf16, atol=5e-2, rtol=5e-2), "mismatch vs bf16 reference"

    # Sanity check vs. the full-f32 PyTorch-semantics reference (bf16-level tolerance).
    ref_f32 = reference_forward(x, i_m, params, matmul_dtype=jnp.float32)
    assert jnp.allclose(out, ref_f32, atol=1.5e-1, rtol=1e-1), "mismatch vs f32 reference"

    print("KERNEL_OK")
</pallas_src>

<mosaic_0001>
module attributes {stable_mosaic.version = 11 : i64} {
  func.func @encoder_block_kernel(%arg0: i32, %arg1: memref<4x8x256xf32, #tpu.memory_space<vmem>>, %arg2: memref<4x1x8xi32, #tpu.memory_space<vmem>>, %arg3: memref<256x768xbf16, #tpu.memory_space<vmem>>, %arg4: memref<256x256xbf16, #tpu.memory_space<vmem>>, %arg5: memref<1x256xf32, #tpu.memory_space<vmem>>, %arg6: memref<1x256xf32, #tpu.memory_space<vmem>>, %arg7: memref<256x1024xbf16, #tpu.memory_space<vmem>>, %arg8: memref<1024x256xbf16, #tpu.memory_space<vmem>>, %arg9: memref<1x256xf32, #tpu.memory_space<vmem>>, %arg10: memref<1x256xf32, #tpu.memory_space<vmem>>, %arg11: memref<4x8x256xf32, #tpu.memory_space<vmem>>, %arg12: memref<32x256xf32, #tpu.memory_space<vmem>>) attributes {dimension_semantics = [#tpu.dimension_semantics<parallel>], iteration_bounds = array<i64: 1>, scalar_prefetch = 0 : i64, scratch_operands = 1 : i64, tpu.core_type = #tpu.core_type<tc>, window_params = [{transform_indices = @transform_0, window_bounds = array<i64: 4, 8, 256>}, {transform_indices = @transform_1, window_bounds = array<i64: 4, 1, 8>}, {pipeline_mode = #tpu.pipeline_mode<synchronous>, transform_indices = @transform_2, window_bounds = array<i64: 256, 768>}, {pipeline_mode = #tpu.pipeline_mode<synchronous>, transform_indices = @transform_3, window_bounds = array<i64: 256, 256>}, {pipeline_mode = #tpu.pipeline_mode<synchronous>, transform_indices = @transform_4, window_bounds = array<i64: 1, 256>}, {pipeline_mode = #tpu.pipeline_mode<synchronous>, transform_indices = @transform_5, window_bounds = array<i64: 1, 256>}, {pipeline_mode = #tpu.pipeline_mode<synchronous>, transform_indices = @transform_6, window_bounds = array<i64: 256, 1024>}, {pipeline_mode = #tpu.pipeline_mode<synchronous>, transform_indices = @transform_7, window_bounds = array<i64: 1024, 256>}, {pipeline_mode = #tpu.pipeline_mode<synchronous>, transform_indices = @transform_8, window_bounds = array<i64: 1, 256>}, {pipeline_mode = #tpu.pipeline_mode<synchronous>, transform_indices = @transform_9, window_bounds = array<i64: 1, 256>}, {transform_indices = @transform_10, window_bounds = array<i64: 4, 8, 256>}]} {
    %c0 = arith.constant 0 : index
    %c0_0 = arith.constant 0 : index
    %c0_1 = arith.constant 0 : index
    %0 = vector.load %arg1[%c0, %c0_0, %c0_1] : memref<4x8x256xf32, #tpu.memory_space<vmem>>, vector<4x8x256xf32>
    %1 = vector.shape_cast %0 : vector<4x8x256xf32> to vector<32x256xf32>
    %2 = arith.truncf %1 : vector<32x256xf32> to vector<32x256xbf16>
    %c0_2 = arith.constant 0 : index
    %c0_3 = arith.constant 0 : index
    %3 = vector.load %arg3[%c0_2, %c0_3] : memref<256x768xbf16, #tpu.memory_space<vmem>>, vector<256x768xbf16>
    %cst = arith.constant dense<0.000000e+00> : vector<32x768xf32>
    %4 = tpu.matmul %2, %3, %cst {dimension_numbers = #tpu.dot_dimension_numbers<[1], [0], [0], [1], [0, 0, 1, 1], [], []>} : vector<32x256xbf16>, vector<256x768xbf16>, vector<32x768xf32> -> vector<32x768xf32>
    %5 = arith.truncf %4 : vector<32x768xf32> to vector<32x768xbf16>
    %6 = vector.extract_strided_slice %5 {offsets = [0, 0], sizes = [32, 256], strides = [1, 1]} : vector<32x768xbf16> to vector<32x256xbf16>
    %7 = vector.shape_cast %6 : vector<32x256xbf16> to vector<4x8x256xbf16>
    %8 = vector.extract_strided_slice %5 {offsets = [0, 256], sizes = [32, 256], strides = [1, 1]} : vector<32x768xbf16> to vector<32x256xbf16>
    %9 = vector.shape_cast %8 : vector<32x256xbf16> to vector<4x8x256xbf16>
    %10 = vector.extract_strided_slice %5 {offsets = [0, 512], sizes = [32, 256], strides = [1, 1]} : vector<32x768xbf16> to vector<32x256xbf16>
    %11 = vector.shape_cast %10 : vector<32x256xbf16> to vector<4x8x256xbf16>
    %c0_4 = arith.constant 0 : index
    %c0_5 = arith.constant 0 : index
    %c0_6 = arith.constant 0 : index
    %12 = vector.load %arg2[%c0_4, %c0_5, %c0_6] : memref<4x1x8xi32, #tpu.memory_space<vmem>>, vector<4x1x8xi32>
    %c0_i32 = arith.constant 0 : i32
    %13 = vector.broadcast %c0_i32 : i32 to vector<4x1x8xi32>
    %14 = arith.cmpi eq, %12, %13 : vector<4x1x8xi32>
    %15 = vector.extract_strided_slice %7 {offsets = [0, 0, 0], sizes = [4, 8, 64], strides = [1, 1, 1]} : vector<4x8x256xbf16> to vector<4x8x64xbf16>
    %16 = vector.extract_strided_slice %9 {offsets = [0, 0, 0], sizes = [4, 8, 64], strides = [1, 1, 1]} : vector<4x8x256xbf16> to vector<4x8x64xbf16>
    %17 = vector.extract_strided_slice %11 {offsets = [0, 0, 0], sizes = [4, 8, 64], strides = [1, 1, 1]} : vector<4x8x256xbf16> to vector<4x8x64xbf16>
    "tpu.trace_start"() <{level = 10 : i32, message = "bqd,bkd->bqk"}> : () -> ()
    %cst_7 = arith.constant dense<0.000000e+00> : vector<4x8x8xf32>
    %18 = tpu.matmul %15, %16, %cst_7 {dimension_numbers = #tpu.dot_dimension_numbers<[2], [2], [1], [1], [0, 0, 0, 1, 1, 1], [0], [0]>} : vector<4x8x64xbf16>, vector<4x8x64xbf16>, vector<4x8x8xf32> -> vector<4x8x8xf32>
    "tpu.trace_stop"() : () -> ()
    %cst_8 = arith.constant 1.250000e-01 : f32
    %19 = vector.broadcast %cst_8 : f32 to vector<4x8x8xf32>
    %20 = arith.mulf %18, %19 : vector<4x8x8xf32>
    %cst_9 = arith.constant -1.000000e+30 : f32
    %21 = vector.shape_cast %14 : vector<4x1x8xi1> to vector<4x1x8xi1>
    %22 = vector.broadcast %21 : vector<4x1x8xi1> to vector<4x8x8xi1>
    %23 = vector.broadcast %cst_9 : f32 to vector<4x8x8xf32>
    %24 = arith.select %22, %23, %20 : vector<4x8x8xi1>, vector<4x8x8xf32>
    %cst_10 = arith.constant dense<0xFF800000> : vector<4x8xf32>
    %25 = vector.multi_reduction <maximumf>, %24, %cst_10 [2] : vector<4x8x8xf32> to vector<4x8xf32>
    %26 = vector.shape_cast %25 : vector<4x8xf32> to vector<4x8x1xf32>
    %27 = vector.broadcast %26 : vector<4x8x1xf32> to vector<4x8x8xf32>
    %28 = arith.subf %24, %27 : vector<4x8x8xf32>
    %29 = math.exp %28 : vector<4x8x8xf32>
    %cst_11 = arith.constant dense<0.000000e+00> : vector<4x8xf32>
    %30 = vector.multi_reduction <add>, %29, %cst_11 [2] : vector<4x8x8xf32> to vector<4x8xf32>
    %31 = vector.shape_cast %30 : vector<4x8xf32> to vector<4x8x1xf32>
    %32 = tpu.reciprocal %31 {approx = true} : vector<4x8x1xf32> -> vector<4x8x1xf32>
    %33 = vector.broadcast %32 : vector<4x8x1xf32> to vector<4x8x8xf32>
    %34 = arith.mulf %29, %33 : vector<4x8x8xf32>
    %35 = arith.truncf %34 : vector<4x8x8xf32> to vector<4x8x8xbf16>
    "tpu.trace_start"() <{level = 10 : i32, message = "bqk,bkd->bqd"}> : () -> ()
    %cst_12 = arith.constant dense<0.000000e+00> : vector<4x8x64xf32>
    %36 = tpu.matmul %35, %17, %cst_12 {dimension_numbers = #tpu.dot_dimension_numbers<[2], [1], [1], [2], [0, 0, 0, 1, 1, 2], [0], [0]>} : vector<4x8x8xbf16>, vector<4x8x64xbf16>, vector<4x8x64xf32> -> vector<4x8x64xf32>
    "tpu.trace_stop"() : () -> ()
    %37 = vector.shape_cast %36 : vector<4x8x64xf32> to vector<32x64xf32>
    %c0_13 = arith.constant 0 : index
    %c0_14 = arith.constant 0 : index
    %38 = vector.load %arg12[%c0_13, %c0_14] : memref<32x256xf32, #tpu.memory_space<vmem>>, vector<32x64xf32>
    tpu.vector_store %arg12[%c0_13, %c0_14], %37 {strides = array<i32>} : memref<32x256xf32, #tpu.memory_space<vmem>>, vector<32x64xf32>,
    %39 = vector.extract_strided_slice %7 {offsets = [0, 0, 64], sizes = [4, 8, 64], strides = [1, 1, 1]} : vector<4x8x256xbf16> to vector<4x8x64xbf16>
    %40 = vector.extract_strided_slice %9 {offsets = [0, 0, 64], sizes = [4, 8, 64], strides = [1, 1, 1]} : vector<4x8x256xbf16> to vector<4x8x64xbf16>
    %41 = vector.extract_strided_slice %11 {offsets = [0, 0, 64], sizes = [4, 8, 64], strides = [1, 1, 1]} : vector<4x8x256xbf16> to vector<4x8x64xbf16>
    "tpu.trace_start"() <{level = 10 : i32, message = "bqd,bkd->bqk"}> : () -> ()
    %cst_15 = arith.constant dense<0.000000e+00> : vector<4x8x8xf32>
    %42 = tpu.matmul %39, %40, %cst_15 {dimension_numbers = #tpu.dot_dimension_numbers<[2], [2], [1], [1], [0, 0, 0, 1, 1, 1], [0], [0]>} : vector<4x8x64xbf16>, vector<4x8x64xbf16>, vector<4x8x8xf32> -> vector<4x8x8xf32>
    "tpu.trace_stop"() : () -> ()
    %cst_16 = arith.constant 1.250000e-01 : f32
    %43 = vector.broadcast %cst_16 : f32 to vector<4x8x8xf32>
    %44 = arith.mulf %42, %43 : vector<4x8x8xf32>
    %cst_17 = arith.constant -1.000000e+30 : f32
    %45 = vector.shape_cast %14 : vector<4x1x8xi1> to vector<4x1x8xi1>
    %46 = vector.broadcast %45 : vector<4x1x8xi1> to vector<4x8x8xi1>
    %47 = vector.broadcast %cst_17 : f32 to vector<4x8x8xf32>
    %48 = arith.select %46, %47, %44 : vector<4x8x8xi1>, vector<4x8x8xf32>
    %cst_18 = arith.constant dense<0xFF800000> : vector<4x8xf32>
    %49 = vector.multi_reduction <maximumf>, %48, %cst_18 [2] : vector<4x8x8xf32> to vector<4x8xf32>
    %50 = vector.shape_cast %49 : vector<4x8xf32> to vector<4x8x1xf32>
    %51 = vector.broadcast %50 : vector<4x8x1xf32> to vector<4x8x8xf32>
    %52 = arith.subf %48, %51 : vector<4x8x8xf32>
    %53 = math.exp %52 : vector<4x8x8xf32>
    %cst_19 = arith.constant dense<0.000000e+00> : vector<4x8xf32>
    %54 = vector.multi_reduction <add>, %53, %cst_19 [2] : vector<4x8x8xf32> to vector<4x8xf32>
    %55 = vector.shape_cast %54 : vector<4x8xf32> to vector<4x8x1xf32>
    %56 = tpu.reciprocal %55 {approx = true} : vector<4x8x1xf32> -> vector<4x8x1xf32>
    %57 = vector.broadcast %56 : vector<4x8x1xf32> to vector<4x8x8xf32>
    %58 = arith.mulf %53, %57 : vector<4x8x8xf32>
    %59 = arith.truncf %58 : vector<4x8x8xf32> to vector<4x8x8xbf16>
    "tpu.trace_start"() <{level = 10 : i32, message = "bqk,bkd->bqd"}> : () -> ()
    %cst_20 = arith.constant dense<0.000000e+00> : vector<4x8x64xf32>
    %60 = tpu.matmul %59, %41, %cst_20 {dimension_numbers = #tpu.dot_dimension_numbers<[2], [1], [1], [2], [0, 0, 0, 1, 1, 2], [0], [0]>} : vector<4x8x8xbf16>, vector<4x8x64xbf16>, vector<4x8x64xf32> -> vector<4x8x64xf32>
    "tpu.trace_stop"() : () -> ()
    %61 = vector.shape_cast %60 : vector<4x8x64xf32> to vector<32x64xf32>
    %c0_21 = arith.constant 0 : index
    %c64 = arith.constant 64 : index
    %62 = vector.load %arg12[%c0_21, %c64] : memref<32x256xf32, #tpu.memory_space<vmem>>, vector<32x64xf32>
    tpu.vector_store %arg12[%c0_21, %c64], %61 {strides = array<i32>} : memref<32x256xf32, #tpu.memory_space<vmem>>, vector<32x64xf32>,
    %63 = vector.extract_strided_slice %7 {offsets = [0, 0, 128], sizes = [4, 8, 64], strides = [1, 1, 1]} : vector<4x8x256xbf16> to vector<4x8x64xbf16>
    %64 = vector.extract_strided_slice %9 {offsets = [0, 0, 128], sizes = [4, 8, 64], strides = [1, 1, 1]} : vector<4x8x256xbf16> to vector<4x8x64xbf16>
    %65 = vector.extract_strided_slice %11 {offsets = [0, 0, 128], sizes = [4, 8, 64], strides = [1, 1, 1]} : vector<4x8x256xbf16> to vector<4x8x64xbf16>
    "tpu.trace_start"() <{level = 10 : i32, message = "bqd,bkd->bqk"}> : () -> ()
    %cst_22 = arith.constant dense<0.000000e+00> : vector<4x8x8xf32>
    %66 = tpu.matmul %63, %64, %cst_22 {dimension_numbers = #tpu.dot_dimension_numbers<[2], [2], [1], [1], [0, 0, 0, 1, 1, 1], [0], [0]>} : vector<4x8x64xbf16>, vector<4x8x64xbf16>, vector<4x8x8xf32> -> vector<4x8x8xf32>
    "tpu.trace_stop"() : () -> ()
    %cst_23 = arith.constant 1.250000e-01 : f32
    %67 = vector.broadcast %cst_23 : f32 to vector<4x8x8xf32>
    %68 = arith.mulf %66, %67 : vector<4x8x8xf32>
    %cst_24 = arith.constant -1.000000e+30 : f32
    %69 = vector.shape_cast %14 : vector<4x1x8xi1> to vector<4x1x8xi1>
    %70 = vector.broadcast %69 : vector<4x1x8xi1> to vector<4x8x8xi1>
    %71 = vector.broadcast %cst_24 : f32 to vector<4x8x8xf32>
    %72 = arith.select %70, %71, %68 : vector<4x8x8xi1>, vector<4x8x8xf32>
    %cst_25 = arith.constant dense<0xFF800000> : vector<4x8xf32>
    %73 = vector.multi_reduction <maximumf>, %72, %cst_25 [2] : vector<4x8x8xf32> to vector<4x8xf32>
    %74 = vector.shape_cast %73 : vector<4x8xf32> to vector<4x8x1xf32>
    %75 = vector.broadcast %74 : vector<4x8x1xf32> to vector<4x8x8xf32>
    %76 = arith.subf %72, %75 : vector<4x8x8xf32>
    %77 = math.exp %76 : vector<4x8x8xf32>
    %cst_26 = arith.constant dense<0.000000e+00> : vector<4x8xf32>
    %78 = vector.multi_reduction <add>, %77, %cst_26 [2] : vector<4x8x8xf32> to vector<4x8xf32>
    %79 = vector.shape_cast %78 : vector<4x8xf32> to vector<4x8x1xf32>
    %80 = tpu.reciprocal %79 {approx = true} : vector<4x8x1xf32> -> vector<4x8x1xf32>
    %81 = vector.broadcast %80 : vector<4x8x1xf32> to vector<4x8x8xf32>
    %82 = arith.mulf %77, %81 : vector<4x8x8xf32>
    %83 = arith.truncf %82 : vector<4x8x8xf32> to vector<4x8x8xbf16>
    "tpu.trace_start"() <{level = 10 : i32, message = "bqk,bkd->bqd"}> : () -> ()
    %cst_27 = arith.constant dense<0.000000e+00> : vector<4x8x64xf32>
    %84 = tpu.matmul %83, %65, %cst_27 {dimension_numbers = #tpu.dot_dimension_numbers<[2], [1], [1], [2], [0, 0, 0, 1, 1, 2], [0], [0]>} : vector<4x8x8xbf16>, vector<4x8x64xbf16>, vector<4x8x64xf32> -> vector<4x8x64xf32>
    "tpu.trace_stop"() : () -> ()
    %85 = vector.shape_cast %84 : vector<4x8x64xf32> to vector<32x64xf32>
    %c0_28 = arith.constant 0 : index
    %c128 = arith.constant 128 : index
    %86 = vector.load %arg12[%c0_28, %c128] : memref<32x256xf32, #tpu.memory_space<vmem>>, vector<32x64xf32>
    tpu.vector_store %arg12[%c0_28, %c128], %85 {strides = array<i32>} : memref<32x256xf32, #tpu.memory_space<vmem>>, vector<32x64xf32>,
    %87 = vector.extract_strided_slice %7 {offsets = [0, 0, 192], sizes = [4, 8, 64], strides = [1, 1, 1]} : vector<4x8x256xbf16> to vector<4x8x64xbf16>
    %88 = vector.extract_strided_slice %9 {offsets = [0, 0, 192], sizes = [4, 8, 64], strides = [1, 1, 1]} : vector<4x8x256xbf16> to vector<4x8x64xbf16>
    %89 = vector.extract_strided_slice %11 {offsets = [0, 0, 192], sizes = [4, 8, 64], strides = [1, 1, 1]} : vector<4x8x256xbf16> to vector<4x8x64xbf16>
    "tpu.trace_start"() <{level = 10 : i32, message = "bqd,bkd->bqk"}> : () -> ()
    %cst_29 = arith.constant dense<0.000000e+00> : vector<4x8x8xf32>
    %90 = tpu.matmul %87, %88, %cst_29 {dimension_numbers = #tpu.dot_dimension_numbers<[2], [2], [1], [1], [0, 0, 0, 1, 1, 1], [0], [0]>} : vector<4x8x64xbf16>, vector<4x8x64xbf16>, vector<4x8x8xf32> -> vector<4x8x8xf32>
    "tpu.trace_stop"() : () -> ()
    %cst_30 = arith.constant 1.250000e-01 : f32
    %91 = vector.broadcast %cst_30 : f32 to vector<4x8x8xf32>
    %92 = arith.mulf %90, %91 : vector<4x8x8xf32>
    %cst_31 = arith.constant -1.000000e+30 : f32
    %93 = vector.shape_cast %14 : vector<4x1x8xi1> to vector<4x1x8xi1>
    %94 = vector.broadcast %93 : vector<4x1x8xi1> to vector<4x8x8xi1>
    %95 = vector.broadcast %cst_31 : f32 to vector<4x8x8xf32>
    %96 = arith.select %94, %95, %92 : vector<4x8x8xi1>, vector<4x8x8xf32>
    %cst_32 = arith.constant dense<0xFF800000> : vector<4x8xf32>
    %97 = vector.multi_reduction <maximumf>, %96, %cst_32 [2] : vector<4x8x8xf32> to vector<4x8xf32>
    %98 = vector.shape_cast %97 : vector<4x8xf32> to vector<4x8x1xf32>
    %99 = vector.broadcast %98 : vector<4x8x1xf32> to vector<4x8x8xf32>
    %100 = arith.subf %96, %99 : vector<4x8x8xf32>
    %101 = math.exp %100 : vector<4x8x8xf32>
    %cst_33 = arith.constant dense<0.000000e+00> : vector<4x8xf32>
    %102 = vector.multi_reduction <add>, %101, %cst_33 [2] : vector<4x8x8xf32> to vector<4x8xf32>
    %103 = vector.shape_cast %102 : vector<4x8xf32> to vector<4x8x1xf32>
    %104 = tpu.reciprocal %103 {approx = true} : vector<4x8x1xf32> -> vector<4x8x1xf32>
    %105 = vector.broadcast %104 : vector<4x8x1xf32> to vector<4x8x8xf32>
    %106 = arith.mulf %101, %105 : vector<4x8x8xf32>
    %107 = arith.truncf %106 : vector<4x8x8xf32> to vector<4x8x8xbf16>
    "tpu.trace_start"() <{level = 10 : i32, message = "bqk,bkd->bqd"}> : () -> ()
    %cst_34 = arith.constant dense<0.000000e+00> : vector<4x8x64xf32>
    %108 = tpu.matmul %107, %89, %cst_34 {dimension_numbers = #tpu.dot_dimension_numbers<[2], [1], [1], [2], [0, 0, 0, 1, 1, 2], [0], [0]>} : vector<4x8x8xbf16>, vector<4x8x64xbf16>, vector<4x8x64xf32> -> vector<4x8x64xf32>
    "tpu.trace_stop"() : () -> ()
    %109 = vector.shape_cast %108 : vector<4x8x64xf32> to vector<32x64xf32>
    %c0_35 = arith.constant 0 : index
    %c192 = arith.constant 192 : index
    %110 = vector.load %arg12[%c0_35, %c192] : memref<32x256xf32, #tpu.memory_space<vmem>>, vector<32x64xf32>
    tpu.vector_store %arg12[%c0_35, %c192], %109 {strides = array<i32>} : memref<32x256xf32, #tpu.memory_space<vmem>>, vector<32x64xf32>,
    %c0_36 = arith.constant 0 : index
    %c0_37 = arith.constant 0 : index
    %111 = vector.load %arg12[%c0_36, %c0_37] : memref<32x256xf32, #tpu.memory_space<vmem>>, vector<32x256xf32>
    %112 = arith.truncf %111 : vector<32x256xf32> to vector<32x256xbf16>
    %c0_38 = arith.constant 0 : index
    %c0_39 = arith.constant 0 : index
    %113 = vector.load %arg4[%c0_38, %c0_39] : memref<256x256xbf16, #tpu.memory_space<vmem>>, vector<256x256xbf16>
    %cst_40 = arith.constant dense<0.000000e+00> : vector<32x256xf32>
    %114 = tpu.matmul %112, %113, %cst_40 {dimension_numbers = #tpu.dot_dimension_numbers<[1], [0], [0], [1], [0, 0, 1, 1], [], []>} : vector<32x256xbf16>, vector<256x256xbf16>, vector<32x256xf32> -> vector<32x256xf32>
    %c0_41 = arith.constant 0 : index
    %c0_42 = arith.constant 0 : index
    %115 = vector.load %arg5[%c0_41, %c0_42] : memref<1x256xf32, #tpu.memory_space<vmem>>, vector<1x256xf32>
    %c0_43 = arith.constant 0 : index
    %c0_44 = arith.constant 0 : index
    %116 = vector.load %arg6[%c0_43, %c0_44] : memref<1x256xf32, #tpu.memory_space<vmem>>, vector<1x256xf32>
    %cst_45 = arith.constant dense<0.000000e+00> : vector<32xf32>
    %117 = vector.multi_reduction <add>, %114, %cst_45 [1] : vector<32x256xf32> to vector<32xf32>
    %118 = vector.shape_cast %117 : vector<32xf32> to vector<32x1xf32>
    %cst_46 = arith.constant 2.560000e+02 : f32
    %119 = vector.broadcast %cst_46 : f32 to vector<32x1xf32>
    %120 = arith.divf %118, %119 : vector<32x1xf32>
    %121 = vector.broadcast %120 : vector<32x1xf32> to vector<32x256xf32>
    %122 = arith.subf %114, %121 : vector<32x256xf32>
    %123 = arith.mulf %122, %122 : vector<32x256xf32>
    %cst_47 = arith.constant dense<0.000000e+00> : vector<32xf32>
    %124 = vector.multi_reduction <add>, %123, %cst_47 [1] : vector<32x256xf32> to vector<32xf32>
    %125 = vector.shape_cast %124 : vector<32xf32> to vector<32x1xf32>
    %cst_48 = arith.constant 2.560000e+02 : f32
    %126 = vector.broadcast %cst_48 : f32 to vector<32x1xf32>
    %127 = arith.divf %125, %126 : vector<32x1xf32>
    %cst_49 = arith.constant 9.99999974E-6 : f32
    %128 = vector.broadcast %cst_49 : f32 to vector<32x1xf32>
    %129 = arith.addf %127, %128 : vector<32x1xf32>
    %130 = math.rsqrt %129 : vector<32x1xf32>
    %131 = vector.broadcast %130 : vector<32x1xf32> to vector<32x256xf32>
    %132 = arith.mulf %122, %131 : vector<32x256xf32>
    %133 = vector.broadcast %115 : vector<1x256xf32> to vector<32x256xf32>
    %134 = arith.mulf %132, %133 : vector<32x256xf32>
    %135 = vector.broadcast %116 : vector<1x256xf32> to vector<32x256xf32>
    %136 = arith.addf %134, %135 : vector<32x256xf32>
    %137 = arith.addf %1, %136 : vector<32x256xf32>
    %138 = arith.truncf %137 : vector<32x256xf32> to vector<32x256xbf16>
    %c0_50 = arith.constant 0 : index
    %c0_51 = arith.constant 0 : index
    %139 = vector.load %arg7[%c0_50, %c0_51] : memref<256x1024xbf16, #tpu.memory_space<vmem>>, vector<256x1024xbf16>
    %cst_52 = arith.constant dense<0.000000e+00> : vector<32x1024xf32>
    %140 = tpu.matmul %138, %139, %cst_52 {dimension_numbers = #tpu.dot_dimension_numbers<[1], [0], [0], [1], [0, 0, 1, 1], [], []>} : vector<32x256xbf16>, vector<256x1024xbf16>, vector<32x1024xf32> -> vector<32x1024xf32>
    %cst_53 = arith.constant 0.000000e+00 : f32
    %141 = vector.broadcast %cst_53 : f32 to vector<32x1024xf32>
    %142 = arith.maximumf %140, %141 : vector<32x1024xf32>
    %143 = arith.truncf %142 : vector<32x1024xf32> to vector<32x1024xbf16>
    %c0_54 = arith.constant 0 : index
    %c0_55 = arith.constant 0 : index
    %144 = vector.load %arg8[%c0_54, %c0_55] : memref<1024x256xbf16, #tpu.memory_space<vmem>>, vector<1024x256xbf16>
    %cst_56 = arith.constant dense<0.000000e+00> : vector<32x256xf32>
    %145 = tpu.matmul %143, %144, %cst_56 {dimension_numbers = #tpu.dot_dimension_numbers<[1], [0], [0], [1], [0, 0, 1, 1], [], []>} : vector<32x1024xbf16>, vector<1024x256xbf16>, vector<32x256xf32> -> vector<32x256xf32>
    %cst_57 = arith.constant 0.000000e+00 : f32
    %146 = vector.broadcast %cst_57 : f32 to vector<32x256xf32>
    %147 = arith.maximumf %145, %146 : vector<32x256xf32>
    %c0_58 = arith.constant 0 : index
    %c0_59 = arith.constant 0 : index
    %148 = vector.load %arg9[%c0_58, %c0_59] : memref<1x256xf32, #tpu.memory_space<vmem>>, vector<1x256xf32>
    %c0_60 = arith.constant 0 : index
    %c0_61 = arith.constant 0 : index
    %149 = vector.load %arg10[%c0_60, %c0_61] : memref<1x256xf32, #tpu.memory_space<vmem>>, vector<1x256xf32>
    %cst_62 = arith.constant dense<0.000000e+00> : vector<32xf32>
    %150 = vector.multi_reduction <add>, %147, %cst_62 [1] : vector<32x256xf32> to vector<32xf32>
    %151 = vector.shape_cast %150 : vector<32xf32> to vector<32x1xf32>
    %cst_63 = arith.constant 2.560000e+02 : f32
    %152 = vector.broadcast %cst_63 : f32 to vector<32x1xf32>
    %153 = arith.divf %151, %152 : vector<32x1xf32>
    %154 = vector.broadcast %153 : vector<32x1xf32> to vector<32x256xf32>
    %155 = arith.subf %147, %154 : vector<32x256xf32>
    %156 = arith.mulf %155, %155 : vector<32x256xf32>
    %cst_64 = arith.constant dense<0.000000e+00> : vector<32xf32>
    %157 = vector.multi_reduction <add>, %156, %cst_64 [1] : vector<32x256xf32> to vector<32xf32>
    %158 = vector.shape_cast %157 : vector<32xf32> to vector<32x1xf32>
    %cst_65 = arith.constant 2.560000e+02 : f32
    %159 = vector.broadcast %cst_65 : f32 to vector<32x1xf32>
    %160 = arith.divf %158, %159 : vector<32x1xf32>
    %cst_66 = arith.constant 9.99999974E-6 : f32
    %161 = vector.broadcast %cst_66 : f32 to vector<32x1xf32>
    %162 = arith.addf %160, %161 : vector<32x1xf32>
    %163 = math.rsqrt %162 : vector<32x1xf32>
    %164 = vector.broadcast %163 : vector<32x1xf32> to vector<32x256xf32>
    %165 = arith.mulf %155, %164 : vector<32x256xf32>
    %166 = vector.broadcast %148 : vector<1x256xf32> to vector<32x256xf32>
    %167 = arith.mulf %165, %166 : vector<32x256xf32>
    %168 = vector.broadcast %149 : vector<1x256xf32> to vector<32x256xf32>
    %169 = arith.addf %167, %168 : vector<32x256xf32>
    %170 = arith.addf %137, %169 : vector<32x256xf32>
    %171 = vector.shape_cast %170 : vector<32x256xf32> to vector<4x8x256xf32>
    %c0_67 = arith.constant 0 : index
    %c0_68 = arith.constant 0 : index
    %c0_69 = arith.constant 0 : index
    %172 = vector.load %arg11[%c0_67, %c0_68, %c0_69] : memref<4x8x256xf32, #tpu.memory_space<vmem>>, vector<4x8x256xf32>
    tpu.vector_store %arg11[%c0_67, %c0_68, %c0_69], %171 {strides = array<i32>} : memref<4x8x256xf32, #tpu.memory_space<vmem>>, vector<4x8x256xf32>,
    return
  }
  func.func @transform_0(%arg0: i32) -> (i32, i32, i32) {
    %c0_i32 = arith.constant 0 : i32
    %c0_i32_0 = arith.constant 0 : i32
    %c0_i32_1 = arith.constant 0 : i32
    return %arg0, %c0_i32, %c0_i32_0 : i32, i32, i32
  }
  func.func @transform_1(%arg0: i32) -> (i32, i32, i32) {
    %c0_i32 = arith.constant 0 : i32
    %c0_i32_0 = arith.constant 0 : i32
    %c0_i32_1 = arith.constant 0 : i32
    return %arg0, %c0_i32, %c0_i32_0 : i32, i32, i32
  }
  func.func @transform_2(%arg0: i32) -> (i32, i32) {
    %c0_i32 = arith.constant 0 : i32
    %c0_i32_0 = arith.constant 0 : i32
    %c0_i32_1 = arith.constant 0 : i32
    return %c0_i32, %c0_i32_0 : i32, i32
  }
  func.func @transform_3(%arg0: i32) -> (i32, i32) {
    %c0_i32 = arith.constant 0 : i32
    %c0_i32_0 = arith.constant 0 : i32
    %c0_i32_1 = arith.constant 0 : i32
    return %c0_i32, %c0_i32_0 : i32, i32
  }
  func.func @transform_4(%arg0: i32) -> (i32, i32) {
    %c0_i32 = arith.constant 0 : i32
    %c0_i32_0 = arith.constant 0 : i32
    %c0_i32_1 = arith.constant 0 : i32
    return %c0_i32, %c0_i32_0 : i32, i32
  }
  func.func @transform_5(%arg0: i32) -> (i32, i32) {
    %c0_i32 = arith.constant 0 : i32
    %c0_i32_0 = arith.constant 0 : i32
    %c0_i32_1 = arith.constant 0 : i32
    return %c0_i32, %c0_i32_0 : i32, i32
  }
  func.func @transform_6(%arg0: i32) -> (i32, i32) {
    %c0_i32 = arith.constant 0 : i32
    %c0_i32_0 = arith.constant 0 : i32
    %c0_i32_1 = arith.constant 0 : i32
    return %c0_i32, %c0_i32_0 : i32, i32
  }
  func.func @transform_7(%arg0: i32) -> (i32, i32) {
    %c0_i32 = arith.constant 0 : i32
    %c0_i32_0 = arith.constant 0 : i32
    %c0_i32_1 = arith.constant 0 : i32
    return %c0_i32, %c0_i32_0 : i32, i32
  }
  func.func @transform_8(%arg0: i32) -> (i32, i32) {
    %c0_i32 = arith.constant 0 : i32
    %c0_i32_0 = arith.constant 0 : i32
    %c0_i32_1 = arith.constant 0 : i32
    return %c0_i32, %c0_i32_0 : i32, i32
  }
  func.func @transform_9(%arg0: i32) -> (i32, i32) {
    %c0_i32 = arith.constant 0 : i32
    %c0_i32_0 = arith.constant 0 : i32
    %c0_i32_1 = arith.constant 0 : i32
    return %c0_i32, %c0_i32_0 : i32, i32
  }
  func.func @transform_10(%arg0: i32) -> (i32, i32, i32) {
    %c0_i32 = arith.constant 0 : i32
    %c0_i32_0 = arith.constant 0 : i32
    %c0_i32_1 = arith.constant 0 : i32
    return %arg0, %c0_i32, %c0_i32_0 : i32, i32, i32
  }
}

</mosaic_0001>

<llo_original>
// kernel: tpu_custom_call.1
$region0: #{tpu_custom_call.1}
  #allocation0 [shape = 'u32[]', space=smem, size = 0x4, offset = 0x4, fixed_abs, tag = 'smem constant byte address 0x4 - core index']
  #allocation1 [shape = 'u32[144,128]{1,0:T(1,128)}', space=vmem, size = 0x12000, scoped, tag = 'internal scratch']
  #allocation2 [shape = 'f32[32,256]{1,0:T(8,128)}', space=vmem, size = 0x8000, scoped, tag = 'scratch operand']
  %s0 = inlined_call_operand.hbm [shape: f32[4,8,256], index: 0, kind: input, shape index: {}]
  %s1 = inlined_call_operand.hbm [shape: s32[4,1,8], index: 1, kind: input, shape index: {}]
  %s2 = inlined_call_operand.hbm [shape: bf16[256,768], index: 2, kind: input, shape index: {}]
  %s3 = inlined_call_operand.hbm [shape: bf16[256,256], index: 3, kind: input, shape index: {}]
  %s4 = inlined_call_operand.vmem [shape: f32[1,256], index: 4, kind: input, shape index: {}]
  %s5 = inlined_call_operand.vmem [shape: f32[1,256], index: 5, kind: input, shape index: {}]
  %s6 = inlined_call_operand.hbm [shape: bf16[256,1024], index: 6, kind: input, shape index: {}]
  %s7 = inlined_call_operand.hbm [shape: bf16[1024,256], index: 7, kind: input, shape index: {}]
  %s8 = inlined_call_operand.vmem [shape: f32[1,256], index: 8, kind: input, shape index: {}]
  %s9 = inlined_call_operand.vmem [shape: f32[1,256], index: 9, kind: input, shape index: {}]
  %s10 = inlined_call_operand.hbm [shape: f32[4,8,256], index: 10, kind: output, shape index: {}]
  %s11 = sld [smem:[#allocation0]]
  $region74: #{tpu_custom_call.1} parent=0
    _
  %s13 = ssub.s32 1, %s11
  %s14 = scalar_select 0, %s13, %s11
  $region1: #{tpu_custom_call.1} parent=0
    #allocation3 [shape = 'u8[32768]{0}', space=vmem, size = 0x8000, scoped, tag = 'input window, operand 0, single buffered']
    #allocation4 [shape = 's32[1]{0}', space=sflag, size = 0x4, scoped, tag = 'scoped memory for tpu_custom_call.1']
    #allocation5 [shape = 's32[1]{0}', space=sflag, size = 0x4, scoped, tag = 'scoped memory for tpu_custom_call.1']
    #allocation6 [shape = 'u8[2048]{0}', space=vmem, size = 0x800, scoped, tag = 'input window, operand 1, single buffered']
    #allocation7 [shape = 's32[1]{0}', space=sflag, size = 0x4, scoped, tag = 'scoped memory for tpu_custom_call.1']
    #allocation8 [shape = 'u8[393216]{0}', space=vmem, size = 0x60000, scoped, tag = 'input window, operand 2, single buffered']
    #allocation9 [shape = 'u8[131072]{0}', space=vmem, size = 0x20000, scoped, tag = 'input window, operand 3, single buffered']
    #allocation10 [shape = 's32[1]{0}', space=sflag, size = 0x4, scoped, tag = 'scoped memory for tpu_custom_call.1']
    #allocation11 [shape = 'u8[524288]{0}', space=vmem, size = 0x80000, scoped, tag = 'input window, operand 6, single buffered']
    #allocation12 [shape = 'u8[524288]{0}', space=vmem, size = 0x80000, scoped, tag = 'input window, operand 7, single buffered']
    #allocation13 [shape = 's32[1]{0}', space=sflag, size = 0x4, scoped, tag = 'scoped memory for tpu_custom_call.1']
    #allocation14 [shape = 'u8[32768]{0}', space=vmem, size = 0x8000, scoped, tag = 'output window, operand 0, single buffered']
    %15 = vsyncpa [#allocation4], 0
    %16 = vsyncpa [#allocation7], 0
    %17 = vsyncpa [#allocation10], 0
    %18 = vsyncpa [#allocation13], 0
    %19 = vsyncpa [#allocation5], 0
    // Predicated region
    $region2: #{tpu_custom_call.1} parent=1 // pred_check
      _
    $region3: #{tpu_custom_call.1} parent=1 // pred_check_branch
      %21 = sbr.rel (0) target = $region5
    $region4: #{tpu_custom_call.1} parent=1 // pred_region
      %s23 = ssub.s32 1024, 1024
      %24 = vsyncadd [#allocation4], %s23
      %s25 = sshll.u32 [#allocation3], 4
      %s26 = int_to_ptr.vmem [resolvable:$true] %s25
      %31 = dma.hbm_to_vmem [thread:$0]  %s0, 1024, %s26, [#allocation4], 256, 256, 16
    $region5: #{tpu_custom_call.1} parent=1 // pred_fallthru
      _
    // Predicated region
    $region6: #{tpu_custom_call.1} parent=1 // pred_check
      _
    $region7: #{tpu_custom_call.1} parent=1 // pred_check_branch
      %33 = sbr.rel (0) target = $region9
    $region8: #{tpu_custom_call.1} parent=1 // pred_region
      %s35 = ssub.s32 64, 64
      %36 = vsyncadd [#allocation7], %s35
      %s37 = sshll.u32 [#allocation6], 4
      %s38 = int_to_ptr.vmem [resolvable:$true] %s37
      %43 = dma.hbm_to_vmem [thread:$0]  %s1, 64, %s38, [#allocation7], 16, 16, 1
    $region9: #{tpu_custom_call.1} parent=1 // pred_fallthru
      _
    // Predicated region
    $region10: #{tpu_custom_call.1} parent=1 // pred_check
      _
    $region11: #{tpu_custom_call.1} parent=1 // pred_check_branch
      %45 = sbr.rel (0) target = $region13
    $region12: #{tpu_custom_call.1} parent=1 // pred_region
      %s47 = ssub.s32 12288, 12288
      %48 = vsyncadd [#allocation7], %s47
      %s49 = sshll.u32 [#allocation8], 4
      %s50 = int_to_ptr.vmem [resolvable:$true] %s49
      %55 = dma.hbm_to_vmem [thread:$0]  %s2, 12288, %s50, [#allocation7], 384, 384, 24
    $region13: #{tpu_custom_call.1} parent=1 // pred_fallthru
      _
    // Predicated region
    $region14: #{tpu_custom_call.1} parent=1 // pred_check
      _
    $region15: #{tpu_custom_call.1} parent=1 // pred_check_branch
      %57 = sbr.rel (0) target = $region17
    $region16: #{tpu_custom_call.1} parent=1 // pred_region
      %s59 = ssub.s32 4096, 4096
      %60 = vsyncadd [#allocation10], %s59
      %s61 = sshll.u32 [#allocation9], 4
      %s62 = int_to_ptr.vmem [resolvable:$true] %s61
      %67 = dma.hbm_to_vmem [thread:$0]  %s3, 4096, %s62, [#allocation10], 128, 128, 8
    $region17: #{tpu_custom_call.1} parent=1 // pred_fallthru
      _
    // Predicated region
    $region18: #{tpu_custom_call.1} parent=1 // pred_check
      _
    $region19: #{tpu_custom_call.1} parent=1 // pred_check_branch
      %69 = sbr.rel (0) target = $region21
    $region20: #{tpu_custom_call.1} parent=1 // pred_region
      _
    $region21: #{tpu_custom_call.1} parent=1 // pred_fallthru
      _
    // Predicated region
    $region22: #{tpu_custom_call.1} parent=1 // pred_check
      _
    $region23: #{tpu_custom_call.1} parent=1 // pred_check_branch
      %71 = sbr.rel (0) target = $region25
    $region24: #{tpu_custom_call.1} parent=1 // pred_region
      _
    $region25: #{tpu_custom_call.1} parent=1 // pred_fallthru
      _
    // Predicated region
    $region26: #{tpu_custom_call.1} parent=1 // pred_check
      _
    $region27: #{tpu_custom_call.1} parent=1 // pred_check_branch
      %73 = sbr.rel (0) target = $region29
    $region28: #{tpu_custom_call.1} parent=1 // pred_region
      %s75 = ssub.s32 16384, 16384
      %76 = vsyncadd [#allocation10], %s75
      %s77 = sshll.u32 [#allocation11], 4
      %s78 = int_to_ptr.vmem [resolvable:$true] %s77
      %83 = dma.hbm_to_vmem [thread:$0]  %s6, 16384, %s78, [#allocation10], 512, 512, 32
    $region29: #{tpu_custom_call.1} parent=1 // pred_fallthru
      _
    // Predicated region
    $region30: #{tpu_custom_call.1} parent=1 // pred_check
      _
    $region31: #{tpu_custom_call.1} parent=1 // pred_check_branch
      %85 = sbr.rel (0) target = $region33
    $region32: #{tpu_custom_call.1} parent=1 // pred_region
      %s87 = ssub.s32 16384, 16384
      %88 = vsyncadd [#allocation13], %s87
      %s89 = sshll.u32 [#allocation12], 4
      %s90 = int_to_ptr.vmem [resolvable:$true] %s89
      %95 = dma.hbm_to_vmem [thread:$0]  %s7, 16384, %s90, [#allocation13], 128, 128, 8
    $region33: #{tpu_custom_call.1} parent=1 // pred_fallthru
      _
    // Predicated region
    $region34: #{tpu_custom_call.1} parent=1 // pred_check
      _
    $region35: #{tpu_custom_call.1} parent=1 // pred_check_branch
      %97 = sbr.rel (0) target = $region37
    $region36: #{tpu_custom_call.1} parent=1 // pred_region
      _
    $region37: #{tpu_custom_call.1} parent=1 // pred_fallthru
      _
    // Predicated region
    $region38: #{tpu_custom_call.1} parent=1 // pred_check
      _
    $region39: #{tpu_custom_call.1} parent=1 // pred_check_branch
      %99 = sbr.rel (0) target = $region41
    $region40: #{tpu_custom_call.1} parent=1 // pred_region
      _
    $region41: #{tpu_custom_call.1} parent=1 // pred_fallthru
      _
    // Predicated region
    $region42: #{tpu_custom_call.1} parent=1 // pred_check
      _
    $region43: #{tpu_custom_call.1} parent=1 // pred_check_branch
      %101 = sbr.rel (0) target = $region45
    $region44: #{tpu_custom_call.1} parent=1 // pred_region
      %102 = dma.done [#allocation4], 1024
    $region45: #{tpu_custom_call.1} parent=1 // pred_fallthru
      _
    // Predicated region
    $region46: #{tpu_custom_call.1} parent=1 // pred_check
      _
    $region47: #{tpu_custom_call.1} parent=1 // pred_check_branch
      %104 = sbr.rel (0) target = $region49
    $region48: #{tpu_custom_call.1} parent=1 // pred_region
      %105 = dma.done [#allocation7], 64
    $region49: #{tpu_custom_call.1} parent=1 // pred_fallthru
      _
    // Predicated region
    $region50: #{tpu_custom_call.1} parent=1 // pred_check
      _
    $region51: #{tpu_custom_call.1} parent=1 // pred_check_branch
      %107 = sbr.rel (0) target = $region53
    $region52: #{tpu_custom_call.1} parent=1 // pred_region
      %108 = dma.done [#allocation7], 12288
    $region53: #{tpu_custom_call.1} parent=1 // pred_fallthru
      _
    // Predicated region
    $region54: #{tpu_custom_call.1} parent=1 // pred_check
      _
    $region55: #{tpu_custom_call.1} parent=1 // pred_check_branch
      %110 = sbr.rel (0) target = $region57
    $region56: #{tpu_custom_call.1} parent=1 // pred_region
      %111 = dma.done [#allocation10], 4096
    $region57: #{tpu_custom_call.1} parent=1 // pred_fallthru
      _
    // Predicated region
    $region58: #{tpu_custom_call.1} parent=1 // pred_check
      _
    $region59: #{tpu_custom_call.1} parent=1 // pred_check_branch
      %113 = sbr.rel (0) target = $region61
    $region60: #{tpu_custom_call.1} parent=1 // pred_region
      %114 = dma.done [#allocation10], 16384
    $region61: #{tpu_custom_call.1} parent=1 // pred_fallthru
      _
    // Predicated region
    $region62: #{tpu_custom_call.1} parent=1 // pred_check
      _
    $region63: #{tpu_custom_call.1} parent=1 // pred_check_branch
      %116 = sbr.rel (0) target = $region65
    $region64: #{tpu_custom_call.1} parent=1 // pred_region
      %117 = dma.done [#allocation13], 16384
    $region65: #{tpu_custom_call.1} parent=1 // pred_fallthru
      _
    %v119 = vld [vmem:[#allocation3] sm:$0xff]
    %v120 = vld [vmem:[#allocation3 + $0x8] sm:$0xff]
    %v121 = vld [vmem:[#allocation3 + $0x10] sm:$0xff]
    %v122 = vld [vmem:[#allocation3 + $0x18] sm:$0xff]
    %v123 = vld [vmem:[#allocation3 + $0x20] sm:$0xff]
    %v124 = vld [vmem:[#allocation3 + $0x28] sm:$0xff]
    %v125 = vld [vmem:[#allocation3 + $0x30] sm:$0xff]
    %v126 = vld [vmem:[#allocation3 + $0x38] sm:$0xff]
    %v127 = vpack.c.bf16 %v121, %v119
    %v128 = vpack.c.bf16 %v122, %v120
    %v129 = vpack.c.bf16 %v125, %v123
    %v130 = vpack.c.bf16 %v126, %v124
    %v131 = vld [vmem:[#allocation8] sm:$0xff]
    %v132 = vld [vmem:[#allocation8 + $0x8] sm:$0xff]
    %v133 = vld [vmem:[#allocation8 + $0x10] sm:$0xff]
    %v134 = vld [vmem:[#allocation8 + $0x18] sm:$0xff]
    %v135 = vld [vmem:[#allocation8 + $0x20] sm:$0xff]
    %v136 = vld [vmem:[#allocation8 + $0x28] sm:$0xff]
    %v137 = vld [vmem:[#allocation8 + $0x30] sm:$0xff]
    %v138 = vld [vmem:[#allocation8 + $0x38] sm:$0xff]
    %v139 = vld [vmem:[#allocation8 + $0x40] sm:$0xff]
    %v140 = vld [vmem:[#allocation8 + $0x48] sm:$0xff]
    %v141 = vld [vmem:[#allocation8 + $0x50] sm:$0xff]
    %v142 = vld [vmem:[#allocation8 + $0x58] sm:$0xff]
    %v143 = vld [vmem:[#allocation8 + $0x60] sm:$0xff]
    %v144 = vld [vmem:[#allocation8 + $0x68] sm:$0xff]
    %v145 = vld [vmem:[#allocation8 + $0x70] sm:$0xff]
    %v146 = vld [vmem:[#allocation8 + $0x78] sm:$0xff]
    %v147 = vld [vmem:[#allocation8 + $0x80] sm:$0xff]
    %v148 = vld [vmem:[#allocation8 + $0x88] sm:$0xff]
    %v149 = vld [vmem:[#allocation8 + $0x90] sm:$0xff]
    %v150 = vld [vmem:[#allocation8 + $0x98] sm:$0xff]
    %v151 = vld [vmem:[#allocation8 + $0xa0] sm:$0xff]
    %v152 = vld [vmem:[#allocation8 + $0xa8] sm:$0xff]
    %v153 = vld [vmem:[#allocation8 + $0xb0] sm:$0xff]
    %v154 = vld [vmem:[#allocation8 + $0xb8] sm:$0xff]
    %v155 = vld [vmem:[#allocation8 + $0xc0] sm:$0xff]
    %v156 = vld [vmem:[#allocation8 + $0xc8] sm:$0xff]
    %v157 = vld [vmem:[#allocation8 + $0xd0] sm:$0xff]
    %v158 = vld [vmem:[#allocation8 + $0xd8] sm:$0xff]
    %v159 = vld [vmem:[#allocation8 + $0xe0] sm:$0xff]
    %v160 = vld [vmem:[#allocation8 + $0xe8] sm:$0xff]
    %v161 = vld [vmem:[#allocation8 + $0xf0] sm:$0xff]
    %v162 = vld [vmem:[#allocation8 + $0xf8] sm:$0xff]
    %v163 = vld [vmem:[#allocation8 + $0x100] sm:$0xff]
    %v164 = vld [vmem:[#allocation8 + $0x108] sm:$0xff]
    %v165 = vld [vmem:[#allocation8 + $0x110] sm:$0xff]
    %v166 = vld [vmem:[#allocation8 + $0x118] sm:$0xff]
    %v167 = vld [vmem:[#allocation8 + $0x120] sm:$0xff]
    %v168 = vld [vmem:[#allocation8 + $0x128] sm:$0xff]
    %v169 = vld [vmem:[#allocation8 + $0x130] sm:$0xff]
    %v170 = vld [vmem:[#allocation8 + $0x138] sm:$0xff]
    %v171 = vld [vmem:[#allocation8 + $0x140] sm:$0xff]
    %v172 = vld [vmem:[#allocation8 + $0x148] sm:$0xff]
    %v173 = vld [vmem:[#allocation8 + $0x150] sm:$0xff]
    %v174 = vld [vmem:[#allocation8 + $0x158] sm:$0xff]
    %v175 = vld [vmem:[#allocation8 + $0x160] sm:$0xff]
    %v176 = vld [vmem:[#allocation8 + $0x168] sm:$0xff]
    %v177 = vld [vmem:[#allocation8 + $0x170] sm:$0xff]
    %v178 = vld [vmem:[#allocation8 + $0x178] sm:$0xff]
    %v179 = vld [vmem:[#allocation8 + $0x180] sm:$0xff]
    %v180 = vld [vmem:[#allocation8 + $0x188] sm:$0xff]
    %v181 = vld [vmem:[#allocation8 + $0x190] sm:$0xff]
    %v182 = vld [vmem:[#allocation8 + $0x198] sm:$0xff]
    %v183 = vld [vmem:[#allocation8 + $0x1a0] sm:$0xff]
    %v184 = vld [vmem:[#allocation8 + $0x1a8] sm:$0xff]
    %v185 = vld [vmem:[#allocation8 + $0x1b0] sm:$0xff]
    %v186 = vld [vmem:[#allocation8 + $0x1b8] sm:$0xff]
    %v187 = vld [vmem:[#allocation8 + $0x1c0] sm:$0xff]
    %v188 = vld [vmem:[#allocation8 + $0x1c8] sm:$0xff]
    %v189 = vld [vmem:[#allocation8 + $0x1d0] sm:$0xff]
    %v190 = vld [vmem:[#allocation8 + $0x1d8] sm:$0xff]
    %v191 = vld [vmem:[#allocation8 + $0x1e0] sm:$0xff]
    %v192 = vld [vmem:[#allocation8 + $0x1e8] sm:$0xff]
    %v193 = vld [vmem:[#allocation8 + $0x1f0] sm:$0xff]
    %v194 = vld [vmem:[#allocation8 + $0x1f8] sm:$0xff]
    %v195 = vld [vmem:[#allocation8 + $0x200] sm:$0xff]
    %v196 = vld [vmem:[#allocation8 + $0x208] sm:$0xff]
    %v197 = vld [vmem:[#allocation8 + $0x210] sm:$0xff]
    %v198 = vld [vmem:[#allocation8 + $0x218] sm:$0xff]
    %v199 = vld [vmem:[#allocation8 + $0x220] sm:$0xff]
    %v200 = vld [vmem:[#allocation8 + $0x228] sm:$0xff]
    %v201 = vld [vmem:[#allocation8 + $0x230] sm:$0xff]
    %v202 = vld [vmem:[#allocation8 + $0x238] sm:$0xff]
    %v203 = vld [vmem:[#allocation8 + $0x240] sm:$0xff]
    %v204 = vld [vmem:[#allocation8 + $0x248] sm:$0xff]
    %v205 = vld [vmem:[#allocation8 + $0x250] sm:$0xff]
    %v206 = vld [vmem:[#allocation8 + $0x258] sm:$0xff]
    %v207 = vld [vmem:[#allocation8 + $0x260] sm:$0xff]
    %v208 = vld [vmem:[#allocation8 + $0x268] sm:$0xff]
    %v209 = vld [vmem:[#allocation8 + $0x270] sm:$0xff]
    %v210 = vld [vmem:[#allocation8 + $0x278] sm:$0xff]
    %v211 = vld [vmem:[#allocation8 + $0x280] sm:$0xff]
    %v212 = vld [vmem:[#allocation8 + $0x288] sm:$0xff]
    %v213 = vld [vmem:[#allocation8 + $0x290] sm:$0xff]
    %v214 = vld [vmem:[#allocation8 + $0x298] sm:$0xff]
    %v215 = vld [vmem:[#allocation8 + $0x2a0] sm:$0xff]
    %v216 = vld [vmem:[#allocation8 + $0x2a8] sm:$0xff]
    %v217 = vld [vmem:[#allocation8 + $0x2b0] sm:$0xff]
    %v218 = vld [vmem:[#allocation8 + $0x2b8] sm:$0xff]
    %v219 = vld [vmem:[#allocation8 + $0x2c0] sm:$0xff]
    %v220 = vld [vmem:[#allocation8 + $0x2c8] sm:$0xff]
    %v221 = vld [vmem:[#allocation8 + $0x2d0] sm:$0xff]
    %v222 = vld [vmem:[#allocation8 + $0x2d8] sm:$0xff]
    %v223 = vld [vmem:[#allocation8 + $0x2e0] sm:$0xff]
    %v224 = vld [vmem:[#allocation8 + $0x2e8] sm:$0xff]
    %v225 = vld [vmem:[#allocation8 + $0x2f0] sm:$0xff]
    %v226 = vld [vmem:[#allocation8 + $0x2f8] sm:$0xff]
    %v323 = vunpack.c.l.b16 %v131
    %v324 = vunpack.c.h.b16 %v131
    %v325 = vunpack.c.l.b16 %v132
    %v326 = vunpack.c.h.b16 %v132
    %v327 = vunpack.c.l.b16 %v133
    %v328 = vunpack.c.h.b16 %v133
    %v329 = vunpack.c.l.b16 %v134
    %v330 = vunpack.c.h.b16 %v134
    %v331 = vunpack.c.l.b16 %v135
    %v332 = vunpack.c.h.b16 %v135
    %v333 = vunpack.c.l.b16 %v136
    %v334 = vunpack.c.h.b16 %v136
    %v335 = vunpack.c.l.b16 %v137
    %v336 = vunpack.c.h.b16 %v137
    %v337 = vunpack.c.l.b16 %v138
    %v338 = vunpack.c.h.b16 %v138
    %v339 = vunpack.c.l.b16 %v139
    %v340 = vunpack.c.h.b16 %v139
    %v341 = vunpack.c.l.b16 %v140
    %v342 = vunpack.c.h.b16 %v140
    %v343 = vunpack.c.l.b16 %v141
    %v344 = vunpack.c.h.b16 %v141
    %v345 = vunpack.c.l.b16 %v142
    %v346 = vunpack.c.h.b16 %v142
    %v347 = vunpack.c.l.b16 %v143
    %v348 = vunpack.c.h.b16 %v143
    %v349 = vunpack.c.l.b16 %v144
    %v350 = vunpack.c.h.b16 %v144
    %v351 = vunpack.c.l.b16 %v145
    %v352 = vunpack.c.h.b16 %v145
    %v353 = vunpack.c.l.b16 %v146
    %v354 = vunpack.c.h.b16 %v146
    %v355 = vunpack.c.l.b16 %v147
    %v356 = vunpack.c.h.b16 %v147
    %v357 = vunpack.c.l.b16 %v148
    %v358 = vunpack.c.h.b16 %v148
    %v359 = vunpack.c.l.b16 %v149
    %v360 = vunpack.c.h.b16 %v149
    %v361 = vunpack.c.l.b16 %v150
    %v362 = vunpack.c.h.b16 %v150
    %v363 = vunpack.c.l.b16 %v151
    %v364 = vunpack.c.h.b16 %v151
    %v365 = vunpack.c.l.b16 %v152
    %v366 = vunpack.c.h.b16 %v152
    %v367 = vunpack.c.l.b16 %v153
    %v368 = vunpack.c.h.b16 %v153
    %v369 = vunpack.c.l.b16 %v154
    %v370 = vunpack.c.h.b16 %v154
    %v371 = vunpack.c.l.b16 %v155
    %v372 = vunpack.c.h.b16 %v155
    %v373 = vunpack.c.l.b16 %v156
    %v374 = vunpack.c.h.b16 %v156
    %v375 = vunpack.c.l.b16 %v157
    %v376 = vunpack.c.h.b16 %v157
    %v377 = vunpack.c.l.b16 %v158
    %v378 = vunpack.c.h.b16 %v158
    %v379 = vunpack.c.l.b16 %v159
    %v380 = vunpack.c.h.b16 %v159
    %v381 = vunpack.c.l.b16 %v160
    %v382 = vunpack.c.h.b16 %v160
    %v383 = vunpack.c.l.b16 %v161
    %v384 = vunpack.c.h.b16 %v161
    %v385 = vunpack.c.l.b16 %v162
    %v386 = vunpack.c.h.b16 %v162
    %v387 = vunpack.c.l.b16 %v163
    %v388 = vunpack.c.h.b16 %v163
    %v389 = vunpack.c.l.b16 %v164
    %v390 = vunpack.c.h.b16 %v164
    %v391 = vunpack.c.l.b16 %v165
    %v392 = vunpack.c.h.b16 %v165
    %v393 = vunpack.c.l.b16 %v166
    %v394 = vunpack.c.h.b16 %v166
    %v395 = vunpack.c.l.b16 %v167
    %v396 = vunpack.c.h.b16 %v167
    %v397 = vunpack.c.l.b16 %v168
    %v398 = vunpack.c.h.b16 %v168
    %v399 = vunpack.c.l.b16 %v169
    %v400 = vunpack.c.h.b16 %v169
    %v401 = vunpack.c.l.b16 %v170
    %v402 = vunpack.c.h.b16 %v170
    %v403 = vunpack.c.l.b16 %v171
    %v404 = vunpack.c.h.b16 %v171
    %v405 = vunpack.c.l.b16 %v172
    %v406 = vunpack.c.h.b16 %v172
    %v407 = vunpack.c.l.b16 %v173
    %v408 = vunpack.c.h.b16 %v173
    %v409 = vunpack.c.l.b16 %v174
    %v410 = vunpack.c.h.b16 %v174
    %v411 = vunpack.c.l.b16 %v175
    %v412 = vunpack.c.h.b16 %v175
    %v413 = vunpack.c.l.b16 %v176
    %v414 = vunpack.c.h.b16 %v176
    %v415 = vunpack.c.l.b16 %v177
    %v416 = vunpack.c.h.b16 %v177
    %v417 = vunpack.c.l.b16 %v178
    %v418 = vunpack.c.h.b16 %v178
    %v419 = vunpack.c.l.b16 %v179
    %v420 = vunpack.c.h.b16 %v179
    %v421 = vunpack.c.l.b16 %v180
    %v422 = vunpack.c.h.b16 %v180
    %v423 = vunpack.c.l.b16 %v181
    %v424 = vunpack.c.h.b16 %v181
    %v425 = vunpack.c.l.b16 %v182
    %v426 = vunpack.c.h.b16 %v182
    %v427 = vunpack.c.l.b16 %v183
    %v428 = vunpack.c.h.b16 %v183
    %v429 = vunpack.c.l.b16 %v184
    %v430 = vunpack.c.h.b16 %v184
    %v431 = vunpack.c.l.b16 %v185
    %v432 = vunpack.c.h.b16 %v185
    %v433 = vunpack.c.l.b16 %v186
    %v434 = vunpack.c.h.b16 %v186
    %v435 = vunpack.c.l.b16 %v187
    %v436 = vunpack.c.h.b16 %v187
    %v437 = vunpack.c.l.b16 %v188
    %v438 = vunpack.c.h.b16 %v188
    %v439 = vunpack.c.l.b16 %v189
    %v440 = vunpack.c.h.b16 %v189
    %v441 = vunpack.c.l.b16 %v190
    %v442 = vunpack.c.h.b16 %v190
    %v443 = vunpack.c.l.b16 %v191
    %v444 = vunpack.c.h.b16 %v191
    %v445 = vunpack.c.l.b16 %v192
    %v446 = vunpack.c.h.b16 %v192
    %v447 = vunpack.c.l.b16 %v193
    %v448 = vunpack.c.h.b16 %v193
    %v449 = vunpack.c.l.b16 %v194
    %v450 = vunpack.c.h.b16 %v194
    %v451 = vunpack.c.l.b16 %v195
    %v452 = vunpack.c.h.b16 %v195
    %v453 = vunpack.c.l.b16 %v196
    %v454 = vunpack.c.h.b16 %v196
    %v455 = vunpack.c.l.b16 %v197
    %v456 = vunpack.c.h.b16 %v197
    %v457 = vunpack.c.l.b16 %v198
    %v458 = vunpack.c.h.b16 %v198
    %v459 = vunpack.c.l.b16 %v199
    %v460 = vunpack.c.h.b16 %v199
    %v461 = vunpack.c.l.b16 %v200
    %v462 = vunpack.c.h.b16 %v200
    %v463 = vunpack.c.l.b16 %v201
    %v464 = vunpack.c.h.b16 %v201
    %v465 = vunpack.c.l.b16 %v202
    %v466 = vunpack.c.h.b16 %v202
    %v467 = vunpack.c.l.b16 %v203
    %v468 = vunpack.c.h.b16 %v203
    %v469 = vunpack.c.l.b16 %v204
    %v470 = vunpack.c.h.b16 %v204
    %v471 = vunpack.c.l.b16 %v205
    %v472 = vunpack.c.h.b16 %v205
    %v473 = vunpack.c.l.b16 %v206
    %v474 = vunpack.c.h.b16 %v206
    %v475 = vunpack.c.l.b16 %v207
    %v476 = vunpack.c.h.b16 %v207
    %v477 = vunpack.c.l.b16 %v208
    %v478 = vunpack.c.h.b16 %v208
    %v479 = vunpack.c.l.b16 %v209
    %v480 = vunpack.c.h.b16 %v209
    %v481 = vunpack.c.l.b16 %v210
    %v482 = vunpack.c.h.b16 %v210
    %v483 = vunpack.c.l.b16 %v211
    %v484 = vunpack.c.h.b16 %v211
    %v485 = vunpack.c.l.b16 %v212
    %v486 = vunpack.c.h.b16 %v212
    %v487 = vunpack.c.l.b16 %v213
    %v488 = vunpack.c.h.b16 %v213
    %v489 = vunpack.c.l.b16 %v214
    %v490 = vunpack.c.h.b16 %v214
    %v491 = vunpack.c.l.b16 %v215
    %v492 = vunpack.c.h.b16 %v215
    %v493 = vunpack.c.l.b16 %v216
    %v494 = vunpack.c.h.b16 %v216
    %v495 = vunpack.c.l.b16 %v217
    %v496 = vunpack.c.h.b16 %v217
    %v497 = vunpack.c.l.b16 %v218
    %v498 = vunpack.c.h.b16 %v218
    %v499 = vunpack.c.l.b16 %v219
    %v500 = vunpack.c.h.b16 %v219
    %v501 = vunpack.c.l.b16 %v220
    %v502 = vunpack.c.h.b16 %v220
    %v503 = vunpack.c.l.b16 %v221
    %v504 = vunpack.c.h.b16 %v221
    %v505 = vunpack.c.l.b16 %v222
    %v506 = vunpack.c.h.b16 %v222
    %v507 = vunpack.c.l.b16 %v223
    %v508 = vunpack.c.h.b16 %v223
    %v509 = vunpack.c.l.b16 %v224
    %v510 = vunpack.c.h.b16 %v224
    %v511 = vunpack.c.l.b16 %v225
    %v512 = vunpack.c.h.b16 %v225
    %v513 = vunpack.c.l.b16 %v226
    %v514 = vunpack.c.h.b16 %v226
    %v515 = vpack.c.b16 %v329, %v323
    %v516 = vpack.c.b16 %v330, %v324
    %v517 = vpack.c.b16 %v331, %v325
    %v518 = vpack.c.b16 %v332, %v326
    %v519 = vpack.c.b16 %v333, %v327
    %v520 = vpack.c.b16 %v334, %v328
    %v521 = vpack.c.b16 %v341, %v335
    %v522 = vpack.c.b16 %v342, %v336
    %v523 = vpack.c.b16 %v343, %v337
    %v524 = vpack.c.b16 %v344, %v338
    %v525 = vpack.c.b16 %v345, %v339
    %v526 = vpack.c.b16 %v346, %v340
    %v527 = vpack.c.b16 %v353, %v347
    %v528 = vpack.c.b16 %v354, %v348
    %v529 = vpack.c.b16 %v355, %v349
    %v530 = vpack.c.b16 %v356, %v350
    %v531 = vpack.c.b16 %v357, %v351
    %v532 = vpack.c.b16 %v358, %v352
    %v533 = vpack.c.b16 %v365, %v359
    %v534 = vpack.c.b16 %v366, %v360
    %v535 = vpack.c.b16 %v367, %v361
    %v536 = vpack.c.b16 %v368, %v362
    %v537 = vpack.c.b16 %v369, %v363
    %v538 = vpack.c.b16 %v370, %v364
    %v539 = vpack.c.b16 %v377, %v371
    %v540 = vpack.c.b16 %v378, %v372
    %v541 = vpack.c.b16 %v379, %v373
    %v542 = vpack.c.b16 %v380, %v374
    %v543 = vpack.c.b16 %v381, %v375
    %v544 = vpack.c.b16 %v382, %v376
    %v545 = vpack.c.b16 %v389, %v383
    %v546 = vpack.c.b16 %v390, %v384
    %v547 = vpack.c.b16 %v391, %v385
    %v548 = vpack.c.b16 %v392, %v386
    %v549 = vpack.c.b16 %v393, %v387
    %v550 = vpack.c.b16 %v394, %v388
    %v551 = vpack.c.b16 %v401, %v395
    %v552 = vpack.c.b16 %v402, %v396
    %v553 = vpack.c.b16 %v403, %v397
    %v554 = vpack.c.b16 %v404, %v398
    %v555 = vpack.c.b16 %v405, %v399
    %v556 = vpack.c.b16 %v406, %v400
    %v557 = vpack.c.b16 %v413, %v407
    %v558 = vpack.c.b16 %v414, %v408
    %v559 = vpack.c.b16 %v415, %v409
    %v560 = vpack.c.b16 %v416, %v410
    %v561 = vpack.c.b16 %v417, %v411
    %v562 = vpack.c.b16 %v418, %v412
    %v563 = vpack.c.b16 %v425, %v419
    %v564 = vpack.c.b16 %v426, %v420
    %v565 = vpack.c.b16 %v427, %v421
    %v566 = vpack.c.b16 %v428, %v422
    %v567 = vpack.c.b16 %v429, %v423
    %v568 = vpack.c.b16 %v430, %v424
    %v569 = vpack.c.b16 %v437, %v431
    %v570 = vpack.c.b16 %v438, %v432
    %v571 = vpack.c.b16 %v439, %v433
    %v572 = vpack.c.b16 %v440, %v434
    %v573 = vpack.c.b16 %v441, %v435
    %v574 = vpack.c.b16 %v442, %v436
    %v575 = vpack.c.b16 %v449, %v443
    %v576 = vpack.c.b16 %v450, %v444
    %v577 = vpack.c.b16 %v451, %v445
    %v578 = vpack.c.b16 %v452, %v446
    %v579 = vpack.c.b16 %v453, %v447
    %v580 = vpack.c.b16 %v454, %v448
    %v581 = vpack.c.b16 %v461, %v455
    %v582 = vpack.c.b16 %v462, %v456
    %v583 = vpack.c.b16 %v463, %v457
    %v584 = vpack.c.b16 %v464, %v458
    %v585 = vpack.c.b16 %v465, %v459
    %v586 = vpack.c.b16 %v466, %v460
    %v587 = vpack.c.b16 %v473, %v467
    %v588 = vpack.c.b16 %v474, %v468
    %v589 = vpack.c.b16 %v475, %v469
    %v590 = vpack.c.b16 %v476, %v470
    %v591 = vpack.c.b16 %v477, %v471
    %v592 = vpack.c.b16 %v478, %v472
    %v593 = vpack.c.b16 %v485, %v479
    %v594 = vpack.c.b16 %v486, %v480
    %v595 = vpack.c.b16 %v487, %v481
    %v596 = vpack.c.b16 %v488, %v482
    %v597 = vpack.c.b16 %v489, %v483
    %v598 = vpack.c.b16 %v490, %v484
    %v599 = vpack.c.b16 %v497, %v491
    %v600 = vpack.c.b16 %v498, %v492
    %v601 = vpack.c.b16 %v499, %v493
    %v602 = vpack.c.b16 %v500, %v494
    %v603 = vpack.c.b16 %v501, %v495
    %v604 = vpack.c.b16 %v502, %v496
    %v605 = vpack.c.b16 %v509, %v503
    %v606 = vpack.c.b16 %v510, %v504
    %v607 = vpack.c.b16 %v511, %v505
    %v608 = vpack.c.b16 %v512, %v506
    %v609 = vpack.c.b16 %v513, %v507
    %v610 = vpack.c.b16 %v514, %v508
    %707 = vmatprep.subr.bf16.mxu0 %v516
    %708 = vmatpush1.bf16.msra.mxu0 %v515
    %709 = vmatprep.subr.bf16.mxu0 %v522
    %710 = vmatpush1.bf16.msra.mxu0 %v521
    %711 = vmatprep.subr.bf16.mxu0 %v528
    %712 = vmatpush1.bf16.msra.mxu0 %v527
    %713 = vmatprep.subr.bf16.mxu0 %v534
    %714 = vmatpush1.bf16.msra.mxu0 %v533
    %715 = vmatprep.subr.bf16.mxu0 %v540
    %716 = vmatpush1.bf16.msra.mxu0 %v539
    %717 = vmatprep.subr.bf16.mxu0 %v546
    %718 = vmatpush1.bf16.msra.mxu0 %v545
    %719 = vmatprep.subr.bf16.mxu0 %v552
    %720 = vmatpush1.bf16.msra.mxu0 %v551
    %721 = vmatprep.subr.bf16.mxu0 %v558
    %722 = vmatpush1.bf16.msra.mxu0 %v557
    %723 = vmatprep.subr.bf16.mxu0 %v564
    %724 = vmatpush1.bf16.msra.mxu0 %v563
    %725 = vmatprep.subr.bf16.mxu0 %v570
    %726 = vmatpush1.bf16.msra.mxu0 %v569
    %727 = vmatprep.subr.bf16.mxu0 %v576
    %728 = vmatpush1.bf16.msra.mxu0 %v575
    %729 = vmatprep.subr.bf16.mxu0 %v582
    %730 = vmatpush1.bf16.msra.mxu0 %v581
    %731 = vmatprep.subr.bf16.mxu0 %v588
    %732 = vmatpush1.bf16.msra.mxu0 %v587
    %733 = vmatprep.subr.bf16.mxu0 %v594
    %734 = vmatpush1.bf16.msra.mxu0 %v593
    %735 = vmatprep.subr.bf16.mxu0 %v600
    %736 = vmatpush1.bf16.msra.mxu0 %v599
    %737 = vmatprep.subr.bf16.mxu0 %v606
    %738 = vmatpush1.bf16.msra.mxu0 %v605
    %739 = vmatprep.mubr.bf16.mxu0 %v128
    %740 = vmatmul.mubr.bf16.gmra.mrb[0].mxu0 %v127
    %v741 = vpop.f32.mrb[0].mxu0
    %v742 = vadd.f32 0.0, %v741
    %v743 = vpop.f32.mrb[0].mxu0
    %v744 = vadd.f32 0.0, %v743
    %v745 = vpop.f32.mrb[0].mxu0
    %v746 = vadd.f32 0.0, %v745
    %v747 = vpop.f32.mrb[0].mxu0
    %v748 = vadd.f32 0.0, %v747
    %749 = vmatprep.mubr.bf16.mxu0 %v130
    %750 = vmatmul.mubr.bf16.gmra.mrb[0].mxu0 %v129
    %v751 = vpop.f32.mrb[0].mxu0
    %v752 = vadd.f32 0.0, %v751
    %v753 = vpop.f32.mrb[0].mxu0
    %v754 = vadd.f32 0.0, %v753
    %v755 = vpop.f32.mrb[0].mxu0
    %v756 = vadd.f32 0.0, %v755
    %v757 = vpop.f32.mrb[0].mxu0
    %v758 = vadd.f32 0.0, %v757
    %759 = vdwg.mxu0
    %760 = vmatprep.subr.bf16.mxu0 %v518
    %761 = vmatpush1.bf16.msra.mxu0 %v517
    %762 = vmatprep.subr.bf16.mxu0 %v524
    %763 = vmatpush1.bf16.msra.mxu0 %v523
    %764 = vmatprep.subr.bf16.mxu0 %v530
    %765 = vmatpush1.bf16.msra.mxu0 %v529
    %766 = vmatprep.subr.bf16.mxu0 %v536
    %767 = vmatpush1.bf16.msra.mxu0 %v535
    %768 = vmatprep.subr.bf16.mxu0 %v542
    %769 = vmatpush1.bf16.msra.mxu0 %v541
    %770 = vmatprep.subr.bf16.mxu0 %v548
    %771 = vmatpush1.bf16.msra.mxu0 %v547
    %772 = vmatprep.subr.bf16.mxu0 %v554
    %773 = vmatpush1.bf16.msra.mxu0 %v553
    %774 = vmatprep.subr.bf16.mxu0 %v560
    %775 = vmatpush1.bf16.msra.mxu0 %v559
    %776 = vmatprep.subr.bf16.mxu0 %v566
    %777 = vmatpush1.bf16.msra.mxu0 %v565
    %778 = vmatprep.subr.bf16.mxu0 %v572
    %779 = vmatpush1.bf16.msra.mxu0 %v571
    %780 = vmatprep.subr.bf16.mxu0 %v578
    %781 = vmatpush1.bf16.msra.mxu0 %v577
    %782 = vmatprep.subr.bf16.mxu0 %v584
    %783 = vmatpush1.bf16.msra.mxu0 %v583
    %784 = vmatprep.subr.bf16.mxu0 %v590
    %785 = vmatpush1.bf16.msra.mxu0 %v589
    %786 = vmatprep.subr.bf16.mxu0 %v596
    %787 = vmatpush1.bf16.msra.mxu0 %v595
    %788 = vmatprep.subr.bf16.mxu0 %v602
    %789 = vmatpush1.bf16.msra.mxu0 %v601
    %790 = vmatprep.subr.bf16.mxu0 %v608
    %791 = vmatpush1.bf16.msra.mxu0 %v607
    %792 = vmatprep.mubr.bf16.mxu0 %v128
    %793 = vmatmul.mubr.bf16.gmra.mrb[0].mxu0 %v127
    %v794 = vpop.f32.mrb[0].mxu0
    %v795 = vadd.f32 0.0, %v794
    %v796 = vpop.f32.mrb[0].mxu0
    %v797 = vadd.f32 0.0, %v796
    %v798 = vpop.f32.mrb[0].mxu0
    %v799 = vadd.f32 0.0, %v798
    %v800 = vpop.f32.mrb[0].mxu0
    %v801 = vadd.f32 0.0, %v800
    %802 = vmatprep.mubr.bf16.mxu0 %v130
    %803 = vmatmul.mubr.bf16.gmra.mrb[0].mxu0 %v129
    %v804 = vpop.f32.mrb[0].mxu0
    %v805 = vadd.f32 0.0, %v804
    %v806 = vpop.f32.mrb[0].mxu0
    %v807 = vadd.f32 0.0, %v806
    %v808 = vpop.f32.mrb[0].mxu0
    %v809 = vadd.f32 0.0, %v808
    %v810 = vpop.f32.mrb[0].mxu0
    %v811 = vadd.f32 0.0, %v810
    %812 = vdwg.mxu0
    %813 = vmatprep.subr.bf16.mxu0 %v520
    %814 = vmatpush1.bf16.msra.mxu0 %v519
    %815 = vmatprep.subr.bf16.mxu0 %v526
    %816 = vmatpush1.bf16.msra.mxu0 %v525
    %817 = vmatprep.subr.bf16.mxu0 %v532
    %818 = vmatpush1.bf16.msra.mxu0 %v531
    %819 = vmatprep.subr.bf16.mxu0 %v538
    %820 = vmatpush1.bf16.msra.mxu0 %v537
    %821 = vmatprep.subr.bf16.mxu0 %v544
    %822 = vmatpush1.bf16.msra.mxu0 %v543
    %823 = vmatprep.subr.bf16.mxu0 %v550
    %824 = vmatpush1.bf16.msra.mxu0 %v549
    %825 = vmatprep.subr.bf16.mxu0 %v556
    %826 = vmatpush1.bf16.msra.mxu0 %v555
    %827 = vmatprep.subr.bf16.mxu0 %v562
    %828 = vmatpush1.bf16.msra.mxu0 %v561
    %829 = vmatprep.subr.bf16.mxu0 %v568
    %830 = vmatpush1.bf16.msra.mxu0 %v567
    %831 = vmatprep.subr.bf16.mxu0 %v574
    %832 = vmatpush1.bf16.msra.mxu0 %v573
    %833 = vmatprep.subr.bf16.mxu0 %v580
    %834 = vmatpush1.bf16.msra.mxu0 %v579
    %835 = vmatprep.subr.bf16.mxu0 %v586
    %836 = vmatpush1.bf16.msra.mxu0 %v585
    %837 = vmatprep.subr.bf16.mxu0 %v592
    %838 = vmatpush1.bf16.msra.mxu0 %v591
    %839 = vmatprep.subr.bf16.mxu0 %v598
    %840 = vmatpush1.bf16.msra.mxu0 %v597
    %841 = vmatprep.subr.bf16.mxu0 %v604
    %842 = vmatpush1.bf16.msra.mxu0 %v603
    %843 = vmatprep.subr.bf16.mxu0 %v610
    %844 = vmatpush1.bf16.msra.mxu0 %v609
    %845 = vmatprep.mubr.bf16.mxu0 %v128
    %846 = vmatmul.mubr.bf16.gmra.mrb[0].mxu0 %v127
    %v847 = vpop.f32.mrb[0].mxu0
    %v848 = vadd.f32 0.0, %v847
    %v849 = vpop.f32.mrb[0].mxu0
    %v850 = vadd.f32 0.0, %v849
    %v851 = vpop.f32.mrb[0].mxu0
    %v852 = vadd.f32 0.0, %v851
    %v853 = vpop.f32.mrb[0].mxu0
    %v854 = vadd.f32 0.0, %v853
    %855 = vmatprep.mubr.bf16.mxu0 %v130
    %856 = vmatmul.mubr.bf16.gmra.mrb[0].mxu0 %v129
    %v857 = vpop.f32.mrb[0].mxu0
    %v858 = vadd.f32 0.0, %v857
    %v859 = vpop.f32.mrb[0].mxu0
    %v860 = vadd.f32 0.0, %v859
    %v861 = vpop.f32.mrb[0].mxu0
    %v862 = vadd.f32 0.0, %v861
    %v863 = vpop.f32.mrb[0].mxu0
    %v864 = vadd.f32 0.0, %v863
    %865 = vdwg.mxu0
    %v866 = vpack.c.bf16 %v746, %v742
    %v867 = vpack.c.bf16 %v748, %v744
    %v868 = vpack.c.bf16 %v799, %v795
    %v869 = vpack.c.bf16 %v801, %v797
    %v870 = vpack.c.bf16 %v852, %v848
    %v871 = vpack.c.bf16 %v854, %v850
    %v872 = vpack.c.bf16 %v756, %v752
    %v873 = vpack.c.bf16 %v758, %v754
    %v874 = vpack.c.bf16 %v809, %v805
    %v875 = vpack.c.bf16 %v811, %v807
    %v876 = vpack.c.bf16 %v862, %v858
    %v877 = vpack.c.bf16 %v864, %v860
    %v882 = vunpack.c.l.b16 %v866
    %v883 = vunpack.c.l.b16 %v867
    %v884 = vunpack.c.h.b16 %v866
    %v885 = vunpack.c.h.b16 %v867
    %v886 = vunpack.c.l.b16 %v872
    %v887 = vunpack.c.l.b16 %v873
    %v888 = vunpack.c.h.b16 %v872
    %v889 = vunpack.c.h.b16 %v873
    %v890 = vpack.c.b16 %v883, %v882
    %v891 = vpack.c.b16 %v885, %v884
    %v892 = vpack.c.b16 %v887, %v886
    %v893 = vpack.c.b16 %v889, %v888
    %v898 = vunpack.c.l.b16 %v868
    %v899 = vunpack.c.l.b16 %v869
    %v900 = vunpack.c.h.b16 %v868
    %v901 = vunpack.c.h.b16 %v869
    %v902 = vunpack.c.l.b16 %v874
    %v903 = vunpack.c.l.b16 %v875
    %v904 = vunpack.c.h.b16 %v874
    %v905 = vunpack.c.h.b16 %v875
    %v906 = vpack.c.b16 %v899, %v898
    %v907 = vpack.c.b16 %v901, %v900
    %v908 = vpack.c.b16 %v903, %v902
    %v909 = vpack.c.b16 %v905, %v904
    %v914 = vunpack.c.l.b16 %v870
    %v915 = vunpack.c.l.b16 %v871
    %v916 = vunpack.c.h.b16 %v870
    %v917 = vunpack.c.h.b16 %v871
    %v918 = vunpack.c.l.b16 %v876
    %v919 = vunpack.c.l.b16 %v877
    %v920 = vunpack.c.h.b16 %v876
    %v921 = vunpack.c.h.b16 %v877
    %v922 = vpack.c.b16 %v915, %v914
    %v923 = vpack.c.b16 %v917, %v916
    %v924 = vpack.c.b16 %v919, %v918
    %v925 = vpack.c.b16 %v921, %v920
    %v926 = vld [vmem:[#allocation6] sm:$0x1]
    %v927 = vld [vmem:[#allocation6 + $0x1] sm:$0x1]
    %v928 = vld [vmem:[#allocation6 + $0x2] sm:$0x1]
    %v929 = vld [vmem:[#allocation6 + $0x3] sm:$0x1]
    %vm930 = vcmp.eq.s32.totalorder %v926, 0
    %vm931 = vcmp.eq.s32.totalorder %v927, 0
    %vm932 = vcmp.eq.s32.totalorder %v928, 0
    %vm933 = vcmp.eq.s32.totalorder %v929, 0
    %vm934 = vcmask 523264
    %v936 = vsel %vm934, %v890, 0
    %v939 = vsel %vm934, %v906, 0
    %941 = vmatprep.subr.bf16.mxu0 0
    %942 = vmatpush1.bf16.xpose.msra.mxu0 %v939
    %943 = vmatprep.subr.bf16.mxu0 0
    %944 = vmatpush1.bf16.xpose.msra.mxu0 0
    %945 = vmatprep.subr.bf16.mxu0 0
    %946 = vmatpush1.bf16.xpose.msra.mxu0 0
    %947 = vmatprep.subr.bf16.mxu0 0
    %948 = vmatpush1.bf16.xpose.msra.mxu0 0
    %949 = vmatprep.subr.bf16.mxu0 0
    %950 = vmatpush1.bf16.xpose.msra.mxu0 0
    %951 = vmatprep.subr.bf16.mxu0 0
    %952 = vmatpush1.bf16.xpose.msra.mxu0 0
    %953 = vmatprep.subr.bf16.mxu0 0
    %954 = vmatpush1.bf16.xpose.msra.mxu0 0
    %955 = vmatprep.subr.bf16.mxu0 0
    %956 = vmatpush1.bf16.xpose.msra.mxu0 0
    %957 = vmatprep.subr.bf16.mxu0 0
    %958 = vmatpush1.bf16.xpose.msra.mxu0 0
    %959 = vmatprep.subr.bf16.mxu0 0
    %960 = vmatpush1.bf16.xpose.msra.mxu0 0
    %961 = vmatprep.subr.bf16.mxu0 0
    %962 = vmatpush1.bf16.xpose.msra.mxu0 0
    %963 = vmatprep.subr.bf16.mxu0 0
    %964 = vmatpush1.bf16.xpose.msra.mxu0 0
    %965 = vmatprep.subr.bf16.mxu0 0
    %966 = vmatpush1.bf16.xpose.msra.mxu0 0
    %967 = vmatprep.subr.bf16.mxu0 0
    %968 = vmatpush1.bf16.xpose.msra.mxu0 0
    %969 = vmatprep.subr.bf16.mxu0 0
    %970 = vmatpush1.bf16.xpose.msra.mxu0 0
    %971 = vmatprep.subr.bf16.mxu0 0
    %972 = vmatpush1.bf16.xpose.msra.mxu0 0
    %973 = vmatprep.mubr.bf16.mxu0 0
    %974 = vmatmul.mubr.bf16.gmra.mrb[0].mxu0 %v936
    %v975 = vpop.f32.mrb[0].mxu0
    %v976 = vadd.f32 0.0, %v975
    %v977 = vpop.f32.mrb[0].mxu0
    %v978 = vpop.f32.mrb[0].mxu0
    %v979 = vpop.f32.mrb[0].mxu0
    %980 = vdwg.mxu0
    %v982 = vsel %vm934, %v891, 0
    %v985 = vsel %vm934, %v907, 0
    %987 = vmatprep.subr.bf16.mxu0 0
    %988 = vmatpush1.bf16.xpose.msra.mxu0 %v985
    %989 = vmatprep.subr.bf16.mxu0 0
    %990 = vmatpush1.bf16.xpose.msra.mxu0 0
    %991 = vmatprep.subr.bf16.mxu0 0
    %992 = vmatpush1.bf16.xpose.msra.mxu0 0
    %993 = vmatprep.subr.bf16.mxu0 0
    %994 = vmatpush1.bf16.xpose.msra.mxu0 0
    %995 = vmatprep.subr.bf16.mxu0 0
    %996 = vmatpush1.bf16.xpose.msra.mxu0 0
    %997 = vmatprep.subr.bf16.mxu0 0
    %998 = vmatpush1.bf16.xpose.msra.mxu0 0
    %999 = vmatprep.subr.bf16.mxu0 0
    %1000 = vmatpush1.bf16.xpose.msra.mxu0 0
    %1001 = vmatprep.subr.bf16.mxu0 0
    %1002 = vmatpush1.bf16.xpose.msra.mxu0 0
    %1003 = vmatprep.subr.bf16.mxu0 0
    %1004 = vmatpush1.bf16.xpose.msra.mxu0 0
    %1005 = vmatprep.subr.bf16.mxu0 0
    %1006 = vmatpush1.bf16.xpose.msra.mxu0 0
    %1007 = vmatprep.subr.bf16.mxu0 0
    %1008 = vmatpush1.bf16.xpose.msra.mxu0 0
    %1009 = vmatprep.subr.bf16.mxu0 0
    %1010 = vmatpush1.bf16.xpose.msra.mxu0 0
    %1011 = vmatprep.subr.bf16.mxu0 0
    %1012 = vmatpush1.bf16.xpose.msra.mxu0 0
    %1013 = vmatprep.subr.bf16.mxu0 0
    %1014 = vmatpush1.bf16.xpose.msra.mxu0 0
    %1015 = vmatprep.subr.bf16.mxu0 0
    %1016 = vmatpush1.bf16.xpose.msra.mxu0 0
    %1017 = vmatprep.subr.bf16.mxu0 0
    %1018 = vmatpush1.bf16.xpose.msra.mxu0 0
    %1019 = vmatprep.mubr.bf16.mxu0 0
    %1020 = vmatmul.mubr.bf16.gmra.mrb[0].mxu0 %v982
    %v1021 = vpop.f32.mrb[0].mxu0
    %v1022 = vadd.f32 0.0, %v1021
    %v1023 = vpop.f32.mrb[0].mxu0
    %v1024 = vpop.f32.mrb[0].mxu0
    %v1025 = vpop.f32.mrb[0].mxu0
    %1026 = vdwg.mxu0
    %v1028 = vsel %vm934, %v892, 0
    %v1031 = vsel %vm934, %v908, 0
    %1033 = vmatprep.subr.bf16.mxu0 0
    %1034 = vmatpush1.bf16.xpose.msra.mxu0 %v1031
    %1035 = vmatprep.subr.bf16.mxu0 0
    %1036 = vmatpush1.bf16.xpose.msra.mxu0 0
    %1037 = vmatprep.subr.bf16.mxu0 0
    %1038 = vmatpush1.bf16.xpose.msra.mxu0 0
    %1039 = vmatprep.subr.bf16.mxu0 0
    %1040 = vmatpush1.bf16.xpose.msra.mxu0 0
    %1041 = vmatprep.subr.bf16.mxu0 0
    %1042 = vmatpush1.bf16.xpose.msra.mxu0 0
    %1043 = vmatprep.subr.bf16.mxu0 0
    %1044 = vmatpush1.bf16.xpose.msra.mxu0 0
    %1045 = vmatprep.subr.bf16.mxu0 0
    %1046 = vmatpush1.bf16.xpose.msra.mxu0 0
    %1047 = vmatprep.subr.bf16.mxu0 0
    %1048 = vmatpush1.bf16.xpose.msra.mxu0 0
    %1049 = vmatprep.subr.bf16.mxu0 0
    %1050 = vmatpush1.bf16.xpose.msra.mxu0 0
    %1051 = vmatprep.subr.bf16.mxu0 0
    %1052 = vmatpush1.bf16.xpose.msra.mxu0 0
    %1053 = vmatprep.subr.bf16.mxu0 0
    %1054 = vmatpush1.bf16.xpose.msra.mxu0 0
    %1055 = vmatprep.subr.bf16.mxu0 0
    %1056 = vmatpush1.bf16.xpose.msra.mxu0 0
    %1057 = vmatprep.subr.bf16.mxu0 0
    %1058 = vmatpush1.bf16.xpose.msra.mxu0 0
    %1059 = vmatprep.subr.bf16.mxu0 0
    %1060 = vmatpush1.bf16.xpose.msra.mxu0 0
    %1061 = vmatprep.subr.bf16.mxu0 0
    %1062 = vmatpush1.bf16.xpose.msra.mxu0 0
    %1063 = vmatprep.subr.bf16.mxu0 0
    %1064 = vmatpush1.bf16.xpose.msra.mxu0 0
    %1065 = vmatprep.mubr.bf16.mxu0 0
    %1066 = vmatmul.mubr.bf16.gmra.mrb[0].mxu0 %v1028
    %v1067 = vpop.f32.mrb[0].mxu0
    %v1068 = vadd.f32 0.0, %v1067
    %v1069 = vpop.f32.mrb[0].mxu0
    %v1070 = vpop.f32.mrb[0].mxu0
    %v1071 = vpop.f32.mrb[0].mxu0
    %1072 = vdwg.mxu0
    %v1074 = vsel %vm934, %v893, 0
    %v1077 = vsel %vm934, %v909, 0
    %1079 = vmatprep.subr.bf16.mxu0 0
    %1080 = vmatpush1.bf16.xpose.msra.mxu0 %v1077
    %1081 = vmatprep.subr.bf16.mxu0 0
    %1082 = vmatpush1.bf16.xpose.msra.mxu0 0
    %1083 = vmatprep.subr.bf16.mxu0 0
    %1084 = vmatpush1.bf16.xpose.msra.mxu0 0
    %1085 = vmatprep.subr.bf16.mxu0 0
    %1086 = vmatpush1.bf16.xpose.msra.mxu0 0
    %1087 = vmatprep.subr.bf16.mxu0 0
    %1088 = vmatpush1.bf16.xpose.msra.mxu0 0
    %1089 = vmatprep.subr.bf16.mxu0 0
    %1090 = vmatpush1.bf16.xpose.msra.mxu0 0
    %1091 = vmatprep.subr.bf16.mxu0 0
    %1092 = vmatpush1.bf16.xpose.msra.mxu0 0
    %1093 = vmatprep.subr.bf16.mxu0 0
    %1094 = vmatpush1.bf16.xpose.msra.mxu0 0
    %1095 = vmatprep.subr.bf16.mxu0 0
    %1096 = vmatpush1.bf16.xpose.msra.mxu0 0
    %1097 = vmatprep.subr.bf16.mxu0 0
    %1098 = vmatpush1.bf16.xpose.msra.mxu0 0
    %1099 = vmatprep.subr.bf16.mxu0 0
    %1100 = vmatpush1.bf16.xpose.msra.mxu0 0
    %1101 = vmatprep.subr.bf16.mxu0 0
    %1102 = vmatpush1.bf16.xpose.msra.mxu0 0
    %1103 = vmatprep.subr.bf16.mxu0 0
    %1104 = vmatpush1.bf16.xpose.msra.mxu0 0
    %1105 = vmatprep.subr.bf16.mxu0 0
    %1106 = vmatpush1.bf16.xpose.msra.mxu0 0
    %1107 = vmatprep.subr.bf16.mxu0 0
    %1108 = vmatpush1.bf16.xpose.msra.mxu0 0
    %1109 = vmatprep.subr.bf16.mxu0 0
    %1110 = vmatpush1.bf16.xpose.msra.mxu0 0
    %1111 = vmatprep.mubr.bf16.mxu0 0
    %1112 = vmatmul.mubr.bf16.gmra.mrb[0].mxu0 %v1074
    %v1113 = vpop.f32.mrb[0].mxu0
    %v1114 = vadd.f32 0.0, %v1113
    %v1115 = vpop.f32.mrb[0].mxu0
    %v1116 = vpop.f32.mrb[0].mxu0
    %v1117 = vpop.f32.mrb[0].mxu0
    %1118 = vdwg.mxu0
    %v1119 = vmul.f32 %v976, 0.125
    %v1120 = vmul.f32 %v1022, 0.125
    %v1121 = vmul.f32 %v1068, 0.125
    %v1122 = vmul.f32 %v1114, 0.125
    %v1123 = vsel %vm930, 1, 0
    %v1124 = vsel %vm931, 1, 0
    %v1125 = vsel %vm932, 1, 0
    %v1126 = vsel %vm933, 1, 0
    %v1127 = vlaneseq
    %v1128 = vshrl.u32 %v1127, 7
    %v1129 = vsub.s32 0, %v1128
    %v1130 = vrot.slane %v1123, %v1129
    %v1131 = vlaneseq
    %v1132 = vshrl.u32 %v1131, 7
    %v1133 = vsub.s32 0, %v1132
    %v1134 = vrot.slane %v1124, %v1133
    %v1135 = vlaneseq
    %v1136 = vshrl.u32 %v1135, 7
    %v1137 = vsub.s32 0, %v1136
    %v1138 = vrot.slane %v1125, %v1137
    %v1139 = vlaneseq
    %v1140 = vshrl.u32 %v1139, 7
    %v1141 = vsub.s32 0, %v1140
    %v1142 = vrot.slane %v1126, %v1141
    %vm1143 = vcmp.eq.s32.totalorder %v1130, 1
    %vm1144 = vcmp.eq.s32.totalorder %v1134, 1
    %vm1145 = vcmp.eq.s32.totalorder %v1138, 1
    %vm1146 = vcmp.eq.s32.totalorder %v1142, 1
    %v1147 = vsel %vm1143, -1e+30, %v1119
    %v1148 = vsel %vm1144, -1e+30, %v1120
    %v1149 = vsel %vm1145, -1e+30, %v1121
    %v1150 = vsel %vm1146, -1e+30, %v1122
    %vm1151 = vcmask 64512
    %v1152 = vsel %vm1151, %v1147, -inf
    %1153 = vmax.xlane.f32.xlu0 %v1152
    %v1154 = vpop.xlane.xlu0 %1153
    %v1155 = vsel %vm1151, %v1148, -inf
    %1156 = vmax.xlane.f32.xlu0 %v1155
    %v1157 = vpop.xlane.xlu0 %1156
    %v1158 = vsel %vm1151, %v1149, -inf
    %1159 = vmax.xlane.f32.xlu0 %v1158
    %v1160 = vpop.xlane.xlu0 %1159
    %v1161 = vsel %vm1151, %v1150, -inf
    %1162 = vmax.xlane.f32.xlu0 %v1161
    %v1163 = vpop.xlane.xlu0 %1162
    %v1164 = vsub.f32 %v1147, %v1154
    %v1165 = vsub.f32 %v1148, %v1157
    %v1166 = vsub.f32 %v1149, %v1160
    %v1167 = vsub.f32 %v1150, %v1163
    %v1168 = vmul.f32 %v1164, 1.442695
    %v1169 = vpow.pop %v1168
    %v1170 = vmul.f32 %v1165, 1.442695
    %v1171 = vpow.pop %v1170
    %v1172 = vmul.f32 %v1166, 1.442695
    %v1173 = vpow.pop %v1172
    %v1174 = vmul.f32 %v1167, 1.442695
    %v1175 = vpow.pop %v1174
    %v1176 = vsel %vm1151, %v1169, 0.0
    %1177 = vadd.xlane.f32.xlu0 %v1176
    %v1178 = vpop.xlane.xlu0 %1177
    %v1179 = vsel %vm1151, %v1171, 0.0
    %1180 = vadd.xlane.f32.xlu0 %v1179
    %v1181 = vpop.xlane.xlu0 %1180
    %v1182 = vsel %vm1151, %v1173, 0.0
    %1183 = vadd.xlane.f32.xlu0 %v1182
    %v1184 = vpop.xlane.xlu0 %1183
    %v1185 = vsel %vm1151, %v1175, 0.0
    %1186 = vadd.xlane.f32.xlu0 %v1185
    %v1187 = vpop.xlane.xlu0 %1186
    %v1188 = vrcp.pop %v1178
    %v1189 = vrcp.pop %v1181
    %v1190 = vrcp.pop %v1184
    %v1191 = vrcp.pop %v1187
    %v1192 = vmul.f32 %v1169, %v1188
    %v1193 = vmul.f32 %v1171, %v1189
    %v1194 = vmul.f32 %v1173, %v1190
    %v1195 = vmul.f32 %v1175, %v1191
    %v1196 = vpack.c.bf16 %v1192, %v1192
    %v1197 = vpack.c.bf16 %v1193, %v1193
    %v1198 = vpack.c.bf16 %v1194, %v1194
    %v1199 = vpack.c.bf16 %v1195, %v1195
    %v1201 = vsel %vm1151, %v1196, 0
    %vm1203 = vcmask 1043456
    %v1205 = vsel %vm1203, %v922, 0
    %1207 = vmatprep.subr.bf16.mxu0 0
    %1208 = vmatpush1.bf16.msra.mxu0 %v1205
    %1209 = vmatprep.subr.bf16.mxu0 0
    %1210 = vmatpush1.bf16.msra.mxu0 0
    %1211 = vmatprep.subr.bf16.mxu0 0
    %1212 = vmatpush1.bf16.msra.mxu0 0
    %1213 = vmatprep.subr.bf16.mxu0 0
    %1214 = vmatpush1.bf16.msra.mxu0 0
    %1215 = vmatprep.subr.bf16.mxu0 0
    %1216 = vmatpush1.bf16.msra.mxu0 0
    %1217 = vmatprep.subr.bf16.mxu0 0
    %1218 = vmatpush1.bf16.msra.mxu0 0
    %1219 = vmatprep.subr.bf16.mxu0 0
    %1220 = vmatpush1.bf16.msra.mxu0 0
    %1221 = vmatprep.subr.bf16.mxu0 0
    %1222 = vmatpush1.bf16.msra.mxu0 0
    %1223 = vmatprep.subr.bf16.mxu0 0
    %1224 = vmatpush1.bf16.msra.mxu0 0
    %1225 = vmatprep.subr.bf16.mxu0 0
    %1226 = vmatpush1.bf16.msra.mxu0 0
    %1227 = vmatprep.subr.bf16.mxu0 0
    %1228 = vmatpush1.bf16.msra.mxu0 0
    %1229 = vmatprep.subr.bf16.mxu0 0
    %1230 = vmatpush1.bf16.msra.mxu0 0
    %1231 = vmatprep.subr.bf16.mxu0 0
    %1232 = vmatpush1.bf16.msra.mxu0 0
    %1233 = vmatprep.subr.bf16.mxu0 0
    %1234 = vmatpush1.bf16.msra.mxu0 0
    %1235 = vmatprep.subr.bf16.mxu0 0
    %1236 = vmatpush1.bf16.msra.mxu0 0
    %1237 = vmatprep.subr.bf16.mxu0 0
    %1238 = vmatpush1.bf16.msra.mxu0 0
    %1239 = vmatprep.mubr.bf16.mxu0 0
    %1240 = vmatmul.mubr.bf16.gmra.mrb[0].mxu0 %v1201
    %v1241 = vpop.f32.mrb[0].mxu0
    %v1242 = vadd.f32 0.0, %v1241
    %v1243 = vpop.f32.mrb[0].mxu0
    %v1244 = vpop.f32.mrb[0].mxu0
    %v1245 = vpop.f32.mrb[0].mxu0
    %1246 = vdwg.mxu0
    %v1248 = vsel %vm1151, %v1197, 0
    %v1251 = vsel %vm1203, %v923, 0
    %1253 = vmatprep.subr.bf16.mxu0 0
    %1254 = vmatpush1.bf16.msra.mxu0 %v1251
    %1255 = vmatprep.subr.bf16.mxu0 0
    %1256 = vmatpush1.bf16.msra.mxu0 0
    %1257 = vmatprep.subr.bf16.mxu0 0
    %1258 = vmatpush1.bf16.msra.mxu0 0
    %1259 = vmatprep.subr.bf16.mxu0 0
    %1260 = vmatpush1.bf16.msra.mxu0 0
    %1261 = vmatprep.subr.bf16.mxu0 0
    %1262 = vmatpush1.bf16.msra.mxu0 0
    %1263 = vmatprep.subr.bf16.mxu0 0
    %1264 = vmatpush1.bf16.msra.mxu0 0
    %1265 = vmatprep.subr.bf16.mxu0 0
    %1266 = vmatpush1.bf16.msra.mxu0 0
    %1267 = vmatprep.subr.bf16.mxu0 0
    %1268 = vmatpush1.bf16.msra.mxu0 0
    %1269 = vmatprep.subr.bf16.mxu0 0
    %1270 = vmatpush1.bf16.msra.mxu0 0
    %1271 = vmatprep.subr.bf16.mxu0 0
    %1272 = vmatpush1.bf16.msra.mxu0 0
    %1273 = vmatprep.subr.bf16.mxu0 0
    %1274 = vmatpush1.bf16.msra.mxu0 0
    %1275 = vmatprep.subr.bf16.mxu0 0
    %1276 = vmatpush1.bf16.msra.mxu0 0
    %1277 = vmatprep.subr.bf16.mxu0 0
    %1278 = vmatpush1.bf16.msra.mxu0 0
    %1279 = vmatprep.subr.bf16.mxu0 0
    %1280 = vmatpush1.bf16.msra.mxu0 0
    %1281 = vmatprep.subr.bf16.mxu0 0
    %1282 = vmatpush1.bf16.msra.mxu0 0
    %1283 = vmatprep.subr.bf16.mxu0 0
    %1284 = vmatpush1.bf16.msra.mxu0 0
    %1285 = vmatprep.mubr.bf16.mxu0 0
    %1286 = vmatmul.mubr.bf16.gmra.mrb[0].mxu0 %v1248
    %v1287 = vpop.f32.mrb[0].mxu0
    %v1288 = vadd.f32 0.0, %v1287
    %v1289 = vpop.f32.mrb[0].mxu0
    %v1290 = vpop.f32.mrb[0].mxu0
    %v1291 = vpop.f32.mrb[0].mxu0
    %1292 = vdwg.mxu0
    %v1294 = vsel %vm1151, %v1198, 0
    %v1297 = vsel %vm1203, %v924, 0
    %1299 = vmatprep.subr.bf16.mxu0 0
    %1300 = vmatpush1.bf16.msra.mxu0 %v1297
    %1301 = vmatprep.subr.bf16.mxu0 0
    %1302 = vmatpush1.bf16.msra.mxu0 0
    %1303 = vmatprep.subr.bf16.mxu0 0
    %1304 = vmatpush1.bf16.msra.mxu0 0
    %1305 = vmatprep.subr.bf16.mxu0 0
    %1306 = vmatpush1.bf16.msra.mxu0 0
    %1307 = vmatprep.subr.bf16.mxu0 0
    %1308 = vmatpush1.bf16.msra.mxu0 0
    %1309 = vmatprep.subr.bf16.mxu0 0
    %1310 = vmatpush1.bf16.msra.mxu0 0
    %1311 = vmatprep.subr.bf16.mxu0 0
    %1312 = vmatpush1.bf16.msra.mxu0 0
    %1313 = vmatprep.subr.bf16.mxu0 0
    %1314 = vmatpush1.bf16.msra.mxu0 0
    %1315 = vmatprep.subr.bf16.mxu0 0
    %1316 = vmatpush1.bf16.msra.mxu0 0
    %1317 = vmatprep.subr.bf16.mxu0 0
    %1318 = vmatpush1.bf16.msra.mxu0 0
    %1319 = vmatprep.subr.bf16.mxu0 0
    %1320 = vmatpush1.bf16.msra.mxu0 0
    %1321 = vmatprep.subr.bf16.mxu0 0
    %1322 = vmatpush1.bf16.msra.mxu0 0
    %1323 = vmatprep.subr.bf16.mxu0 0
    %1324 = vmatpush1.bf16.msra.mxu0 0
    %1325 = vmatprep.subr.bf16.mxu0 0
    %1326 = vmatpush1.bf16.msra.mxu0 0
    %1327 = vmatprep.subr.bf16.mxu0 0
    %1328 = vmatpush1.bf16.msra.mxu0 0
    %1329 = vmatprep.subr.bf16.mxu0 0
    %1330 = vmatpush1.bf16.msra.mxu0 0
    %1331 = vmatprep.mubr.bf16.mxu0 0
    %1332 = vmatmul.mubr.bf16.gmra.mrb[0].mxu0 %v1294
    %v1333 = vpop.f32.mrb[0].mxu0
    %v1334 = vadd.f32 0.0, %v1333
    %v1335 = vpop.f32.mrb[0].mxu0
    %v1336 = vpop.f32.mrb[0].mxu0
    %v1337 = vpop.f32.mrb[0].mxu0
    %1338 = vdwg.mxu0
    %v1340 = vsel %vm1151, %v1199, 0
    %v1343 = vsel %vm1203, %v925, 0
    %1345 = vmatprep.subr.bf16.mxu0 0
    %1346 = vmatpush1.bf16.msra.mxu0 %v1343
    %1347 = vmatprep.subr.bf16.mxu0 0
    %1348 = vmatpush1.bf16.msra.mxu0 0
    %1349 = vmatprep.subr.bf16.mxu0 0
    %1350 = vmatpush1.bf16.msra.mxu0 0
    %1351 = vmatprep.subr.bf16.mxu0 0
    %1352 = vmatpush1.bf16.msra.mxu0 0
    %1353 = vmatprep.subr.bf16.mxu0 0
    %1354 = vmatpush1.bf16.msra.mxu0 0
    %1355 = vmatprep.subr.bf16.mxu0 0
    %1356 = vmatpush1.bf16.msra.mxu0 0
    %1357 = vmatprep.subr.bf16.mxu0 0
    %1358 = vmatpush1.bf16.msra.mxu0 0
    %1359 = vmatprep.subr.bf16.mxu0 0
    %1360 = vmatpush1.bf16.msra.mxu0 0
    %1361 = vmatprep.subr.bf16.mxu0 0
    %1362 = vmatpush1.bf16.msra.mxu0 0
    %1363 = vmatprep.subr.bf16.mxu0 0
    %1364 = vmatpush1.bf16.msra.mxu0 0
    %1365 = vmatprep.subr.bf16.mxu0 0
    %1366 = vmatpush1.bf16.msra.mxu0 0
    %1367 = vmatprep.subr.bf16.mxu0 0
    %1368 = vmatpush1.bf16.msra.mxu0 0
    %1369 = vmatprep.subr.bf16.mxu0 0
    %1370 = vmatpush1.bf16.msra.mxu0 0
    %1371 = vmatprep.subr.bf16.mxu0 0
    %1372 = vmatpush1.bf16.msra.mxu0 0
    %1373 = vmatprep.subr.bf16.mxu0 0
    %1374 = vmatpush1.bf16.msra.mxu0 0
    %1375 = vmatprep.subr.bf16.mxu0 0
    %1376 = vmatpush1.bf16.msra.mxu0 0
    %1377 = vmatprep.mubr.bf16.mxu0 0
    %1378 = vmatmul.mubr.bf16.gmra.mrb[0].mxu0 %v1340
    %v1379 = vpop.f32.mrb[0].mxu0
    %v1380 = vadd.f32 0.0, %v1379
    %v1381 = vpop.f32.mrb[0].mxu0
    %v1382 = vpop.f32.mrb[0].mxu0
    %v1383 = vpop.f32.mrb[0].mxu0
    %1384 = vdwg.mxu0
    %1385 = vst.msk [vmem:[#allocation2] sm:$0xff] %vm934, %v1242
    %1386 = vst.msk [vmem:[#allocation2 + $0x10] sm:$0xff] %vm934, %v1288
    %1387 = vst.msk [vmem:[#allocation2 + $0x20] sm:$0xff] %vm934, %v1334
    %1388 = vst.msk [vmem:[#allocation2 + $0x30] sm:$0xff] %vm934, %v1380
    %v1389 = vpack.c.b16 %v882, %v882
    %1390 = vrot.lane.b32.xlu0 %v1389, 64
    %v1391 = vpop.permute.xlu0 %1390
    %v1392 = vpack.c.b16 %v898, %v898
    %1393 = vrot.lane.b32.xlu0 %v1392, 64
    %v1394 = vpop.permute.xlu0 %1393
    %v1396 = vsel %vm934, %v1391, 0
    %v1399 = vsel %vm934, %v1394, 0
    %1401 = vmatprep.subr.bf16.mxu0 0
    %1402 = vmatpush1.bf16.xpose.msra.mxu0 %v1399
    %1403 = vmatprep.subr.bf16.mxu0 0
    %1404 = vmatpush1.bf16.xpose.msra.mxu0 0
    %1405 = vmatprep.subr.bf16.mxu0 0
    %1406 = vmatpush1.bf16.xpose.msra.mxu0 0
    %1407 = vmatprep.subr.bf16.mxu0 0
    %1408 = vmatpush1.bf16.xpose.msra.mxu0 0
    %1409 = vmatprep.subr.bf16.mxu0 0
    %1410 = vmatpush1.bf16.xpose.msra.mxu0 0
    %1411 = vmatprep.subr.bf16.mxu0 0
    %1412 = vmatpush1.bf16.xpose.msra.mxu0 0
    %1413 = vmatprep.subr.bf16.mxu0 0
    %1414 = vmatpush1.bf16.xpose.msra.mxu0 0
    %1415 = vmatprep.subr.bf16.mxu0 0
    %1416 = vmatpush1.bf16.xpose.msra.mxu0 0
    %1417 = vmatprep.subr.bf16.mxu0 0
    %1418 = vmatpush1.bf16.xpose.msra.mxu0 0
    %1419 = vmatprep.subr.bf16.mxu0 0
    %1420 = vmatpush1.bf16.xpose.msra.mxu0 0
    %1421 = vmatprep.subr.bf16.mxu0 0
    %1422 = vmatpush1.bf16.xpose.msra.mxu0 0
    %1423 = vmatprep.subr.bf16.mxu0 0
    %1424 = vmatpush1.bf16.xpose.msra.mxu0 0
    %1425 = vmatprep.subr.bf16.mxu0 0
    %1426 = vmatpush1.bf16.xpose.msra.mxu0 0
    %1427 = vmatprep.subr.bf16.mxu0 0
    %1428 = vmatpush1.bf16.xpose.msra.mxu0 0
    %1429 = vmatprep.subr.bf16.mxu0 0
    %1430 = vmatpush1.bf16.xpose.msra.mxu0 0
    %1431 = vmatprep.subr.bf16.mxu0 0
    %1432 = vmatpush1.bf16.xpose.msra.mxu0 0
    %1433 = vmatprep.mubr.bf16.mxu0 0
    %1434 = vmatmul.mubr.bf16.gmra.mrb[0].mxu0 %v1396
    %v1435 = vpop.f32.mrb[0].mxu0
    %v1436 = vadd.f32 0.0, %v1435
    %v1437 = vpop.f32.mrb[0].mxu0
    %v1438 = vpop.f32.mrb[0].mxu0
    %v1439 = vpop.f32.mrb[0].mxu0
    %1440 = vdwg.mxu0
    %v1441 = vpack.c.b16 %v884, %v884
    %1442 = vrot.lane.b32.xlu0 %v1441, 64
    %v1443 = vpop.permute.xlu0 %1442
    %v1444 = vpack.c.b16 %v900, %v900
    %1445 = vrot.lane.b32.xlu0 %v1444, 64
    %v1446 = vpop.permute.xlu0 %1445
    %v1448 = vsel %vm934, %v1443, 0
    %v1451 = vsel %vm934, %v1446, 0
    %1453 = vmatprep.subr.bf16.mxu0 0
    %1454 = vmatpush1.bf16.xpose.msra.mxu0 %v1451
    %1455 = vmatprep.subr.bf16.mxu0 0
    %1456 = vmatpush1.bf16.xpose.msra.mxu0 0
    %1457 = vmatprep.subr.bf16.mxu0 0
    %1458 = vmatpush1.bf16.xpose.msra.mxu0 0
    %1459 = vmatprep.subr.bf16.mxu0 0
    %1460 = vmatpush1.bf16.xpose.msra.mxu0 0
    %1461 = vmatprep.subr.bf16.mxu0 0
    %1462 = vmatpush1.bf16.xpose.msra.mxu0 0
    %1463 = vmatprep.subr.bf16.mxu0 0
    %1464 = vmatpush1.bf16.xpose.msra.mxu0 0
    %1465 = vmatprep.subr.bf16.mxu0 0
    %1466 = vmatpush1.bf16.xpose.msra.mxu0 0
    %1467 = vmatprep.subr.bf16.mxu0 0
    %1468 = vmatpush1.bf16.xpose.msra.mxu0 0
    %1469 = vmatprep.subr.bf16.mxu0 0
    %1470 = vmatpush1.bf16.xpose.msra.mxu0 0
    %1471 = vmatprep.subr.bf16.mxu0 0
    %1472 = vmatpush1.bf16.xpose.msra.mxu0 0
    %1473 = vmatprep.subr.bf16.mxu0 0
    %1474 = vmatpush1.bf16.xpose.msra.mxu0 0
    %1475 = vmatprep.subr.bf16.mxu0 0
    %1476 = vmatpush1.bf16.xpose.msra.mxu0 0
    %1477 = vmatprep.subr.bf16.mxu0 0
    %1478 = vmatpush1.bf16.xpose.msra.mxu0 0
    %1479 = vmatprep.subr.bf16.mxu0 0
    %1480 = vmatpush1.bf16.xpose.msra.mxu0 0
    %1481 = vmatprep.subr.bf16.mxu0 0
    %1482 = vmatpush1.bf16.xpose.msra.mxu0 0
    %1483 = vmatprep.subr.bf16.mxu0 0
    %1484 = vmatpush1.bf16.xpose.msra.mxu0 0
    %1485 = vmatprep.mubr.bf16.mxu0 0
    %1486 = vmatmul.mubr.bf16.gmra.mrb[0].mxu0 %v1448
    %v1487 = vpop.f32.mrb[0].mxu0
    %v1488 = vadd.f32 0.0, %v1487
    %v1489 = vpop.f32.mrb[0].mxu0
    %v1490 = vpop.f32.mrb[0].mxu0
    %v1491 = vpop.f32.mrb[0].mxu0
    %1492 = vdwg.mxu0
    %v1493 = vpack.c.b16 %v886, %v886
    %1494 = vrot.lane.b32.xlu0 %v1493, 64
    %v1495 = vpop.permute.xlu0 %1494
    %v1496 = vpack.c.b16 %v902, %v902
    %1497 = vrot.lane.b32.xlu0 %v1496, 64
    %v1498 = vpop.permute.xlu0 %1497
    %v1500 = vsel %vm934, %v1495, 0
    %v1503 = vsel %vm934, %v1498, 0
    %1505 = vmatprep.subr.bf16.mxu0 0
    %1506 = vmatpush1.bf16.xpose.msra.mxu0 %v1503
    %1507 = vmatprep.subr.bf16.mxu0 0
    %1508 = vmatpush1.bf16.xpose.msra.mxu0 0
    %1509 = vmatprep.subr.bf16.mxu0 0
    %1510 = vmatpush1.bf16.xpose.msra.mxu0 0
    %1511 = vmatprep.subr.bf16.mxu0 0
    %1512 = vmatpush1.bf16.xpose.msra.mxu0 0
    %1513 = vmatprep.subr.bf16.mxu0 0
    %1514 = vmatpush1.bf16.xpose.msra.mxu0 0
    %1515 = vmatprep.subr.bf16.mxu0 0
    %1516 = vmatpush1.bf16.xpose.msra.mxu0 0
    %1517 = vmatprep.subr.bf16.mxu0 0
    %1518 = vmatpush1.bf16.xpose.msra.mxu0 0
    %1519 = vmatprep.subr.bf16.mxu0 0
    %1520 = vmatpush1.bf16.xpose.msra.mxu0 0
    %1521 = vmatprep.subr.bf16.mxu0 0
    %1522 = vmatpush1.bf16.xpose.msra.mxu0 0
    %1523 = vmatprep.subr.bf16.mxu0 0
    %1524 = vmatpush1.bf16.xpose.msra.mxu0 0
    %1525 = vmatprep.subr.bf16.mxu0 0
    %1526 = vmatpush1.bf16.xpose.msra.mxu0 0
    %1527 = vmatprep.subr.bf16.mxu0 0
    %1528 = vmatpush1.bf16.xpose.msra.mxu0 0
    %1529 = vmatprep.subr.bf16.mxu0 0
    %1530 = vmatpush1.bf16.xpose.msra.mxu0 0
    %1531 = vmatprep.subr.bf16.mxu0 0
    %1532 = vmatpush1.bf16.xpose.msra.mxu0 0
    %1533 = vmatprep.subr.bf16.mxu0 0
    %1534 = vmatpush1.bf16.xpose.msra.mxu0 0
    %1535 = vmatprep.subr.bf16.mxu0 0
    %1536 = vmatpush1.bf16.xpose.msra.mxu0 0
    %1537 = vmatprep.mubr.bf16.mxu0 0
    %1538 = vmatmul.mubr.bf16.gmra.mrb[0].mxu0 %v1500
    %v1539 = vpop.f32.mrb[0].mxu0
    %v1540 = vadd.f32 0.0, %v1539
    %v1541 = vpop.f32.mrb[0].mxu0
    %v1542 = vpop.f32.mrb[0].mxu0
    %v1543 = vpop.f32.mrb[0].mxu0
    %1544 = vdwg.mxu0
    %v1545 = vpack.c.b16 %v888, %v888
    %1546 = vrot.lane.b32.xlu0 %v1545, 64
    %v1547 = vpop.permute.xlu0 %1546
    %v1548 = vpack.c.b16 %v904, %v904
    %1549 = vrot.lane.b32.xlu0 %v1548, 64
    %v1550 = vpop.permute.xlu0 %1549
    %v1552 = vsel %vm934, %v1547, 0
    %v1555 = vsel %vm934, %v1550, 0
    %1557 = vmatprep.subr.bf16.mxu0 0
    %1558 = vmatpush1.bf16.xpose.msra.mxu0 %v1555
    %1559 = vmatprep.subr.bf16.mxu0 0
    %1560 = vmatpush1.bf16.xpose.msra.mxu0 0
    %1561 = vmatprep.subr.bf16.mxu0 0
    %1562 = vmatpush1.bf16.xpose.msra.mxu0 0
    %1563 = vmatprep.subr.bf16.mxu0 0
    %1564 = vmatpush1.bf16.xpose.msra.mxu0 0
    %1565 = vmatprep.subr.bf16.mxu0 0
    %1566 = vmatpush1.bf16.xpose.msra.mxu0 0
    %1567 = vmatprep.subr.bf16.mxu0 0
    %1568 = vmatpush1.bf16.xpose.msra.mxu0 0
    %1569 = vmatprep.subr.bf16.mxu0 0
    %1570 = vmatpush1.bf16.xpose.msra.mxu0 0
    %1571 = vmatprep.subr.bf16.mxu0 0
    %1572 = vmatpush1.bf16.xpose.msra.mxu0 0
    %1573 = vmatprep.subr.bf16.mxu0 0
    %1574 = vmatpush1.bf16.xpose.msra.mxu0 0
    %1575 = vmatprep.subr.bf16.mxu0 0
    %1576 = vmatpush1.bf16.xpose.msra.mxu0 0
    %1577 = vmatprep.subr.bf16.mxu0 0
    %1578 = vmatpush1.bf16.xpose.msra.mxu0 0
    %1579 = vmatprep.subr.bf16.mxu0 0
    %1580 = vmatpush1.bf16.xpose.msra.mxu0 0
    %1581 = vmatprep.subr.bf16.mxu0 0
    %1582 = vmatpush1.bf16.xpose.msra.mxu0 0
    %1583 = vmatprep.subr.bf16.mxu0 0
    %1584 = vmatpush1.bf16.xpose.msra.mxu0 0
    %1585 = vmatprep.subr.bf16.mxu0 0
    %1586 = vmatpush1.bf16.xpose.msra.mxu0 0
    %1587 = vmatprep.subr.bf16.mxu0 0
    %1588 = vmatpush1.bf16.xpose.msra.mxu0 0
    %1589 = vmatprep.mubr.bf16.mxu0 0
    %1590 = vmatmul.mubr.bf16.gmra.mrb[0].mxu0 %v1552
    %v1591 = vpop.f32.mrb[0].mxu0
    %v1592 = vadd.f32 0.0, %v1591
    %v1593 = vpop.f32.mrb[0].mxu0
    %v1594 = vpop.f32.mrb[0].mxu0
    %v1595 = vpop.f32.mrb[0].mxu0
    %1596 = vdwg.mxu0
    %v1597 = vmul.f32 %v1436, 0.125
    %v1598 = vmul.f32 %v1488, 0.125
    %v1599 = vmul.f32 %v1540, 0.125
    %v1600 = vmul.f32 %v1592, 0.125
    %v1601 = vsel %vm1143, -1e+30, %v1597
    %v1602 = vsel %vm1144, -1e+30, %v1598
    %v1603 = vsel %vm1145, -1e+30, %v1599
    %v1604 = vsel %vm1146, -1e+30, %v1600
    %v1605 = vsel %vm1151, %v1601, -inf
    %1606 = vmax.xlane.f32.xlu0 %v1605
    %v1607 = vpop.xlane.xlu0 %1606
    %v1608 = vsel %vm1151, %v1602, -inf
    %1609 = vmax.xlane.f32.xlu0 %v1608
    %v1610 = vpop.xlane.xlu0 %1609
    %v1611 = vsel %vm1151, %v1603, -inf
    %1612 = vmax.xlane.f32.xlu0 %v1611
    %v1613 = vpop.xlane.xlu0 %1612
    %v1614 = vsel %vm1151, %v1604, -inf
    %1615 = vmax.xlane.f32.xlu0 %v1614
    %v1616 = vpop.xlane.xlu0 %1615
    %v1617 = vsub.f32 %v1601, %v1607
    %v1618 = vsub.f32 %v1602, %v1610
    %v1619 = vsub.f32 %v1603, %v1613
    %v1620 = vsub.f32 %v1604, %v1616
    %v1621 = vmul.f32 %v1617, 1.442695
    %v1622 = vpow.pop %v1621
    %v1623 = vmul.f32 %v1618, 1.442695
    %v1624 = vpow.pop %v1623
    %v1625 = vmul.f32 %v1619, 1.442695
    %v1626 = vpow.pop %v1625
    %v1627 = vmul.f32 %v1620, 1.442695
    %v1628 = vpow.pop %v1627
    %v1629 = vsel %vm1151, %v1622, 0.0
    %1630 = vadd.xlane.f32.xlu0 %v1629
    %v1631 = vpop.xlane.xlu0 %1630
    %v1632 = vsel %vm1151, %v1624, 0.0
    %1633 = vadd.xlane.f32.xlu0 %v1632
    %v1634 = vpop.xlane.xlu0 %1633
    %v1635 = vsel %vm1151, %v1626, 0.0
    %1636 = vadd.xlane.f32.xlu0 %v1635
    %v1637 = vpop.xlane.xlu0 %1636
    %v1638 = vsel %vm1151, %v1628, 0.0
    %1639 = vadd.xlane.f32.xlu0 %v1638
    %v1640 = vpop.xlane.xlu0 %1639
    %v1641 = vrcp.pop %v1631
    %v1642 = vrcp.pop %v1634
    %v1643 = vrcp.pop %v1637
    %v1644 = vrcp.pop %v1640
    %v1645 = vmul.f32 %v1622, %v1641
    %v1646 = vmul.f32 %v1624, %v1642
    %v1647 = vmul.f32 %v1626, %v1643
    %v1648 = vmul.f32 %v1628, %v1644
    %v1649 = vpack.c.bf16 %v1645, %v1645
    %v1650 = vpack.c.bf16 %v1646, %v1646
    %v1651 = vpack.c.bf16 %v1647, %v1647
    %v1652 = vpack.c.bf16 %v1648, %v1648
    %v1653 = vpack.c.b16 %v914, %v914
    %1654 = vrot.lane.b32.xlu0 %v1653, 64
    %v1655 = vpop.permute.xlu0 %1654
    %v1657 = vsel %vm1151, %v1649, 0
    %v1660 = vsel %vm1203, %v1655, 0
    %1662 = vmatprep.subr.bf16.mxu0 0
    %1663 = vmatpush1.bf16.msra.mxu0 %v1660
    %1664 = vmatprep.subr.bf16.mxu0 0
    %1665 = vmatpush1.bf16.msra.mxu0 0
    %1666 = vmatprep.subr.bf16.mxu0 0
    %1667 = vmatpush1.bf16.msra.mxu0 0
    %1668 = vmatprep.subr.bf16.mxu0 0
    %1669 = vmatpush1.bf16.msra.mxu0 0
    %1670 = vmatprep.subr.bf16.mxu0 0
    %1671 = vmatpush1.bf16.msra.mxu0 0
    %1672 = vmatprep.subr.bf16.mxu0 0
    %1673 = vmatpush1.bf16.msra.mxu0 0
    %1674 = vmatprep.subr.bf16.mxu0 0
    %1675 = vmatpush1.bf16.msra.mxu0 0
    %1676 = vmatprep.subr.bf16.mxu0 0
    %1677 = vmatpush1.bf16.msra.mxu0 0
    %1678 = vmatprep.subr.bf16.mxu0 0
    %1679 = vmatpush1.bf16.msra.mxu0 0
    %1680 = vmatprep.subr.bf16.mxu0 0
    %1681 = vmatpush1.bf16.msra.mxu0 0
    %1682 = vmatprep.subr.bf16.mxu0 0
    %1683 = vmatpush1.bf16.msra.mxu0 0
    %1684 = vmatprep.subr.bf16.mxu0 0
    %1685 = vmatpush1.bf16.msra.mxu0 0
    %1686 = vmatprep.subr.bf16.mxu0 0
    %1687 = vmatpush1.bf16.msra.mxu0 0
    %1688 = vmatprep.subr.bf16.mxu0 0
    %1689 = vmatpush1.bf16.msra.mxu0 0
    %1690 = vmatprep.subr.bf16.mxu0 0
    %1691 = vmatpush1.bf16.msra.mxu0 0
    %1692 = vmatprep.subr.bf16.mxu0 0
    %1693 = vmatpush1.bf16.msra.mxu0 0
    %1694 = vmatprep.mubr.bf16.mxu0 0
    %1695 = vmatmul.mubr.bf16.gmra.mrb[0].mxu0 %v1657
    %v1696 = vpop.f32.mrb[0].mxu0
    %v1697 = vadd.f32 0.0, %v1696
    %v1698 = vpop.f32.mrb[0].mxu0
    %v1699 = vpop.f32.mrb[0].mxu0
    %v1700 = vpop.f32.mrb[0].mxu0
    %1701 = vdwg.mxu0
    %v1702 = vpack.c.b16 %v916, %v916
    %1703 = vrot.lane.b32.xlu0 %v1702, 64
    %v1704 = vpop.permute.xlu0 %1703
    %v1706 = vsel %vm1151, %v1650, 0
    %v1709 = vsel %vm1203, %v1704, 0
    %1711 = vmatprep.subr.bf16.mxu0 0
    %1712 = vmatpush1.bf16.msra.mxu0 %v1709
    %1713 = vmatprep.subr.bf16.mxu0 0
    %1714 = vmatpush1.bf16.msra.mxu0 0
    %1715 = vmatprep.subr.bf16.mxu0 0
    %1716 = vmatpush1.bf16.msra.mxu0 0
    %1717 = vmatprep.subr.bf16.mxu0 0
    %1718 = vmatpush1.bf16.msra.mxu0 0
    %1719 = vmatprep.subr.bf16.mxu0 0
    %1720 = vmatpush1.bf16.msra.mxu0 0
    %1721 = vmatprep.subr.bf16.mxu0 0
    %1722 = vmatpush1.bf16.msra.mxu0 0
    %1723 = vmatprep.subr.bf16.mxu0 0
    %1724 = vmatpush1.bf16.msra.mxu0 0
    %1725 = vmatprep.subr.bf16.mxu0 0
    %1726 = vmatpush1.bf16.msra.mxu0 0
    %1727 = vmatprep.subr.bf16.mxu0 0
    %1728 = vmatpush1.bf16.msra.mxu0 0
    %1729 = vmatprep.subr.bf16.mxu0 0
    %1730 = vmatpush1.bf16.msra.mxu0 0
    %1731 = vmatprep.subr.bf16.mxu0 0
    %1732 = vmatpush1.bf16.msra.mxu0 0
    %1733 = vmatprep.subr.bf16.mxu0 0
    %1734 = vmatpush1.bf16.msra.mxu0 0
    %1735 = vmatprep.subr.bf16.mxu0 0
    %1736 = vmatpush1.bf16.msra.mxu0 0
    %1737 = vmatprep.subr.bf16.mxu0 0
    %1738 = vmatpush1.bf16.msra.mxu0 0
    %1739 = vmatprep.subr.bf16.mxu0 0
    %1740 = vmatpush1.bf16.msra.mxu0 0
    %1741 = vmatprep.subr.bf16.mxu0 0
    %1742 = vmatpush1.bf16.msra.mxu0 0
    %1743 = vmatprep.mubr.bf16.mxu0 0
    %1744 = vmatmul.mubr.bf16.gmra.mrb[0].mxu0 %v1706
    %v1745 = vpop.f32.mrb[0].mxu0
    %v1746 = vadd.f32 0.0, %v1745
    %v1747 = vpop.f32.mrb[0].mxu0
    %v1748 = vpop.f32.mrb[0].mxu0
    %v1749 = vpop.f32.mrb[0].mxu0
    %1750 = vdwg.mxu0
    %v1751 = vpack.c.b16 %v918, %v918
    %1752 = vrot.lane.b32.xlu0 %v1751, 64
    %v1753 = vpop.permute.xlu0 %1752
    %v1755 = vsel %vm1151, %v1651, 0
    %v1758 = vsel %vm1203, %v1753, 0
    %1760 = vmatprep.subr.bf16.mxu0 0
    %1761 = vmatpush1.bf16.msra.mxu0 %v1758
    %1762 = vmatprep.subr.bf16.mxu0 0
    %1763 = vmatpush1.bf16.msra.mxu0 0
    %1764 = vmatprep.subr.bf16.mxu0 0
    %1765 = vmatpush1.bf16.msra.mxu0 0
    %1766 = vmatprep.subr.bf16.mxu0 0
    %1767 = vmatpush1.bf16.msra.mxu0 0
    %1768 = vmatprep.subr.bf16.mxu0 0
    %1769 = vmatpush1.bf16.msra.mxu0 0
    %1770 = vmatprep.subr.bf16.mxu0 0
    %1771 = vmatpush1.bf16.msra.mxu0 0
    %1772 = vmatprep.subr.bf16.mxu0 0
    %1773 = vmatpush1.bf16.msra.mxu0 0
    %1774 = vmatprep.subr.bf16.mxu0 0
    %1775 = vmatpush1.bf16.msra.mxu0 0
    %1776 = vmatprep.subr.bf16.mxu0 0
    %1777 = vmatpush1.bf16.msra.mxu0 0
    %1778 = vmatprep.subr.bf16.mxu0 0
    %1779 = vmatpush1.bf16.msra.mxu0 0
    %1780 = vmatprep.subr.bf16.mxu0 0
    %1781 = vmatpush1.bf16.msra.mxu0 0
    %1782 = vmatprep.subr.bf16.mxu0 0
    %1783 = vmatpush1.bf16.msra.mxu0 0
    %1784 = vmatprep.subr.bf16.mxu0 0
    %1785 = vmatpush1.bf16.msra.mxu0 0
    %1786 = vmatprep.subr.bf16.mxu0 0
    %1787 = vmatpush1.bf16.msra.mxu0 0
    %1788 = vmatprep.subr.bf16.mxu0 0
    %1789 = vmatpush1.bf16.msra.mxu0 0
    %1790 = vmatprep.subr.bf16.mxu0 0
    %1791 = vmatpush1.bf16.msra.mxu0 0
    %1792 = vmatprep.mubr.bf16.mxu0 0
    %1793 = vmatmul.mubr.bf16.gmra.mrb[0].mxu0 %v1755
    %v1794 = vpop.f32.mrb[0].mxu0
    %v1795 = vadd.f32 0.0, %v1794
    %v1796 = vpop.f32.mrb[0].mxu0
    %v1797 = vpop.f32.mrb[0].mxu0
    %v1798 = vpop.f32.mrb[0].mxu0
    %1799 = vdwg.mxu0
    %v1800 = vpack.c.b16 %v920, %v920
    %1801 = vrot.lane.b32.xlu0 %v1800, 64
    %v1802 = vpop.permute.xlu0 %1801
    %v1804 = vsel %vm1151, %v1652, 0
    %v1807 = vsel %vm1203, %v1802, 0
    %1809 = vmatprep.subr.bf16.mxu0 0
    %1810 = vmatpush1.bf16.msra.mxu0 %v1807
    %1811 = vmatprep.subr.bf16.mxu0 0
    %1812 = vmatpush1.bf16.msra.mxu0 0
    %1813 = vmatprep.subr.bf16.mxu0 0
    %1814 = vmatpush1.bf16.msra.mxu0 0
    %1815 = vmatprep.subr.bf16.mxu0 0
    %1816 = vmatpush1.bf16.msra.mxu0 0
    %1817 = vmatprep.subr.bf16.mxu0 0
    %1818 = vmatpush1.bf16.msra.mxu0 0
    %1819 = vmatprep.subr.bf16.mxu0 0
    %1820 = vmatpush1.bf16.msra.mxu0 0
    %1821 = vmatprep.subr.bf16.mxu0 0
    %1822 = vmatpush1.bf16.msra.mxu0 0
    %1823 = vmatprep.subr.bf16.mxu0 0
    %1824 = vmatpush1.bf16.msra.mxu0 0
    %1825 = vmatprep.subr.bf16.mxu0 0
    %1826 = vmatpush1.bf16.msra.mxu0 0
    %1827 = vmatprep.subr.bf16.mxu0 0
    %1828 = vmatpush1.bf16.msra.mxu0 0
    %1829 = vmatprep.subr.bf16.mxu0 0
    %1830 = vmatpush1.bf16.msra.mxu0 0
    %1831 = vmatprep.subr.bf16.mxu0 0
    %1832 = vmatpush1.bf16.msra.mxu0 0
    %1833 = vmatprep.subr.bf16.mxu0 0
    %1834 = vmatpush1.bf16.msra.mxu0 0
    %1835 = vmatprep.subr.bf16.mxu0 0
    %1836 = vmatpush1.bf16.msra.mxu0 0
    %1837 = vmatprep.subr.bf16.mxu0 0
    %1838 = vmatpush1.bf16.msra.mxu0 0
    %1839 = vmatprep.subr.bf16.mxu0 0
    %1840 = vmatpush1.bf16.msra.mxu0 0
    %1841 = vmatprep.mubr.bf16.mxu0 0
    %1842 = vmatmul.mubr.bf16.gmra.mrb[0].mxu0 %v1804
    %v1843 = vpop.f32.mrb[0].mxu0
    %v1844 = vadd.f32 0.0, %v1843
    %v1845 = vpop.f32.mrb[0].mxu0
    %v1846 = vpop.f32.mrb[0].mxu0
    %v1847 = vpop.f32.mrb[0].mxu0
    %1848 = vdwg.mxu0
    %1853 = vrot.lane.b32.xlu0 %v1697, 64
    %v1854 = vpop.permute.xlu0 %1853
    %1855 = vrot.lane.b32.xlu0 %v1746, 64
    %v1856 = vpop.permute.xlu0 %1855
    %1857 = vrot.lane.b32.xlu0 %v1795, 64
    %v1858 = vpop.permute.xlu0 %1857
    %1859 = vrot.lane.b32.xlu0 %v1844, 64
    %v1860 = vpop.permute.xlu0 %1859
    %vm1865 = vcmask 1048064
    %1866 = vst.msk [vmem:[#allocation2] sm:$0xff] %vm1865, %v1854
    %1867 = vst.msk [vmem:[#allocation2 + $0x10] sm:$0xff] %vm1865, %v1856
    %1868 = vst.msk [vmem:[#allocation2 + $0x20] sm:$0xff] %vm1865, %v1858
    %1869 = vst.msk [vmem:[#allocation2 + $0x30] sm:$0xff] %vm1865, %v1860
    %v1870 = vrot.slane %v890, 4
    %v1871 = vrot.slane %v906, 4
    %v1873 = vsel %vm934, %v1870, 0
    %v1876 = vsel %vm934, %v1871, 0
    %1878 = vmatprep.subr.bf16.mxu0 0
    %1879 = vmatpush1.bf16.xpose.msra.mxu0 %v1876
    %1880 = vmatprep.subr.bf16.mxu0 0
    %1881 = vmatpush1.bf16.xpose.msra.mxu0 0
    %1882 = vmatprep.subr.bf16.mxu0 0
    %1883 = vmatpush1.bf16.xpose.msra.mxu0 0
    %1884 = vmatprep.subr.bf16.mxu0 0
    %1885 = vmatpush1.bf16.xpose.msra.mxu0 0
    %1886 = vmatprep.subr.bf16.mxu0 0
    %1887 = vmatpush1.bf16.xpose.msra.mxu0 0
    %1888 = vmatprep.subr.bf16.mxu0 0
    %1889 = vmatpush1.bf16.xpose.msra.mxu0 0
    %1890 = vmatprep.subr.bf16.mxu0 0
    %1891 = vmatpush1.bf16.xpose.msra.mxu0 0
    %1892 = vmatprep.subr.bf16.mxu0 0
    %1893 = vmatpush1.bf16.xpose.msra.mxu0 0
    %1894 = vmatprep.subr.bf16.mxu0 0
    %1895 = vmatpush1.bf16.xpose.msra.mxu0 0
    %1896 = vmatprep.subr.bf16.mxu0 0
    %1897 = vmatpush1.bf16.xpose.msra.mxu0 0
    %1898 = vmatprep.subr.bf16.mxu0 0
    %1899 = vmatpush1.bf16.xpose.msra.mxu0 0
    %1900 = vmatprep.subr.bf16.mxu0 0
    %1901 = vmatpush1.bf16.xpose.msra.mxu0 0
    %1902 = vmatprep.subr.bf16.mxu0 0
    %1903 = vmatpush1.bf16.xpose.msra.mxu0 0
    %1904 = vmatprep.subr.bf16.mxu0 0
    %1905 = vmatpush1.bf16.xpose.msra.mxu0 0
    %1906 = vmatprep.subr.bf16.mxu0 0
    %1907 = vmatpush1.bf16.xpose.msra.mxu0 0
    %1908 = vmatprep.subr.bf16.mxu0 0
    %1909 = vmatpush1.bf16.xpose.msra.mxu0 0
    %1910 = vmatprep.mubr.bf16.mxu0 0
    %1911 = vmatmul.mubr.bf16.gmra.mrb[0].mxu0 %v1873
    %v1912 = vpop.f32.mrb[0].mxu0
    %v1913 = vadd.f32 0.0, %v1912
    %v1914 = vpop.f32.mrb[0].mxu0
    %v1915 = vpop.f32.mrb[0].mxu0
    %v1916 = vpop.f32.mrb[0].mxu0
    %1917 = vdwg.mxu0
    %v1918 = vrot.slane %v891, 4
    %v1919 = vrot.slane %v907, 4
    %v1921 = vsel %vm934, %v1918, 0
    %v1924 = vsel %vm934, %v1919, 0
    %1926 = vmatprep.subr.bf16.mxu0 0
    %1927 = vmatpush1.bf16.xpose.msra.mxu0 %v1924
    %1928 = vmatprep.subr.bf16.mxu0 0
    %1929 = vmatpush1.bf16.xpose.msra.mxu0 0
    %1930 = vmatprep.subr.bf16.mxu0 0
    %1931 = vmatpush1.bf16.xpose.msra.mxu0 0
    %1932 = vmatprep.subr.bf16.mxu0 0
    %1933 = vmatpush1.bf16.xpose.msra.mxu0 0
    %1934 = vmatprep.subr.bf16.mxu0 0
    %1935 = vmatpush1.bf16.xpose.msra.mxu0 0
    %1936 = vmatprep.subr.bf16.mxu0 0
    %1937 = vmatpush1.bf16.xpose.msra.mxu0 0
    %1938 = vmatprep.subr.bf16.mxu0 0
    %1939 = vmatpush1.bf16.xpose.msra.mxu0 0
    %1940 = vmatprep.subr.bf16.mxu0 0
    %1941 = vmatpush1.bf16.xpose.msra.mxu0 0
    %1942 = vmatprep.subr.bf16.mxu0 0
    %1943 = vmatpush1.bf16.xpose.msra.mxu0 0
    %1944 = vmatprep.subr.bf16.mxu0 0
    %1945 = vmatpush1.bf16.xpose.msra.mxu0 0
    %1946 = vmatprep.subr.bf16.mxu0 0
    %1947 = vmatpush1.bf16.xpose.msra.mxu0 0
    %1948 = vmatprep.subr.bf16.mxu0 0
    %1949 = vmatpush1.bf16.xpose.msra.mxu0 0
    %1950 = vmatprep.subr.bf16.mxu0 0
    %1951 = vmatpush1.bf16.xpose.msra.mxu0 0
    %1952 = vmatprep.subr.bf16.mxu0 0
    %1953 = vmatpush1.bf16.xpose.msra.mxu0 0
    %1954 = vmatprep.subr.bf16.mxu0 0
    %1955 = vmatpush1.bf16.xpose.msra.mxu0 0
    %1956 = vmatprep.subr.bf16.mxu0 0
    %1957 = vmatpush1.bf16.xpose.msra.mxu0 0
    %1958 = vmatprep.mubr.bf16.mxu0 0
    %1959 = vmatmul.mubr.bf16.gmra.mrb[0].mxu0 %v1921
    %v1960 = vpop.f32.mrb[0].mxu0
    %v1961 = vadd.f32 0.0, %v1960
    %v1962 = vpop.f32.mrb[0].mxu0
    %v1963 = vpop.f32.mrb[0].mxu0
    %v1964 = vpop.f32.mrb[0].mxu0
    %1965 = vdwg.mxu0
    %v1966 = vrot.slane %v892, 4
    %v1967 = vrot.slane %v908, 4
    %v1969 = vsel %vm934, %v1966, 0
    %v1972 = vsel %vm934, %v1967, 0
    %1974 = vmatprep.subr.bf16.mxu0 0
    %1975 = vmatpush1.bf16.xpose.msra.mxu0 %v1972
    %1976 = vmatprep.subr.bf16.mxu0 0
    %1977 = vmatpush1.bf16.xpose.msra.mxu0 0
    %1978 = vmatprep.subr.bf16.mxu0 0
    %1979 = vmatpush1.bf16.xpose.msra.mxu0 0
    %1980 = vmatprep.subr.bf16.mxu0 0
    %1981 = vmatpush1.bf16.xpose.msra.mxu0 0
    %1982 = vmatprep.subr.bf16.mxu0 0
    %1983 = vmatpush1.bf16.xpose.msra.mxu0 0
    %1984 = vmatprep.subr.bf16.mxu0 0
    %1985 = vmatpush1.bf16.xpose.msra.mxu0 0
    %1986 = vmatprep.subr.bf16.mxu0 0
    %1987 = vmatpush1.bf16.xpose.msra.mxu0 0
    %1988 = vmatprep.subr.bf16.mxu0 0
    %1989 = vmatpush1.bf16.xpose.msra.mxu0 0
    %1990 = vmatprep.subr.bf16.mxu0 0
    %1991 = vmatpush1.bf16.xpose.msra.mxu0 0
    %1992 = vmatprep.subr.bf16.mxu0 0
    %1993 = vmatpush1.bf16.xpose.msra.mxu0 0
    %1994 = vmatprep.subr.bf16.mxu0 0
    %1995 = vmatpush1.bf16.xpose.msra.mxu0 0
    %1996 = vmatprep.subr.bf16.mxu0 0
    %1997 = vmatpush1.bf16.xpose.msra.mxu0 0
    %1998 = vmatprep.subr.bf16.mxu0 0
    %1999 = vmatpush1.bf16.xpose.msra.mxu0 0
    %2000 = vmatprep.subr.bf16.mxu0 0
    %2001 = vmatpush1.bf16.xpose.msra.mxu0 0
    %2002 = vmatprep.subr.bf16.mxu0 0
    %2003 = vmatpush1.bf16.xpose.msra.mxu0 0
    %2004 = vmatprep.subr.bf16.mxu0 0
    %2005 = vmatpush1.bf16.xpose.msra.mxu0 0
    %2006 = vmatprep.mubr.bf16.mxu0 0
    %2007 = vmatmul.mubr.bf16.gmra.mrb[0].mxu0 %v1969
    %v2008 = vpop.f32.mrb[0].mxu0
    %v2009 = vadd.f32 0.0, %v2008
    %v2010 = vpop.f32.mrb[0].mxu0
    %v2011 = vpop.f32.mrb[0].mxu0
    %v2012 = vpop.f32.mrb[0].mxu0
    %2013 = vdwg.mxu0
    %v2014 = vrot.slane %v893, 4
    %v2015 = vrot.slane %v909, 4
    %v2017 = vsel %vm934, %v2014, 0
    %v2020 = vsel %vm934, %v2015, 0
    %2022 = vmatprep.subr.bf16.mxu0 0
    %2023 = vmatpush1.bf16.xpose.msra.mxu0 %v2020
    %2024 = vmatprep.subr.bf16.mxu0 0
    %2025 = vmatpush1.bf16.xpose.msra.mxu0 0
    %2026 = vmatprep.subr.bf16.mxu0 0
    %2027 = vmatpush1.bf16.xpose.msra.mxu0 0
    %2028 = vmatprep.subr.bf16.mxu0 0
    %2029 = vmatpush1.bf16.xpose.msra.mxu0 0
    %2030 = vmatprep.subr.bf16.mxu0 0
    %2031 = vmatpush1.bf16.xpose.msra.mxu0 0
    %2032 = vmatprep.subr.bf16.mxu0 0
    %2033 = vmatpush1.bf16.xpose.msra.mxu0 0
    %2034 = vmatprep.subr.bf16.mxu0 0
    %2035 = vmatpush1.bf16.xpose.msra.mxu0 0
    %2036 = vmatprep.subr.bf16.mxu0 0
    %2037 = vmatpush1.bf16.xpose.msra.mxu0 0
    %2038 = vmatprep.subr.bf16.mxu0 0
    %2039 = vmatpush1.bf16.xpose.msra.mxu0 0
    %2040 = vmatprep.subr.bf16.mxu0 0
    %2041 = vmatpush1.bf16.xpose.msra.mxu0 0
    %2042 = vmatprep.subr.bf16.mxu0 0
    %2043 = vmatpush1.bf16.xpose.msra.mxu0 0
    %2044 = vmatprep.subr.bf16.mxu0 0
    %2045 = vmatpush1.bf16.xpose.msra.mxu0 0
    %2046 = vmatprep.subr.bf16.mxu0 0
    %2047 = vmatpush1.bf16.xpose.msra.mxu0 0
    %2048 = vmatprep.subr.bf16.mxu0 0
    %2049 = vmatpush1.bf16.xpose.msra.mxu0 0
    %2050 = vmatprep.subr.bf16.mxu0 0
    %2051 = vmatpush1.bf16.xpose.msra.mxu0 0
    %2052 = vmatprep.subr.bf16.mxu0 0
    %2053 = vmatpush1.bf16.xpose.msra.mxu0 0
    %2054 = vmatprep.mubr.bf16.mxu0 0
    %2055 = vmatmul.mubr.bf16.gmra.mrb[0].mxu0 %v2017
    %v2056 = vpop.f32.mrb[0].mxu0
    %v2057 = vadd.f32 0.0, %v2056
    %v2058 = vpop.f32.mrb[0].mxu0
    %v2059 = vpop.f32.mrb[0].mxu0
    %v2060 = vpop.f32.mrb[0].mxu0
    %2061 = vdwg.mxu0
    %v2062 = vmul.f32 %v1913, 0.125
    %v2063 = vmul.f32 %v1961, 0.125
    %v2064 = vmul.f32 %v2009, 0.125
    %v2065 = vmul.f32 %v2057, 0.125
    %v2066 = vsel %vm1143, -1e+30, %v2062
    %v2067 = vsel %vm1144, -1e+30, %v2063
    %v2068 = vsel %vm1145, -1e+30, %v2064
    %v2069 = vsel %vm1146, -1e+30, %v2065
    %v2070 = vsel %vm1151, %v2066, -inf
    %2071 = vmax.xlane.f32.xlu0 %v2070
    %v2072 = vpop.xlane.xlu0 %2071
    %v2073 = vsel %vm1151, %v2067, -inf
    %2074 = vmax.xlane.f32.xlu0 %v2073
    %v2075 = vpop.xlane.xlu0 %2074
    %v2076 = vsel %vm1151, %v2068, -inf
    %2077 = vmax.xlane.f32.xlu0 %v2076
    %v2078 = vpop.xlane.xlu0 %2077
    %v2079 = vsel %vm1151, %v2069, -inf
    %2080 = vmax.xlane.f32.xlu0 %v2079
    %v2081 = vpop.xlane.xlu0 %2080
    %v2082 = vsub.f32 %v2066, %v2072
    %v2083 = vsub.f32 %v2067, %v2075
    %v2084 = vsub.f32 %v2068, %v2078
    %v2085 = vsub.f32 %v2069, %v2081
    %v2086 = vmul.f32 %v2082, 1.442695
    %v2087 = vpow.pop %v2086
    %v2088 = vmul.f32 %v2083, 1.442695
    %v2089 = vpow.pop %v2088
    %v2090 = vmul.f32 %v2084, 1.442695
    %v2091 = vpow.pop %v2090
    %v2092 = vmul.f32 %v2085, 1.442695
    %v2093 = vpow.pop %v2092
    %v2094 = vsel %vm1151, %v2087, 0.0
    %2095 = vadd.xlane.f32.xlu0 %v2094
    %v2096 = vpop.xlane.xlu0 %2095
    %v2097 = vsel %vm1151, %v2089, 0.0
    %2098 = vadd.xlane.f32.xlu0 %v2097
    %v2099 = vpop.xlane.xlu0 %2098
    %v2100 = vsel %vm1151, %v2091, 0.0
    %2101 = vadd.xlane.f32.xlu0 %v2100
    %v2102 = vpop.xlane.xlu0 %2101
    %v2103 = vsel %vm1151, %v2093, 0.0
    %2104 = vadd.xlane.f32.xlu0 %v2103
    %v2105 = vpop.xlane.xlu0 %2104
    %v2106 = vrcp.pop %v2096
    %v2107 = vrcp.pop %v2099
    %v2108 = vrcp.pop %v2102
    %v2109 = vrcp.pop %v2105
    %v2110 = vmul.f32 %v2087, %v2106
    %v2111 = vmul.f32 %v2089, %v2107
    %v2112 = vmul.f32 %v2091, %v2108
    %v2113 = vmul.f32 %v2093, %v2109
    %v2114 = vpack.c.bf16 %v2110, %v2110
    %v2115 = vpack.c.bf16 %v2111, %v2111
    %v2116 = vpack.c.bf16 %v2112, %v2112
    %v2117 = vpack.c.bf16 %v2113, %v2113
    %v2118 = vrot.slane %v922, 4
    %v2120 = vsel %vm1151, %v2114, 0
    %v2123 = vsel %vm1203, %v2118, 0
    %2125 = vmatprep.subr.bf16.mxu0 0
    %2126 = vmatpush1.bf16.msra.mxu0 %v2123
    %2127 = vmatprep.subr.bf16.mxu0 0
    %2128 = vmatpush1.bf16.msra.mxu0 0
    %2129 = vmatprep.subr.bf16.mxu0 0
    %2130 = vmatpush1.bf16.msra.mxu0 0
    %2131 = vmatprep.subr.bf16.mxu0 0
    %2132 = vmatpush1.bf16.msra.mxu0 0
    %2133 = vmatprep.subr.bf16.mxu0 0
    %2134 = vmatpush1.bf16.msra.mxu0 0
    %2135 = vmatprep.subr.bf16.mxu0 0
    %2136 = vmatpush1.bf16.msra.mxu0 0
    %2137 = vmatprep.subr.bf16.mxu0 0
    %2138 = vmatpush1.bf16.msra.mxu0 0
    %2139 = vmatprep.subr.bf16.mxu0 0
    %2140 = vmatpush1.bf16.msra.mxu0 0
    %2141 = vmatprep.subr.bf16.mxu0 0
    %2142 = vmatpush1.bf16.msra.mxu0 0
    %2143 = vmatprep.subr.bf16.mxu0 0
    %2144 = vmatpush1.bf16.msra.mxu0 0
    %2145 = vmatprep.subr.bf16.mxu0 0
    %2146 = vmatpush1.bf16.msra.mxu0 0
    %2147 = vmatprep.subr.bf16.mxu0 0
    %2148 = vmatpush1.bf16.msra.mxu0 0
    %2149 = vmatprep.subr.bf16.mxu0 0
    %2150 = vmatpush1.bf16.msra.mxu0 0
    %2151 = vmatprep.subr.bf16.mxu0 0
    %2152 = vmatpush1.bf16.msra.mxu0 0
    %2153 = vmatprep.subr.bf16.mxu0 0
    %2154 = vmatpush1.bf16.msra.mxu0 0
    %2155 = vmatprep.subr.bf16.mxu0 0
    %2156 = vmatpush1.bf16.msra.mxu0 0
    %2157 = vmatprep.mubr.bf16.mxu0 0
    %2158 = vmatmul.mubr.bf16.gmra.mrb[0].mxu0 %v2120
    %v2159 = vpop.f32.mrb[0].mxu0
    %v2160 = vadd.f32 0.0, %v2159
    %v2161 = vpop.f32.mrb[0].mxu0
    %v2162 = vpop.f32.mrb[0].mxu0
    %v2163 = vpop.f32.mrb[0].mxu0
    %2164 = vdwg.mxu0
    %v2165 = vrot.slane %v923, 4
    %v2167 = vsel %vm1151, %v2115, 0
    %v2170 = vsel %vm1203, %v2165, 0
    %2172 = vmatprep.subr.bf16.mxu0 0
    %2173 = vmatpush1.bf16.msra.mxu0 %v2170
    %2174 = vmatprep.subr.bf16.mxu0 0
    %2175 = vmatpush1.bf16.msra.mxu0 0
    %2176 = vmatprep.subr.bf16.mxu0 0
    %2177 = vmatpush1.bf16.msra.mxu0 0
    %2178 = vmatprep.subr.bf16.mxu0 0
    %2179 = vmatpush1.bf16.msra.mxu0 0
    %2180 = vmatprep.subr.bf16.mxu0 0
    %2181 = vmatpush1.bf16.msra.mxu0 0
    %2182 = vmatprep.subr.bf16.mxu0 0
    %2183 = vmatpush1.bf16.msra.mxu0 0
    %2184 = vmatprep.subr.bf16.mxu0 0
    %2185 = vmatpush1.bf16.msra.mxu0 0
    %2186 = vmatprep.subr.bf16.mxu0 0
    %2187 = vmatpush1.bf16.msra.mxu0 0
    %2188 = vmatprep.subr.bf16.mxu0 0
    %2189 = vmatpush1.bf16.msra.mxu0 0
    %2190 = vmatprep.subr.bf16.mxu0 0
    %2191 = vmatpush1.bf16.msra.mxu0 0
    %2192 = vmatprep.subr.bf16.mxu0 0
    %2193 = vmatpush1.bf16.msra.mxu0 0
    %2194 = vmatprep.subr.bf16.mxu0 0
    %2195 = vmatpush1.bf16.msra.mxu0 0
    %2196 = vmatprep.subr.bf16.mxu0 0
    %2197 = vmatpush1.bf16.msra.mxu0 0
    %2198 = vmatprep.subr.bf16.mxu0 0
    %2199 = vmatpush1.bf16.msra.mxu0 0
    %2200 = vmatprep.subr.bf16.mxu0 0
    %2201 = vmatpush1.bf16.msra.mxu0 0
    %2202 = vmatprep.subr.bf16.mxu0 0
    %2203 = vmatpush1.bf16.msra.mxu0 0
    %2204 = vmatprep.mubr.bf16.mxu0 0
    %2205 = vmatmul.mubr.bf16.gmra.mrb[0].mxu0 %v2167
    %v2206 = vpop.f32.mrb[0].mxu0
    %v2207 = vadd.f32 0.0, %v2206
    %v2208 = vpop.f32.mrb[0].mxu0
    %v2209 = vpop.f32.mrb[0].mxu0
    %v2210 = vpop.f32.mrb[0].mxu0
    %2211 = vdwg.mxu0
    %v2212 = vrot.slane %v924, 4
    %v2214 = vsel %vm1151, %v2116, 0
    %v2217 = vsel %vm1203, %v2212, 0
    %2219 = vmatprep.subr.bf16.mxu0 0
    %2220 = vmatpush1.bf16.msra.mxu0 %v2217
    %2221 = vmatprep.subr.bf16.mxu0 0
    %2222 = vmatpush1.bf16.msra.mxu0 0
    %2223 = vmatprep.subr.bf16.mxu0 0
    %2224 = vmatpush1.bf16.msra.mxu0 0
    %2225 = vmatprep.subr.bf16.mxu0 0
    %2226 = vmatpush1.bf16.msra.mxu0 0
    %2227 = vmatprep.subr.bf16.mxu0 0
    %2228 = vmatpush1.bf16.msra.mxu0 0
    %2229 = vmatprep.subr.bf16.mxu0 0
    %2230 = vmatpush1.bf16.msra.mxu0 0
    %2231 = vmatprep.subr.bf16.mxu0 0
    %2232 = vmatpush1.bf16.msra.mxu0 0
    %2233 = vmatprep.subr.bf16.mxu0 0
    %2234 = vmatpush1.bf16.msra.mxu0 0
    %2235 = vmatprep.subr.bf16.mxu0 0
    %2236 = vmatpush1.bf16.msra.mxu0 0
    %2237 = vmatprep.subr.bf16.mxu0 0
    %2238 = vmatpush1.bf16.msra.mxu0 0
    %2239 = vmatprep.subr.bf16.mxu0 0
    %2240 = vmatpush1.bf16.msra.mxu0 0
    %2241 = vmatprep.subr.bf16.mxu0 0
    %2242 = vmatpush1.bf16.msra.mxu0 0
    %2243 = vmatprep.subr.bf16.mxu0 0
    %2244 = vmatpush1.bf16.msra.mxu0 0
    %2245 = vmatprep.subr.bf16.mxu0 0
    %2246 = vmatpush1.bf16.msra.mxu0 0
    %2247 = vmatprep.subr.bf16.mxu0 0
    %2248 = vmatpush1.bf16.msra.mxu0 0
    %2249 = vmatprep.subr.bf16.mxu0 0
    %2250 = vmatpush1.bf16.msra.mxu0 0
    %2251 = vmatprep.mubr.bf16.mxu0 0
    %2252 = vmatmul.mubr.bf16.gmra.mrb[0].mxu0 %v2214
    %v2253 = vpop.f32.mrb[0].mxu0
    %v2254 = vadd.f32 0.0, %v2253
    %v2255 = vpop.f32.mrb[0].mxu0
    %v2256 = vpop.f32.mrb[0].mxu0
    %v2257 = vpop.f32.mrb[0].mxu0
    %2258 = vdwg.mxu0
    %v2259 = vrot.slane %v925, 4
    %v2261 = vsel %vm1151, %v2117, 0
    %v2264 = vsel %vm1203, %v2259, 0
    %2266 = vmatprep.subr.bf16.mxu0 0
    %2267 = vmatpush1.bf16.msra.mxu0 %v2264
    %2268 = vmatprep.subr.bf16.mxu0 0
    %2269 = vmatpush1.bf16.msra.mxu0 0
    %2270 = vmatprep.subr.bf16.mxu0 0
    %2271 = vmatpush1.bf16.msra.mxu0 0
    %2272 = vmatprep.subr.bf16.mxu0 0
    %2273 = vmatpush1.bf16.msra.mxu0 0
    %2274 = vmatprep.subr.bf16.mxu0 0
    %2275 = vmatpush1.bf16.msra.mxu0 0
    %2276 = vmatprep.subr.bf16.mxu0 0
    %2277 = vmatpush1.bf16.msra.mxu0 0
    %2278 = vmatprep.subr.bf16.mxu0 0
    %2279 = vmatpush1.bf16.msra.mxu0 0
    %2280 = vmatprep.subr.bf16.mxu0 0
    %2281 = vmatpush1.bf16.msra.mxu0 0
    %2282 = vmatprep.subr.bf16.mxu0 0
    %2283 = vmatpush1.bf16.msra.mxu0 0
    %2284 = vmatprep.subr.bf16.mxu0 0
    %2285 = vmatpush1.bf16.msra.mxu0 0
    %2286 = vmatprep.subr.bf16.mxu0 0
    %2287 = vmatpush1.bf16.msra.mxu0 0
    %2288 = vmatprep.subr.bf16.mxu0 0
    %2289 = vmatpush1.bf16.msra.mxu0 0
    %2290 = vmatprep.subr.bf16.mxu0 0
    %2291 = vmatpush1.bf16.msra.mxu0 0
    %2292 = vmatprep.subr.bf16.mxu0 0
    %2293 = vmatpush1.bf16.msra.mxu0 0
    %2294 = vmatprep.subr.bf16.mxu0 0
    %2295 = vmatpush1.bf16.msra.mxu0 0
    %2296 = vmatprep.subr.bf16.mxu0 0
    %2297 = vmatpush1.bf16.msra.mxu0 0
    %2298 = vmatprep.mubr.bf16.mxu0 0
    %2299 = vmatmul.mubr.bf16.gmra.mrb[0].mxu0 %v2261
    %v2300 = vpop.f32.mrb[0].mxu0
    %v2301 = vadd.f32 0.0, %v2300
    %v2302 = vpop.f32.mrb[0].mxu0
    %v2303 = vpop.f32.mrb[0].mxu0
    %v2304 = vpop.f32.mrb[0].mxu0
    %2305 = vdwg.mxu0
    %2306 = vst.msk [vmem:[#allocation2 + $0x8] sm:$0xff] %vm934, %v2160
    %2307 = vst.msk [vmem:[#allocation2 + $0x18] sm:$0xff] %vm934, %v2207
    %2308 = vst.msk [vmem:[#allocation2 + $0x28] sm:$0xff] %vm934, %v2254
    %2309 = vst.msk [vmem:[#allocation2 + $0x38] sm:$0xff] %vm934, %v2301
    %2310 = vrot.lane.b32.xlu0 %v890, 64
    %v2311 = vpop.permute.xlu0 %2310
    %v2312 = vrot.slane %v2311, 4
    %2313 = vrot.lane.b32.xlu0 %v906, 64
    %v2314 = vpop.permute.xlu0 %2313
    %v2315 = vrot.slane %v2314, 4
    %v2317 = vsel %vm934, %v2312, 0
    %v2320 = vsel %vm934, %v2315, 0
    %2322 = vmatprep.subr.bf16.mxu0 0
    %2323 = vmatpush1.bf16.xpose.msra.mxu0 %v2320
    %2324 = vmatprep.subr.bf16.mxu0 0
    %2325 = vmatpush1.bf16.xpose.msra.mxu0 0
    %2326 = vmatprep.subr.bf16.mxu0 0
    %2327 = vmatpush1.bf16.xpose.msra.mxu0 0
    %2328 = vmatprep.subr.bf16.mxu0 0
    %2329 = vmatpush1.bf16.xpose.msra.mxu0 0
    %2330 = vmatprep.subr.bf16.mxu0 0
    %2331 = vmatpush1.bf16.xpose.msra.mxu0 0
    %2332 = vmatprep.subr.bf16.mxu0 0
    %2333 = vmatpush1.bf16.xpose.msra.mxu0 0
    %2334 = vmatprep.subr.bf16.mxu0 0
    %2335 = vmatpush1.bf16.xpose.msra.mxu0 0
    %2336 = vmatprep.subr.bf16.mxu0 0
    %2337 = vmatpush1.bf16.xpose.msra.mxu0 0
    %2338 = vmatprep.subr.bf16.mxu0 0
    %2339 = vmatpush1.bf16.xpose.msra.mxu0 0
    %2340 = vmatprep.subr.bf16.mxu0 0
    %2341 = vmatpush1.bf16.xpose.msra.mxu0 0
    %2342 = vmatprep.subr.bf16.mxu0 0
    %2343 = vmatpush1.bf16.xpose.msra.mxu0 0
    %2344 = vmatprep.subr.bf16.mxu0 0
    %2345 = vmatpush1.bf16.xpose.msra.mxu0 0
    %2346 = vmatprep.subr.bf16.mxu0 0
    %2347 = vmatpush1.bf16.xpose.msra.mxu0 0
    %2348 = vmatprep.subr.bf16.mxu0 0
    %2349 = vmatpush1.bf16.xpose.msra.mxu0 0
    %2350 = vmatprep.subr.bf16.mxu0 0
    %2351 = vmatpush1.bf16.xpose.msra.mxu0 0
    %2352 = vmatprep.subr.bf16.mxu0 0
    %2353 = vmatpush1.bf16.xpose.msra.mxu0 0
    %2354 = vmatprep.mubr.bf16.mxu0 0
    %2355 = vmatmul.mubr.bf16.gmra.mrb[0].mxu0 %v2317
    %v2356 = vpop.f32.mrb[0].mxu0
    %v2357 = vadd.f32 0.0, %v2356
    %v2358 = vpop.f32.mrb[0].mxu0
    %v2359 = vpop.f32.mrb[0].mxu0
    %v2360 = vpop.f32.mrb[0].mxu0
    %2361 = vdwg.mxu0
    %2362 = vrot.lane.b32.xlu0 %v891, 64
    %v2363 = vpop.permute.xlu0 %2362
    %v2364 = vrot.slane %v2363, 4
    %2365 = vrot.lane.b32.xlu0 %v907, 64
    %v2366 = vpop.permute.xlu0 %2365
    %v2367 = vrot.slane %v2366, 4
    %v2369 = vsel %vm934, %v2364, 0
    %v2372 = vsel %vm934, %v2367, 0
    %2374 = vmatprep.subr.bf16.mxu0 0
    %2375 = vmatpush1.bf16.xpose.msra.mxu0 %v2372
    %2376 = vmatprep.subr.bf16.mxu0 0
    %2377 = vmatpush1.bf16.xpose.msra.mxu0 0
    %2378 = vmatprep.subr.bf16.mxu0 0
    %2379 = vmatpush1.bf16.xpose.msra.mxu0 0
    %2380 = vmatprep.subr.bf16.mxu0 0
    %2381 = vmatpush1.bf16.xpose.msra.mxu0 0
    %2382 = vmatprep.subr.bf16.mxu0 0
    %2383 = vmatpush1.bf16.xpose.msra.mxu0 0
    %2384 = vmatprep.subr.bf16.mxu0 0
    %2385 = vmatpush1.bf16.xpose.msra.mxu0 0
    %2386 = vmatprep.subr.bf16.mxu0 0
    %2387 = vmatpush1.bf16.xpose.msra.mxu0 0
    %2388 = vmatprep.subr.bf16.mxu0 0
    %2389 = vmatpush1.bf16.xpose.msra.mxu0 0
    %2390 = vmatprep.subr.bf16.mxu0 0
    %2391 = vmatpush1.bf16.xpose.msra.mxu0 0
    %2392 = vmatprep.subr.bf16.mxu0 0
    %2393 = vmatpush1.bf16.xpose.msra.mxu0 0
    %2394 = vmatprep.subr.bf16.mxu0 0
    %2395 = vmatpush1.bf16.xpose.msra.mxu0 0
    %2396 = vmatprep.subr.bf16.mxu0 0
    %2397 = vmatpush1.bf16.xpose.msra.mxu0 0
    %2398 = vmatprep.subr.bf16.mxu0 0
    %2399 = vmatpush1.bf16.xpose.msra.mxu0 0
    %2400 = vmatprep.subr.bf16.mxu0 0
    %2401 = vmatpush1.bf16.xpose.msra.mxu0 0
    %2402 = vmatprep.subr.bf16.mxu0 0
    %2403 = vmatpush1.bf16.xpose.msra.mxu0 0
    %2404 = vmatprep.subr.bf16.mxu0 0
    %2405 = vmatpush1.bf16.xpose.msra.mxu0 0
    %2406 = vmatprep.mubr.bf16.mxu0 0
    %2407 = vmatmul.mubr.bf16.gmra.mrb[0].mxu0 %v2369
    %v2408 = vpop.f32.mrb[0].mxu0
    %v2409 = vadd.f32 0.0, %v2408
    %v2410 = vpop.f32.mrb[0].mxu0
    %v2411 = vpop.f32.mrb[0].mxu0
    %v2412 = vpop.f32.mrb[0].mxu0
    %2413 = vdwg.mxu0
    %2414 = vrot.lane.b32.xlu0 %v892, 64
    %v2415 = vpop.permute.xlu0 %2414
    %v2416 = vrot.slane %v2415, 4
    %2417 = vrot.lane.b32.xlu0 %v908, 64
    %v2418 = vpop.permute.xlu0 %2417
    %v2419 = vrot.slane %v2418, 4
    %v2421 = vsel %vm934, %v2416, 0
    %v2424 = vsel %vm934, %v2419, 0
    %2426 = vmatprep.subr.bf16.mxu0 0
    %2427 = vmatpush1.bf16.xpose.msra.mxu0 %v2424
    %2428 = vmatprep.subr.bf16.mxu0 0
    %2429 = vmatpush1.bf16.xpose.msra.mxu0 0
    %2430 = vmatprep.subr.bf16.mxu0 0
    %2431 = vmatpush1.bf16.xpose.msra.mxu0 0
    %2432 = vmatprep.subr.bf16.mxu0 0
    %2433 = vmatpush1.bf16.xpose.msra.mxu0 0
    %2434 = vmatprep.subr.bf16.mxu0 0
    %2435 = vmatpush1.bf16.xpose.msra.mxu0 0
    %2436 = vmatprep.subr.bf16.mxu0 0
    %2437 = vmatpush1.bf16.xpose.msra.mxu0 0
    %2438 = vmatprep.subr.bf16.mxu0 0
    %2439 = vmatpush1.bf16.xpose.msra.mxu0 0
    %2440 = vmatprep.subr.bf16.mxu0 0
    %2441 = vmatpush1.bf16.xpose.msra.mxu0 0
    %2442 = vmatprep.subr.bf16.mxu0 0
    %2443 = vmatpush1.bf16.xpose.msra.mxu0 0
    %2444 = vmatprep.subr.bf16.mxu0 0
    %2445 = vmatpush1.bf16.xpose.msra.mxu0 0
    %2446 = vmatprep.subr.bf16.mxu0 0
    %2447 = vmatpush1.bf16.xpose.msra.mxu0 0
    %2448 = vmatprep.subr.bf16.mxu0 0
    %2449 = vmatpush1.bf16.xpose.msra.mxu0 0
    %2450 = vmatprep.subr.bf16.mxu0 0
    %2451 = vmatpush1.bf16.xpose.msra.mxu0 0
    %2452 = vmatprep.subr.bf16.mxu0 0
    %2453 = vmatpush1.bf16.xpose.msra.mxu0 0
    %2454 = vmatprep.subr.bf16.mxu0 0
    %2455 = vmatpush1.bf16.xpose.msra.mxu0 0
    %2456 = vmatprep.subr.bf16.mxu0 0
    %2457 = vmatpush1.bf16.xpose.msra.mxu0 0
    %2458 = vmatprep.mubr.bf16.mxu0 0
    %2459 = vmatmul.mubr.bf16.gmra.mrb[0].mxu0 %v2421
    %v2460 = vpop.f32.mrb[0].mxu0
    %v2461 = vadd.f32 0.0, %v2460
    %v2462 = vpop.f32.mrb[0].mxu0
    %v2463 = vpop.f32.mrb[0].mxu0
    %v2464 = vpop.f32.mrb[0].mxu0
    %2465 = vdwg.mxu0
    %2466 = vrot.lane.b32.xlu0 %v893, 64
    %v2467 = vpop.permute.xlu0 %2466
    %v2468 = vrot.slane %v2467, 4
    %2469 = vrot.lane.b32.xlu0 %v909, 64
    %v2470 = vpop.permute.xlu0 %2469
    %v2471 = vrot.slane %v2470, 4
    %v2473 = vsel %vm934, %v2468, 0
    %v2476 = vsel %vm934, %v2471, 0
    %2478 = vmatprep.subr.bf16.mxu0 0
    %2479 = vmatpush1.bf16.xpose.msra.mxu0 %v2476
    %2480 = vmatprep.subr.bf16.mxu0 0
    %2481 = vmatpush1.bf16.xpose.msra.mxu0 0
    %2482 = vmatprep.subr.bf16.mxu0 0
    %2483 = vmatpush1.bf16.xpose.msra.mxu0 0
    %2484 = vmatprep.subr.bf16.mxu0 0
    %2485 = vmatpush1.bf16.xpose.msra.mxu0 0
    %2486 = vmatprep.subr.bf16.mxu0 0
    %2487 = vmatpush1.bf16.xpose.msra.mxu0 0
    %2488 = vmatprep.subr.bf16.mxu0 0
    %2489 = vmatpush1.bf16.xpose.msra.mxu0 0
    %2490 = vmatprep.subr.bf16.mxu0 0
    %2491 = vmatpush1.bf16.xpose.msra.mxu0 0
    %2492 = vmatprep.subr.bf16.mxu0 0
    %2493 = vmatpush1.bf16.xpose.msra.mxu0 0
    %2494 = vmatprep.subr.bf16.mxu0 0
    %2495 = vmatpush1.bf16.xpose.msra.mxu0 0
    %2496 = vmatprep.subr.bf16.mxu0 0
    %2497 = vmatpush1.bf16.xpose.msra.mxu0 0
    %2498 = vmatprep.subr.bf16.mxu0 0
    %2499 = vmatpush1.bf16.xpose.msra.mxu0 0
    %2500 = vmatprep.subr.bf16.mxu0 0
    %2501 = vmatpush1.bf16.xpose.msra.mxu0 0
    %2502 = vmatprep.subr.bf16.mxu0 0
    %2503 = vmatpush1.bf16.xpose.msra.mxu0 0
    %2504 = vmatprep.subr.bf16.mxu0 0
    %2505 = vmatpush1.bf16.xpose.msra.mxu0 0
    %2506 = vmatprep.subr.bf16.mxu0 0
    %2507 = vmatpush1.bf16.xpose.msra.mxu0 0
    %2508 = vmatprep.subr.bf16.mxu0 0
    %2509 = vmatpush1.bf16.xpose.msra.mxu0 0
    %2510 = vmatprep.mubr.bf16.mxu0 0
    %2511 = vmatmul.mubr.bf16.gmra.mrb[0].mxu0 %v2473
    %v2512 = vpop.f32.mrb[0].mxu0
    %v2513 = vadd.f32 0.0, %v2512
    %v2514 = vpop.f32.mrb[0].mxu0
    %v2515 = vpop.f32.mrb[0].mxu0
    %v2516 = vpop.f32.mrb[0].mxu0
    %2517 = vdwg.mxu0
    %v2518 = vmul.f32 %v2357, 0.125
    %v2519 = vmul.f32 %v2409, 0.125
    %v2520 = vmul.f32 %v2461, 0.125
    %v2521 = vmul.f32 %v2513, 0.125
    %v2522 = vsel %vm1143, -1e+30, %v2518
    %v2523 = vsel %vm1144, -1e+30, %v2519
    %v2524 = vsel %vm1145, -1e+30, %v2520
    %v2525 = vsel %vm1146, -1e+30, %v2521
    %v2526 = vsel %vm1151, %v2522, -inf
    %2527 = vmax.xlane.f32.xlu0 %v2526
    %v2528 = vpop.xlane.xlu0 %2527
    %v2529 = vsel %vm1151, %v2523, -inf
    %2530 = vmax.xlane.f32.xlu0 %v2529
    %v2531 = vpop.xlane.xlu0 %2530
    %v2532 = vsel %vm1151, %v2524, -inf
    %2533 = vmax.xlane.f32.xlu0 %v2532
    %v2534 = vpop.xlane.xlu0 %2533
    %v2535 = vsel %vm1151, %v2525, -inf
    %2536 = vmax.xlane.f32.xlu0 %v2535
    %v2537 = vpop.xlane.xlu0 %2536
    %v2538 = vsub.f32 %v2522, %v2528
    %v2539 = vsub.f32 %v2523, %v2531
    %v2540 = vsub.f32 %v2524, %v2534
    %v2541 = vsub.f32 %v2525, %v2537
    %v2542 = vmul.f32 %v2538, 1.442695
    %v2543 = vpow.pop %v2542
    %v2544 = vmul.f32 %v2539, 1.442695
    %v2545 = vpow.pop %v2544
    %v2546 = vmul.f32 %v2540, 1.442695
    %v2547 = vpow.pop %v2546
    %v2548 = vmul.f32 %v2541, 1.442695
    %v2549 = vpow.pop %v2548
    %v2550 = vsel %vm1151, %v2543, 0.0
    %2551 = vadd.xlane.f32.xlu0 %v2550
    %v2552 = vpop.xlane.xlu0 %2551
    %v2553 = vsel %vm1151, %v2545, 0.0
    %2554 = vadd.xlane.f32.xlu0 %v2553
    %v2555 = vpop.xlane.xlu0 %2554
    %v2556 = vsel %vm1151, %v2547, 0.0
    %2557 = vadd.xlane.f32.xlu0 %v2556
    %v2558 = vpop.xlane.xlu0 %2557
    %v2559 = vsel %vm1151, %v2549, 0.0
    %2560 = vadd.xlane.f32.xlu0 %v2559
    %v2561 = vpop.xlane.xlu0 %2560
    %v2562 = vrcp.pop %v2552
    %v2563 = vrcp.pop %v2555
    %v2564 = vrcp.pop %v2558
    %v2565 = vrcp.pop %v2561
    %v2566 = vmul.f32 %v2543, %v2562
    %v2567 = vmul.f32 %v2545, %v2563
    %v2568 = vmul.f32 %v2547, %v2564
    %v2569 = vmul.f32 %v2549, %v2565
    %v2570 = vpack.c.bf16 %v2566, %v2566
    %v2571 = vpack.c.bf16 %v2567, %v2567
    %v2572 = vpack.c.bf16 %v2568, %v2568
    %v2573 = vpack.c.bf16 %v2569, %v2569
    %2574 = vrot.lane.b32.xlu0 %v922, 64
    %v2575 = vpop.permute.xlu0 %2574
    %v2576 = vrot.slane %v2575, 4
    %v2578 = vsel %vm1151, %v2570, 0
    %v2581 = vsel %vm1203, %v2576, 0
    %2583 = vmatprep.subr.bf16.mxu0 0
    %2584 = vmatpush1.bf16.msra.mxu0 %v2581
    %2585 = vmatprep.subr.bf16.mxu0 0
    %2586 = vmatpush1.bf16.msra.mxu0 0
    %2587 = vmatprep.subr.bf16.mxu0 0
    %2588 = vmatpush1.bf16.msra.mxu0 0
    %2589 = vmatprep.subr.bf16.mxu0 0
    %2590 = vmatpush1.bf16.msra.mxu0 0
    %2591 = vmatprep.subr.bf16.mxu0 0
    %2592 = vmatpush1.bf16.msra.mxu0 0
    %2593 = vmatprep.subr.bf16.mxu0 0
    %2594 = vmatpush1.bf16.msra.mxu0 0
    %2595 = vmatprep.subr.bf16.mxu0 0
    %2596 = vmatpush1.bf16.msra.mxu0 0
    %2597 = vmatprep.subr.bf16.mxu0 0
    %2598 = vmatpush1.bf16.msra.mxu0 0
    %2599 = vmatprep.subr.bf16.mxu0 0
    %2600 = vmatpush1.bf16.msra.mxu0 0
    %2601 = vmatprep.subr.bf16.mxu0 0
    %2602 = vmatpush1.bf16.msra.mxu0 0
    %2603 = vmatprep.subr.bf16.mxu0 0
    %2604 = vmatpush1.bf16.msra.mxu0 0
    %2605 = vmatprep.subr.bf16.mxu0 0
    %2606 = vmatpush1.bf16.msra.mxu0 0
    %2607 = vmatprep.subr.bf16.mxu0 0
    %2608 = vmatpush1.bf16.msra.mxu0 0
    %2609 = vmatprep.subr.bf16.mxu0 0
    %2610 = vmatpush1.bf16.msra.mxu0 0
    %2611 = vmatprep.subr.bf16.mxu0 0
    %2612 = vmatpush1.bf16.msra.mxu0 0
    %2613 = vmatprep.subr.bf16.mxu0 0
    %2614 = vmatpush1.bf16.msra.mxu0 0
    %2615 = vmatprep.mubr.bf16.mxu0 0
    %2616 = vmatmul.mubr.bf16.gmra.mrb[0].mxu0 %v2578
    %v2617 = vpop.f32.mrb[0].mxu0
    %v2618 = vadd.f32 0.0, %v2617
    %v2619 = vpop.f32.mrb[0].mxu0
    %v2620 = vpop.f32.mrb[0].mxu0
    %v2621 = vpop.f32.mrb[0].mxu0
    %2622 = vdwg.mxu0
    %2623 = vrot.lane.b32.xlu0 %v923, 64
    %v2624 = vpop.permute.xlu0 %2623
    %v2625 = vrot.slane %v2624, 4
    %v2627 = vsel %vm1151, %v2571, 0
    %v2630 = vsel %vm1203, %v2625, 0
    %2632 = vmatprep.subr.bf16.mxu0 0
    %2633 = vmatpush1.bf16.msra.mxu0 %v2630
    %2634 = vmatprep.subr.bf16.mxu0 0
    %2635 = vmatpush1.bf16.msra.mxu0 0
    %2636 = vmatprep.subr.bf16.mxu0 0
    %2637 = vmatpush1.bf16.msra.mxu0 0
    %2638 = vmatprep.subr.bf16.mxu0 0
    %2639 = vmatpush1.bf16.msra.mxu0 0
    %2640 = vmatprep.subr.bf16.mxu0 0
    %2641 = vmatpush1.bf16.msra.mxu0 0
    %2642 = vmatprep.subr.bf16.mxu0 0
    %2643 = vmatpush1.bf16.msra.mxu0 0
    %2644 = vmatprep.subr.bf16.mxu0 0
    %2645 = vmatpush1.bf16.msra.mxu0 0
    %2646 = vmatprep.subr.bf16.mxu0 0
    %2647 = vmatpush1.bf16.msra.mxu0 0
    %2648 = vmatprep.subr.bf16.mxu0 0
    %2649 = vmatpush1.bf16.msra.mxu0 0
    %2650 = vmatprep.subr.bf16.mxu0 0
    %2651 = vmatpush1.bf16.msra.mxu0 0
    %2652 = vmatprep.subr.bf16.mxu0 0
    %2653 = vmatpush1.bf16.msra.mxu0 0
    %2654 = vmatprep.subr.bf16.mxu0 0
    %2655 = vmatpush1.bf16.msra.mxu0 0
    %2656 = vmatprep.subr.bf16.mxu0 0
    %2657 = vmatpush1.bf16.msra.mxu0 0
    %2658 = vmatprep.subr.bf16.mxu0 0
    %2659 = vmatpush1.bf16.msra.mxu0 0
    %2660 = vmatprep.subr.bf16.mxu0 0
    %2661 = vmatpush1.bf16.msra.mxu0 0
    %2662 = vmatprep.subr.bf16.mxu0 0
    %2663 = vmatpush1.bf16.msra.mxu0 0
    %2664 = vmatprep.mubr.bf16.mxu0 0
    %2665 = vmatmul.mubr.bf16.gmra.mrb[0].mxu0 %v2627
    %v2666 = vpop.f32.mrb[0].mxu0
    %v2667 = vadd.f32 0.0, %v2666
    %v2668 = vpop.f32.mrb[0].mxu0
    %v2669 = vpop.f32.mrb[0].mxu0
    %v2670 = vpop.f32.mrb[0].mxu0
    %2671 = vdwg.mxu0
    %2672 = vrot.lane.b32.xlu0 %v924, 64
    %v2673 = vpop.permute.xlu0 %2672
    %v2674 = vrot.slane %v2673, 4
    %v2676 = vsel %vm1151, %v2572, 0
    %v2679 = vsel %vm1203, %v2674, 0
    %2681 = vmatprep.subr.bf16.mxu0 0
    %2682 = vmatpush1.bf16.msra.mxu0 %v2679
    %2683 = vmatprep.subr.bf16.mxu0 0
    %2684 = vmatpush1.bf16.msra.mxu0 0
    %2685 = vmatprep.subr.bf16.mxu0 0
    %2686 = vmatpush1.bf16.msra.mxu0 0
    %2687 = vmatprep.subr.bf16.mxu0 0
    %2688 = vmatpush1.bf16.msra.mxu0 0
    %2689 = vmatprep.subr.bf16.mxu0 0
    %2690 = vmatpush1.bf16.msra.mxu0 0
    %2691 = vmatprep.subr.bf16.mxu0 0
    %2692 = vmatpush1.bf16.msra.mxu0 0
    %2693 = vmatprep.subr.bf16.mxu0 0
    %2694 = vmatpush1.bf16.msra.mxu0 0
    %2695 = vmatprep.subr.bf16.mxu0 0
    %2696 = vmatpush1.bf16.msra.mxu0 0
    %2697 = vmatprep.subr.bf16.mxu0 0
    %2698 = vmatpush1.bf16.msra.mxu0 0
    %2699 = vmatprep.subr.bf16.mxu0 0
    %2700 = vmatpush1.bf16.msra.mxu0 0
    %2701 = vmatprep.subr.bf16.mxu0 0
    %2702 = vmatpush1.bf16.msra.mxu0 0
    %2703 = vmatprep.subr.bf16.mxu0 0
    %2704 = vmatpush1.bf16.msra.mxu0 0
    %2705 = vmatprep.subr.bf16.mxu0 0
    %2706 = vmatpush1.bf16.msra.mxu0 0
    %2707 = vmatprep.subr.bf16.mxu0 0
    %2708 = vmatpush1.bf16.msra.mxu0 0
    %2709 = vmatprep.subr.bf16.mxu0 0
    %2710 = vmatpush1.bf16.msra.mxu0 0
    %2711 = vmatprep.subr.bf16.mxu0 0
    %2712 = vmatpush1.bf16.msra.mxu0 0
    %2713 = vmatprep.mubr.bf16.mxu0 0
    %2714 = vmatmul.mubr.bf16.gmra.mrb[0].mxu0 %v2676
    %v2715 = vpop.f32.mrb[0].mxu0
    %v2716 = vadd.f32 0.0, %v2715
    %v2717 = vpop.f32.mrb[0].mxu0
    %v2718 = vpop.f32.mrb[0].mxu0
    %v2719 = vpop.f32.mrb[0].mxu0
    %2720 = vdwg.mxu0
    %2721 = vrot.lane.b32.xlu0 %v925, 64
    %v2722 = vpop.permute.xlu0 %2721
    %v2723 = vrot.slane %v2722, 4
    %v2725 = vsel %vm1151, %v2573, 0
    %v2728 = vsel %vm1203, %v2723, 0
    %2730 = vmatprep.subr.bf16.mxu0 0
    %2731 = vmatpush1.bf16.msra.mxu0 %v2728
    %2732 = vmatprep.subr.bf16.mxu0 0
    %2733 = vmatpush1.bf16.msra.mxu0 0
    %2734 = vmatprep.subr.bf16.mxu0 0
    %2735 = vmatpush1.bf16.msra.mxu0 0
    %2736 = vmatprep.subr.bf16.mxu0 0
    %2737 = vmatpush1.bf16.msra.mxu0 0
    %2738 = vmatprep.subr.bf16.mxu0 0
    %2739 = vmatpush1.bf16.msra.mxu0 0
    %2740 = vmatprep.subr.bf16.mxu0 0
    %2741 = vmatpush1.bf16.msra.mxu0 0
    %2742 = vmatprep.subr.bf16.mxu0 0
    %2743 = vmatpush1.bf16.msra.mxu0 0
    %2744 = vmatprep.subr.bf16.mxu0 0
    %2745 = vmatpush1.bf16.msra.mxu0 0
    %2746 = vmatprep.subr.bf16.mxu0 0
    %2747 = vmatpush1.bf16.msra.mxu0 0
    %2748 = vmatprep.subr.bf16.mxu0 0
    %2749 = vmatpush1.bf16.msra.mxu0 0
    %2750 = vmatprep.subr.bf16.mxu0 0
    %2751 = vmatpush1.bf16.msra.mxu0 0
    %2752 = vmatprep.subr.bf16.mxu0 0
    %2753 = vmatpush1.bf16.msra.mxu0 0
    %2754 = vmatprep.subr.bf16.mxu0 0
    %2755 = vmatpush1.bf16.msra.mxu0 0
    %2756 = vmatprep.subr.bf16.mxu0 0
    %2757 = vmatpush1.bf16.msra.mxu0 0
    %2758 = vmatprep.subr.bf16.mxu0 0
    %2759 = vmatpush1.bf16.msra.mxu0 0
    %2760 = vmatprep.subr.bf16.mxu0 0
    %2761 = vmatpush1.bf16.msra.mxu0 0
    %2762 = vmatprep.mubr.bf16.mxu0 0
    %2763 = vmatmul.mubr.bf16.gmra.mrb[0].mxu0 %v2725
    %v2764 = vpop.f32.mrb[0].mxu0
    %v2765 = vadd.f32 0.0, %v2764
    %v2766 = vpop.f32.mrb[0].mxu0
    %v2767 = vpop.f32.mrb[0].mxu0
    %v2768 = vpop.f32.mrb[0].mxu0
    %2769 = vdwg.mxu0
    %2774 = vrot.lane.b32.xlu0 %v2618, 64
    %v2775 = vpop.permute.xlu0 %2774
    %2776 = vrot.lane.b32.xlu0 %v2667, 64
    %v2777 = vpop.permute.xlu0 %2776
    %2778 = vrot.lane.b32.xlu0 %v2716, 64
    %v2779 = vpop.permute.xlu0 %2778
    %2780 = vrot.lane.b32.xlu0 %v2765, 64
    %v2781 = vpop.permute.xlu0 %2780
    %2786 = vst.msk [vmem:[#allocation2 + $0x8] sm:$0xff] %vm1865, %v2775
    %2787 = vst.msk [vmem:[#allocation2 + $0x18] sm:$0xff] %vm1865, %v2777
    %2788 = vst.msk [vmem:[#allocation2 + $0x28] sm:$0xff] %vm1865, %v2779
    %2789 = vst.msk [vmem:[#allocation2 + $0x38] sm:$0xff] %vm1865, %v2781
    %v2790 = vld [vmem:[#allocation2] sm:$0xff]
    %v2791 = vld [vmem:[#allocation2 + $0x8] sm:$0xff]
    %v2792 = vld [vmem:[#allocation2 + $0x10] sm:$0xff]
    %v2793 = vld [vmem:[#allocation2 + $0x18] sm:$0xff]
    %v2794 = vld [vmem:[#allocation2 + $0x20] sm:$0xff]
    %v2795 = vld [vmem:[#allocation2 + $0x28] sm:$0xff]
    %v2796 = vld [vmem:[#allocation2 + $0x30] sm:$0xff]
    %v2797 = vld [vmem:[#allocation2 + $0x38] sm:$0xff]
    %v2798 = vpack.c.bf16 %v2792, %v2790
    %v2799 = vpack.c.bf16 %v2793, %v2791
    %v2800 = vpack.c.bf16 %v2796, %v2794
    %v2801 = vpack.c.bf16 %v2797, %v2795
    %v2802 = vld [vmem:[#allocation9] sm:$0xff]
    %v2803 = vld [vmem:[#allocation9 + $0x8] sm:$0xff]
    %v2804 = vld [vmem:[#allocation9 + $0x10] sm:$0xff]
    %v2805 = vld [vmem:[#allocation9 + $0x18] sm:$0xff]
    %v2806 = vld [vmem:[#allocation9 + $0x20] sm:$0xff]
    %v2807 = vld [vmem:[#allocation9 + $0x28] sm:$0xff]
    %v2808 = vld [vmem:[#allocation9 + $0x30] sm:$0xff]
    %v2809 = vld [vmem:[#allocation9 + $0x38] sm:$0xff]
    %v2810 = vld [vmem:[#allocation9 + $0x40] sm:$0xff]
    %v2811 = vld [vmem:[#allocation9 + $0x48] sm:$0xff]
    %v2812 = vld [vmem:[#allocation9 + $0x50] sm:$0xff]
    %v2813 = vld [vmem:[#allocation9 + $0x58] sm:$0xff]
    %v2814 = vld [vmem:[#allocation9 + $0x60] sm:$0xff]
    %v2815 = vld [vmem:[#allocation9 + $0x68] sm:$0xff]
    %v2816 = vld [vmem:[#allocation9 + $0x70] sm:$0xff]
    %v2817 = vld [vmem:[#allocation9 + $0x78] sm:$0xff]
    %v2818 = vld [vmem:[#allocation9 + $0x80] sm:$0xff]
    %v2819 = vld [vmem:[#allocation9 + $0x88] sm:$0xff]
    %v2820 = vld [vmem:[#allocation9 + $0x90] sm:$0xff]
    %v2821 = vld [vmem:[#allocation9 + $0x98] sm:$0xff]
    %v2822 = vld [vmem:[#allocation9 + $0xa0] sm:$0xff]
    %v2823 = vld [vmem:[#allocation9 + $0xa8] sm:$0xff]
    %v2824 = vld [vmem:[#allocation9 + $0xb0] sm:$0xff]
    %v2825 = vld [vmem:[#allocation9 + $0xb8] sm:$0xff]
    %v2826 = vld [vmem:[#allocation9 + $0xc0] sm:$0xff]
    %v2827 = vld [vmem:[#allocation9 + $0xc8] sm:$0xff]
    %v2828 = vld [vmem:[#allocation9 + $0xd0] sm:$0xff]
    %v2829 = vld [vmem:[#allocation9 + $0xd8] sm:$0xff]
    %v2830 = vld [vmem:[#allocation9 + $0xe0] sm:$0xff]
    %v2831 = vld [vmem:[#allocation9 + $0xe8] sm:$0xff]
    %v2832 = vld [vmem:[#allocation9 + $0xf0] sm:$0xff]
    %v2833 = vld [vmem:[#allocation9 + $0xf8] sm:$0xff]
    %v2866 = vunpack.c.l.b16 %v2802
    %v2867 = vunpack.c.h.b16 %v2802
    %v2868 = vunpack.c.l.b16 %v2803
    %v2869 = vunpack.c.h.b16 %v2803
    %v2870 = vunpack.c.l.b16 %v2804
    %v2871 = vunpack.c.h.b16 %v2804
    %v2872 = vunpack.c.l.b16 %v2805
    %v2873 = vunpack.c.h.b16 %v2805
    %v2874 = vunpack.c.l.b16 %v2806
    %v2875 = vunpack.c.h.b16 %v2806
    %v2876 = vunpack.c.l.b16 %v2807
    %v2877 = vunpack.c.h.b16 %v2807
    %v2878 = vunpack.c.l.b16 %v2808
    %v2879 = vunpack.c.h.b16 %v2808
    %v2880 = vunpack.c.l.b16 %v2809
    %v2881 = vunpack.c.h.b16 %v2809
    %v2882 = vunpack.c.l.b16 %v2810
    %v2883 = vunpack.c.h.b16 %v2810
    %v2884 = vunpack.c.l.b16 %v2811
    %v2885 = vunpack.c.h.b16 %v2811
    %v2886 = vunpack.c.l.b16 %v2812
    %v2887 = vunpack.c.h.b16 %v2812
    %v2888 = vunpack.c.l.b16 %v2813
    %v2889 = vunpack.c.h.b16 %v2813
    %v2890 = vunpack.c.l.b16 %v2814
    %v2891 = vunpack.c.h.b16 %v2814
    %v2892 = vunpack.c.l.b16 %v2815
    %v2893 = vunpack.c.h.b16 %v2815
    %v2894 = vunpack.c.l.b16 %v2816
    %v2895 = vunpack.c.h.b16 %v2816
    %v2896 = vunpack.c.l.b16 %v2817
    %v2897 = vunpack.c.h.b16 %v2817
    %v2898 = vunpack.c.l.b16 %v2818
    %v2899 = vunpack.c.h.b16 %v2818
    %v2900 = vunpack.c.l.b16 %v2819
    %v2901 = vunpack.c.h.b16 %v2819
    %v2902 = vunpack.c.l.b16 %v2820
    %v2903 = vunpack.c.h.b16 %v2820
    %v2904 = vunpack.c.l.b16 %v2821
    %v2905 = vunpack.c.h.b16 %v2821
    %v2906 = vunpack.c.l.b16 %v2822
    %v2907 = vunpack.c.h.b16 %v2822
    %v2908 = vunpack.c.l.b16 %v2823
    %v2909 = vunpack.c.h.b16 %v2823
    %v2910 = vunpack.c.l.b16 %v2824
    %v2911 = vunpack.c.h.b16 %v2824
    %v2912 = vunpack.c.l.b16 %v2825
    %v2913 = vunpack.c.h.b16 %v2825
    %v2914 = vunpack.c.l.b16 %v2826
    %v2915 = vunpack.c.h.b16 %v2826
    %v2916 = vunpack.c.l.b16 %v2827
    %v2917 = vunpack.c.h.b16 %v2827
    %v2918 = vunpack.c.l.b16 %v2828
    %v2919 = vunpack.c.h.b16 %v2828
    %v2920 = vunpack.c.l.b16 %v2829
    %v2921 = vunpack.c.h.b16 %v2829
    %v2922 = vunpack.c.l.b16 %v2830
    %v2923 = vunpack.c.h.b16 %v2830
    %v2924 = vunpack.c.l.b16 %v2831
    %v2925 = vunpack.c.h.b16 %v2831
    %v2926 = vunpack.c.l.b16 %v2832
    %v2927 = vunpack.c.h.b16 %v2832
    %v2928 = vunpack.c.l.b16 %v2833
    %v2929 = vunpack.c.h.b16 %v2833
    %v2930 = vpack.c.b16 %v2868, %v2866
    %v2931 = vpack.c.b16 %v2869, %v2867
    %v2932 = vpack.c.b16 %v2872, %v2870
    %v2933 = vpack.c.b16 %v2873, %v2871
    %v2934 = vpack.c.b16 %v2876, %v2874
    %v2935 = vpack.c.b16 %v2877, %v2875
    %v2936 = vpack.c.b16 %v2880, %v2878
    %v2937 = vpack.c.b16 %v2881, %v2879
    %v2938 = vpack.c.b16 %v2884, %v2882
    %v2939 = vpack.c.b16 %v2885, %v2883
    %v2940 = vpack.c.b16 %v2888, %v2886
    %v2941 = vpack.c.b16 %v2889, %v2887
    %v2942 = vpack.c.b16 %v2892, %v2890
    %v2943 = vpack.c.b16 %v2893, %v2891
    %v2944 = vpack.c.b16 %v2896, %v2894
    %v2945 = vpack.c.b16 %v2897, %v2895
    %v2946 = vpack.c.b16 %v2900, %v2898
    %v2947 = vpack.c.b16 %v2901, %v2899
    %v2948 = vpack.c.b16 %v2904, %v2902
    %v2949 = vpack.c.b16 %v2905, %v2903
    %v2950 = vpack.c.b16 %v2908, %v2906
    %v2951 = vpack.c.b16 %v2909, %v2907
    %v2952 = vpack.c.b16 %v2912, %v2910
    %v2953 = vpack.c.b16 %v2913, %v2911
    %v2954 = vpack.c.b16 %v2916, %v2914
    %v2955 = vpack.c.b16 %v2917, %v2915
    %v2956 = vpack.c.b16 %v2920, %v2918
    %v2957 = vpack.c.b16 %v2921, %v2919
    %v2958 = vpack.c.b16 %v2924, %v2922
    %v2959 = vpack.c.b16 %v2925, %v2923
    %v2960 = vpack.c.b16 %v2928, %v2926
    %v2961 = vpack.c.b16 %v2929, %v2927
    %2994 = vmatprep.subr.bf16.mxu0 %v2931
    %2995 = vmatpush1.bf16.msra.mxu0 %v2930
    %2996 = vmatprep.subr.bf16.mxu0 %v2933
    %2997 = vmatpush1.bf16.msra.mxu0 %v2932
    %2998 = vmatprep.subr.bf16.mxu0 %v2935
    %2999 = vmatpush1.bf16.msra.mxu0 %v2934
    %3000 = vmatprep.subr.bf16.mxu0 %v2937
    %3001 = vmatpush1.bf16.msra.mxu0 %v2936
    %3002 = vmatprep.subr.bf16.mxu0 %v2939
    %3003 = vmatpush1.bf16.msra.mxu0 %v2938
    %3004 = vmatprep.subr.bf16.mxu0 %v2941
    %3005 = vmatpush1.bf16.msra.mxu0 %v2940
    %3006 = vmatprep.subr.bf16.mxu0 %v2943
    %3007 = vmatpush1.bf16.msra.mxu0 %v2942
    %3008 = vmatprep.subr.bf16.mxu0 %v2945
    %3009 = vmatpush1.bf16.msra.mxu0 %v2944
    %3010 = vmatprep.subr.bf16.mxu0 %v2947
    %3011 = vmatpush1.bf16.msra.mxu0 %v2946
    %3012 = vmatprep.subr.bf16.mxu0 %v2949
    %3013 = vmatpush1.bf16.msra.mxu0 %v2948
    %3014 = vmatprep.subr.bf16.mxu0 %v2951
    %3015 = vmatpush1.bf16.msra.mxu0 %v2950
    %3016 = vmatprep.subr.bf16.mxu0 %v2953
    %3017 = vmatpush1.bf16.msra.mxu0 %v2952
    %3018 = vmatprep.subr.bf16.mxu0 %v2955
    %3019 = vmatpush1.bf16.msra.mxu0 %v2954
    %3020 = vmatprep.subr.bf16.mxu0 %v2957
    %3021 = vmatpush1.bf16.msra.mxu0 %v2956
    %3022 = vmatprep.subr.bf16.mxu0 %v2959
    %3023 = vmatpush1.bf16.msra.mxu0 %v2958
    %3024 = vmatprep.subr.bf16.mxu0 %v2961
    %3025 = vmatpush1.bf16.msra.mxu0 %v2960
    %3026 = vmatprep.mubr.bf16.mxu0 %v2799
    %3027 = vmatmul.mubr.bf16.gmra.mrb[0].mxu0 %v2798
    %v3028 = vpop.f32.mrb[0].mxu0
    %v3029 = vadd.f32 0.0, %v3028
    %v3030 = vpop.f32.mrb[0].mxu0
    %v3031 = vadd.f32 0.0, %v3030
    %v3032 = vpop.f32.mrb[0].mxu0
    %v3033 = vadd.f32 0.0, %v3032
    %v3034 = vpop.f32.mrb[0].mxu0
    %v3035 = vadd.f32 0.0, %v3034
    %3036 = vmatprep.mubr.bf16.mxu0 %v2801
    %3037 = vmatmul.mubr.bf16.gmra.mrb[0].mxu0 %v2800
    %v3038 = vpop.f32.mrb[0].mxu0
    %v3039 = vadd.f32 0.0, %v3038
    %v3040 = vpop.f32.mrb[0].mxu0
    %v3041 = vadd.f32 0.0, %v3040
    %v3042 = vpop.f32.mrb[0].mxu0
    %v3043 = vadd.f32 0.0, %v3042
    %v3044 = vpop.f32.mrb[0].mxu0
    %v3045 = vadd.f32 0.0, %v3044
    %3046 = vdwg.mxu0
    %v3047 = vld [vmem:[%s4] sm:$0x3]
    %v3048 = vld [vmem:[%s5] sm:$0x3]
    %v3049 = vadd.f32 %v3029, %v3031
    %3050 = vadd.xlane.f32.xlu0 %v3049
    %v3051 = vpop.xlane.xlu0 %3050
    %v3052 = vadd.f32 %v3033, %v3035
    %3053 = vadd.xlane.f32.xlu0 %v3052
    %v3054 = vpop.xlane.xlu0 %3053
    %v3055 = vadd.f32 %v3039, %v3041
    %3056 = vadd.xlane.f32.xlu0 %v3055
    %v3057 = vpop.xlane.xlu0 %3056
    %v3058 = vadd.f32 %v3043, %v3045
    %3059 = vadd.xlane.f32.xlu0 %v3058
    %v3060 = vpop.xlane.xlu0 %3059
    %v3061 = vrcp.pop 256.0
    %v3062 = vmul.f32 %v3051, %v3061
    %v3063 = vmul.f32 %v3054, %v3061
    %v3064 = vmul.f32 %v3057, %v3061
    %v3065 = vmul.f32 %v3060, %v3061
    %v3066 = vsub.f32 %v3029, %v3062
    %v3067 = vsub.f32 %v3031, %v3062
    %v3068 = vsub.f32 %v3033, %v3063
    %v3069 = vsub.f32 %v3035, %v3063
    %v3070 = vsub.f32 %v3039, %v3064
    %v3071 = vsub.f32 %v3041, %v3064
    %v3072 = vsub.f32 %v3043, %v3065
    %v3073 = vsub.f32 %v3045, %v3065
    %v3074 = vmul.f32 %v3066, %v3066
    %v3075 = vmul.f32 %v3067, %v3067
    %v3076 = vmul.f32 %v3068, %v3068
    %v3077 = vmul.f32 %v3069, %v3069
    %v3078 = vmul.f32 %v3070, %v3070
    %v3079 = vmul.f32 %v3071, %v3071
    %v3080 = vmul.f32 %v3072, %v3072
    %v3081 = vmul.f32 %v3073, %v3073
    %v3082 = vadd.f32 %v3074, %v3075
    %3083 = vadd.xlane.f32.xlu0 %v3082
    %v3084 = vpop.xlane.xlu0 %3083
    %v3085 = vadd.f32 %v3076, %v3077
    %3086 = vadd.xlane.f32.xlu0 %v3085
    %v3087 = vpop.xlane.xlu0 %3086
    %v3088 = vadd.f32 %v3078, %v3079
    %3089 = vadd.xlane.f32.xlu0 %v3088
    %v3090 = vpop.xlane.xlu0 %3089
    %v3091 = vadd.f32 %v3080, %v3081
    %3092 = vadd.xlane.f32.xlu0 %v3091
    %v3093 = vpop.xlane.xlu0 %3092
    %v3094 = vmul.f32 %v3084, %v3061
    %v3095 = vmul.f32 %v3087, %v3061
    %v3096 = vmul.f32 %v3090, %v3061
    %v3097 = vmul.f32 %v3093, %v3061
    %v3098 = vadd.f32 %v3094, 1e-05
    %v3099 = vadd.f32 %v3095, 1e-05
    %v3100 = vadd.f32 %v3096, 1e-05
    %v3101 = vadd.f32 %v3097, 1e-05
    %v3102 = vrsqrt.pop %v3098
    %v3103 = vrsqrt.pop %v3099
    %v3104 = vrsqrt.pop %v3100
    %v3105 = vrsqrt.pop %v3101
    %v3106 = vmul.f32 %v3066, %v3102
    %v3107 = vmul.f32 %v3067, %v3102
    %v3108 = vmul.f32 %v3068, %v3103
    %v3109 = vmul.f32 %v3069, %v3103
    %v3110 = vmul.f32 %v3070, %v3104
    %v3111 = vmul.f32 %v3071, %v3104
    %v3112 = vmul.f32 %v3072, %v3105
    %v3113 = vmul.f32 %v3073, %v3105
    %v3115 = vlaneseq
    %v3116 = vshrl.u32 %v3115, 7
    %v3117 = vsub.s32 0, %v3116
    %v3118 = vrot.slane %v3047, %v3117
    %v3119 = vlaneseq
    %v3120 = vshrl.u32 %v3119, 7
    %v3121 = vsub.s32 1, %v3120
    %v3122 = vrot.slane %v3047, %v3121
    %v3125 = vmul.f32 %v3106, %v3118
    %v3126 = vmul.f32 %v3107, %v3122
    %v3127 = vmul.f32 %v3108, %v3118
    %v3128 = vmul.f32 %v3109, %v3122
    %v3129 = vmul.f32 %v3110, %v3118
    %v3130 = vmul.f32 %v3111, %v3122
    %v3131 = vmul.f32 %v3112, %v3118
    %v3132 = vmul.f32 %v3113, %v3122
    %v3134 = vlaneseq
    %v3135 = vshrl.u32 %v3134, 7
    %v3136 = vsub.s32 0, %v3135
    %v3137 = vrot.slane %v3048, %v3136
    %v3138 = vlaneseq
    %v3139 = vshrl.u32 %v3138, 7
    %v3140 = vsub.s32 1, %v3139
    %v3141 = vrot.slane %v3048, %v3140
    %v3144 = vadd.f32 %v3125, %v3137
    %v3145 = vadd.f32 %v3126, %v3141
    %v3146 = vadd.f32 %v3127, %v3137
    %v3147 = vadd.f32 %v3128, %v3141
    %v3148 = vadd.f32 %v3129, %v3137
    %v3149 = vadd.f32 %v3130, %v3141
    %v3150 = vadd.f32 %v3131, %v3137
    %v3151 = vadd.f32 %v3132, %v3141
    %v3152 = vadd.f32 %v119, %v3144
    %v3153 = vadd.f32 %v120, %v3145
    %v3154 = vadd.f32 %v121, %v3146
    %v3155 = vadd.f32 %v122, %v3147
    %v3156 = vadd.f32 %v123, %v3148
    %v3157 = vadd.f32 %v124, %v3149
    %v3158 = vadd.f32 %v125, %v3150
    %v3159 = vadd.f32 %v126, %v3151
    %v3160 = vpack.c.bf16 %v3154, %v3152
    %v3161 = vpack.c.bf16 %v3155, %v3153
    %v3162 = vpack.c.bf16 %v3158, %v3156
    %v3163 = vpack.c.bf16 %v3159, %v3157
    %v3164 = vld [vmem:[#allocation11] sm:$0xff]
    %v3165 = vld [vmem:[#allocation11 + $0x8] sm:$0xff]
    %v3166 = vld [vmem:[#allocation11 + $0x10] sm:$0xff]
    %v3167 = vld [vmem:[#allocation11 + $0x18] sm:$0xff]
    %v3168 = vld [vmem:[#allocation11 + $0x20] sm:$0xff]
    %v3169 = vld [vmem:[#allocation11 + $0x28] sm:$0xff]
    %v3170 = vld [vmem:[#allocation11 + $0x30] sm:$0xff]
    %v3171 = vld [vmem:[#allocation11 + $0x38] sm:$0xff]
    %v3172 = vld [vmem:[#allocation11 + $0x40] sm:$0xff]
    %v3173 = vld [vmem:[#allocation11 + $0x48] sm:$0xff]
    %v3174 = vld [vmem:[#allocation11 + $0x50] sm:$0xff]
    %v3175 = vld [vmem:[#allocation11 + $0x58] sm:$0xff]
    %v3176 = vld [vmem:[#allocation11 + $0x60] sm:$0xff]
    %v3177 = vld [vmem:[#allocation11 + $0x68] sm:$0xff]
    %v3178 = vld [vmem:[#allocation11 + $0x70] sm:$0xff]
    %v3179 = vld [vmem:[#allocation11 + $0x78] sm:$0xff]
    %v3180 = vld [vmem:[#allocation11 + $0x80] sm:$0xff]
    %v3181 = vld [vmem:[#allocation11 + $0x88] sm:$0xff]
    %v3182 = vld [vmem:[#allocation11 + $0x90] sm:$0xff]
    %v3183 = vld [vmem:[#allocation11 + $0x98] sm:$0xff]
    %v3184 = vld [vmem:[#allocation11 + $0xa0] sm:$0xff]
    %v3185 = vld [vmem:[#allocation11 + $0xa8] sm:$0xff]
    %v3186 = vld [vmem:[#allocation11 + $0xb0] sm:$0xff]
    %v3187 = vld [vmem:[#allocation11 + $0xb8] sm:$0xff]
    %v3188 = vld [vmem:[#allocation11 + $0xc0] sm:$0xff]
    %v3189 = vld [vmem:[#allocation11 + $0xc8] sm:$0xff]
    %v3190 = vld [vmem:[#allocation11 + $0xd0] sm:$0xff]
    %v3191 = vld [vmem:[#allocation11 + $0xd8] sm:$0xff]
    %v3192 = vld [vmem:[#allocation11 + $0xe0] sm:$0xff]
    %v3193 = vld [vmem:[#allocation11 + $0xe8] sm:$0xff]
    %v3194 = vld [vmem:[#allocation11 + $0xf0] sm:$0xff]
    %v3195 = vld [vmem:[#allocation11 + $0xf8] sm:$0xff]
    %v3196 = vld [vmem:[#allocation11 + $0x100] sm:$0xff]
    %v3197 = vld [vmem:[#allocation11 + $0x108] sm:$0xff]
    %v3198 = vld [vmem:[#allocation11 + $0x110] sm:$0xff]
    %v3199 = vld [vmem:[#allocation11 + $0x118] sm:$0xff]
    %v3200 = vld [vmem:[#allocation11 + $0x120] sm:$0xff]
    %v3201 = vld [vmem:[#allocation11 + $0x128] sm:$0xff]
    %v3202 = vld [vmem:[#allocation11 + $0x130] sm:$0xff]
    %v3203 = vld [vmem:[#allocation11 + $0x138] sm:$0xff]
    %v3204 = vld [vmem:[#allocation11 + $0x140] sm:$0xff]
    %v3205 = vld [vmem:[#allocation11 + $0x148] sm:$0xff]
    %v3206 = vld [vmem:[#allocation11 + $0x150] sm:$0xff]
    %v3207 = vld [vmem:[#allocation11 + $0x158] sm:$0xff]
    %v3208 = vld [vmem:[#allocation11 + $0x160] sm:$0xff]
    %v3209 = vld [vmem:[#allocation11 + $0x168] sm:$0xff]
    %v3210 = vld [vmem:[#allocation11 + $0x170] sm:$0xff]
    %v3211 = vld [vmem:[#allocation11 + $0x178] sm:$0xff]
    %v3212 = vld [vmem:[#allocation11 + $0x180] sm:$0xff]
    %v3213 = vld [vmem:[#allocation11 + $0x188] sm:$0xff]
    %v3214 = vld [vmem:[#allocation11 + $0x190] sm:$0xff]
    %v3215 = vld [vmem:[#allocation11 + $0x198] sm:$0xff]
    %v3216 = vld [vmem:[#allocation11 + $0x1a0] sm:$0xff]
    %v3217 = vld [vmem:[#allocation11 + $0x1a8] sm:$0xff]
    %v3218 = vld [vmem:[#allocation11 + $0x1b0] sm:$0xff]
    %v3219 = vld [vmem:[#allocation11 + $0x1b8] sm:$0xff]
    %v3220 = vld [vmem:[#allocation11 + $0x1c0] sm:$0xff]
    %v3221 = vld [vmem:[#allocation11 + $0x1c8] sm:$0xff]
    %v3222 = vld [vmem:[#allocation11 + $0x1d0] sm:$0xff]
    %v3223 = vld [vmem:[#allocation11 + $0x1d8] sm:$0xff]
    %v3224 = vld [vmem:[#allocation11 + $0x1e0] sm:$0xff]
    %v3225 = vld [vmem:[#allocation11 + $0x1e8] sm:$0xff]
    %v3226 = vld [vmem:[#allocation11 + $0x1f0] sm:$0xff]
    %v3227 = vld [vmem:[#allocation11 + $0x1f8] sm:$0xff]
    %v3228 = vld [vmem:[#allocation11 + $0x200] sm:$0xff]
    %v3229 = vld [vmem:[#allocation11 + $0x208] sm:$0xff]
    %v3230 = vld [vmem:[#allocation11 + $0x210] sm:$0xff]
    %v3231 = vld [vmem:[#allocation11 + $0x218] sm:$0xff]
    %v3232 = vld [vmem:[#allocation11 + $0x220] sm:$0xff]
    %v3233 = vld [vmem:[#allocation11 + $0x228] sm:$0xff]
    %v3234 = vld [vmem:[#allocation11 + $0x230] sm:$0xff]
    %v3235 = vld [vmem:[#allocation11 + $0x238] sm:$0xff]
    %v3236 = vld [vmem:[#allocation11 + $0x240] sm:$0xff]
    %v3237 = vld [vmem:[#allocation11 + $0x248] sm:$0xff]
    %v3238 = vld [vmem:[#allocation11 + $0x250] sm:$0xff]
    %v3239 = vld [vmem:[#allocation11 + $0x258] sm:$0xff]
    %v3240 = vld [vmem:[#allocation11 + $0x260] sm:$0xff]
    %v3241 = vld [vmem:[#allocation11 + $0x268] sm:$0xff]
    %v3242 = vld [vmem:[#allocation11 + $0x270] sm:$0xff]
    %v3243 = vld [vmem:[#allocation11 + $0x278] sm:$0xff]
    %v3244 = vld [vmem:[#allocation11 + $0x280] sm:$0xff]
    %v3245 = vld [vmem:[#allocation11 + $0x288] sm:$0xff]
    %v3246 = vld [vmem:[#allocation11 + $0x290] sm:$0xff]
    %v3247 = vld [vmem:[#allocation11 + $0x298] sm:$0xff]
    %v3248 = vld [vmem:[#allocation11 + $0x2a0] sm:$0xff]
    %v3249 = vld [vmem:[#allocation11 + $0x2a8] sm:$0xff]
    %v3250 = vld [vmem:[#allocation11 + $0x2b0] sm:$0xff]
    %v3251 = vld [vmem:[#allocation11 + $0x2b8] sm:$0xff]
    %v3252 = vld [vmem:[#allocation11 + $0x2c0] sm:$0xff]
    %v3253 = vld [vmem:[#allocation11 + $0x2c8] sm:$0xff]
    %v3254 = vld [vmem:[#allocation11 + $0x2d0] sm:$0xff]
    %v3255 = vld [vmem:[#allocation11 + $0x2d8] sm:$0xff]
    %v3256 = vld [vmem:[#allocation11 + $0x2e0] sm:$0xff]
    %v3257 = vld [vmem:[#allocation11 + $0x2e8] sm:$0xff]
    %v3258 = vld [vmem:[#allocation11 + $0x2f0] sm:$0xff]
    %v3259 = vld [vmem:[#allocation11 + $0x2f8] sm:$0xff]
    %v3260 = vld [vmem:[#allocation11 + $0x300] sm:$0xff]
    %v3261 = vld [vmem:[#allocation11 + $0x308] sm:$0xff]
    %v3262 = vld [vmem:[#allocation11 + $0x310] sm:$0xff]
    %v3263 = vld [vmem:[#allocation11 + $0x318] sm:$0xff]
    %v3264 = vld [vmem:[#allocation11 + $0x320] sm:$0xff]
    %v3265 = vld [vmem:[#allocation11 + $0x328] sm:$0xff]
    %v3266 = vld [vmem:[#allocation11 + $0x330] sm:$0xff]
    %v3267 = vld [vmem:[#allocation11 + $0x338] sm:$0xff]
    %v3268 = vld [vmem:[#allocation11 + $0x340] sm:$0xff]
    %v3269 = vld [vmem:[#allocation11 + $0x348] sm:$0xff]
    %v3270 = vld [vmem:[#allocation11 + $0x350] sm:$0xff]
    %v3271 = vld [vmem:[#allocation11 + $0x358] sm:$0xff]
    %v3272 = vld [vmem:[#allocation11 + $0x360] sm:$0xff]
    %v3273 = vld [vmem:[#allocation11 + $0x368] sm:$0xff]
    %v3274 = vld [vmem:[#allocation11 + $0x370] sm:$0xff]
    %v3275 = vld [vmem:[#allocation11 + $0x378] sm:$0xff]
    %v3276 = vld [vmem:[#allocation11 + $0x380] sm:$0xff]
    %v3277 = vld [vmem:[#allocation11 + $0x388] sm:$0xff]
    %v3278 = vld [vmem:[#allocation11 + $0x390] sm:$0xff]
    %v3279 = vld [vmem:[#allocation11 + $0x398] sm:$0xff]
    %v3280 = vld [vmem:[#allocation11 + $0x3a0] sm:$0xff]
    %v3281 = vld [vmem:[#allocation11 + $0x3a8] sm:$0xff]
    %v3282 = vld [vmem:[#allocation11 + $0x3b0] sm:$0xff]
    %v3283 = vld [vmem:[#allocation11 + $0x3b8] sm:$0xff]
    %v3284 = vld [vmem:[#allocation11 + $0x3c0] sm:$0xff]
    %v3285 = vld [vmem:[#allocation11 + $0x3c8] sm:$0xff]
    %v3286 = vld [vmem:[#allocation11 + $0x3d0] sm:$0xff]
    %v3287 = vld [vmem:[#allocation11 + $0x3d8] sm:$0xff]
    %v3288 = vld [vmem:[#allocation11 + $0x3e0] sm:$0xff]
    %v3289 = vld [vmem:[#allocation11 + $0x3e8] sm:$0xff]
    %v3290 = vld [vmem:[#allocation11 + $0x3f0] sm:$0xff]
    %v3291 = vld [vmem:[#allocation11 + $0x3f8] sm:$0xff]
    %v3420 = vunpack.c.l.b16 %v3164
    %v3421 = vunpack.c.h.b16 %v3164
    %v3422 = vunpack.c.l.b16 %v3165
    %v3423 = vunpack.c.h.b16 %v3165
    %v3424 = vunpack.c.l.b16 %v3166
    %v3425 = vunpack.c.h.b16 %v3166
    %v3426 = vunpack.c.l.b16 %v3167
    %v3427 = vunpack.c.h.b16 %v3167
    %v3428 = vunpack.c.l.b16 %v3168
    %v3429 = vunpack.c.h.b16 %v3168
    %v3430 = vunpack.c.l.b16 %v3169
    %v3431 = vunpack.c.h.b16 %v3169
    %v3432 = vunpack.c.l.b16 %v3170
    %v3433 = vunpack.c.h.b16 %v3170
    %v3434 = vunpack.c.l.b16 %v3171
    %v3435 = vunpack.c.h.b16 %v3171
    %v3436 = vunpack.c.l.b16 %v3172
    %v3437 = vunpack.c.h.b16 %v3172
    %v3438 = vunpack.c.l.b16 %v3173
    %v3439 = vunpack.c.h.b16 %v3173
    %v3440 = vunpack.c.l.b16 %v3174
    %v3441 = vunpack.c.h.b16 %v3174
    %v3442 = vunpack.c.l.b16 %v3175
    %v3443 = vunpack.c.h.b16 %v3175
    %v3444 = vunpack.c.l.b16 %v3176
    %v3445 = vunpack.c.h.b16 %v3176
    %v3446 = vunpack.c.l.b16 %v3177
    %v3447 = vunpack.c.h.b16 %v3177
    %v3448 = vunpack.c.l.b16 %v3178
    %v3449 = vunpack.c.h.b16 %v3178
    %v3450 = vunpack.c.l.b16 %v3179
    %v3451 = vunpack.c.h.b16 %v3179
    %v3452 = vunpack.c.l.b16 %v3180
    %v3453 = vunpack.c.h.b16 %v3180
    %v3454 = vunpack.c.l.b16 %v3181
    %v3455 = vunpack.c.h.b16 %v3181
    %v3456 = vunpack.c.l.b16 %v3182
    %v3457 = vunpack.c.h.b16 %v3182
    %v3458 = vunpack.c.l.b16 %v3183
    %v3459 = vunpack.c.h.b16 %v3183
    %v3460 = vunpack.c.l.b16 %v3184
    %v3461 = vunpack.c.h.b16 %v3184
    %v3462 = vunpack.c.l.b16 %v3185
    %v3463 = vunpack.c.h.b16 %v3185
    %v3464 = vunpack.c.l.b16 %v3186
    %v3465 = vunpack.c.h.b16 %v3186
    %v3466 = vunpack.c.l.b16 %v3187
    %v3467 = vunpack.c.h.b16 %v3187
    %v3468 = vunpack.c.l.b16 %v3188
    %v3469 = vunpack.c.h.b16 %v3188
    %v3470 = vunpack.c.l.b16 %v3189
    %v3471 = vunpack.c.h.b16 %v3189
    %v3472 = vunpack.c.l.b16 %v3190
    %v3473 = vunpack.c.h.b16 %v3190
    %v3474 = vunpack.c.l.b16 %v3191
    %v3475 = vunpack.c.h.b16 %v3191
    %v3476 = vunpack.c.l.b16 %v3192
    %v3477 = vunpack.c.h.b16 %v3192
    %v3478 = vunpack.c.l.b16 %v3193
    %v3479 = vunpack.c.h.b16 %v3193
    %v3480 = vunpack.c.l.b16 %v3194
    %v3481 = vunpack.c.h.b16 %v3194
    %v3482 = vunpack.c.l.b16 %v3195
    %v3483 = vunpack.c.h.b16 %v3195
    %v3484 = vunpack.c.l.b16 %v3196
    %v3485 = vunpack.c.h.b16 %v3196
    %v3486 = vunpack.c.l.b16 %v3197
    %v3487 = vunpack.c.h.b16 %v3197
    %v3488 = vunpack.c.l.b16 %v3198
    %v3489 = vunpack.c.h.b16 %v3198
    %v3490 = vunpack.c.l.b16 %v3199
    %v3491 = vunpack.c.h.b16 %v3199
    %v3492 = vunpack.c.l.b16 %v3200
    %v3493 = vunpack.c.h.b16 %v3200
    %v3494 = vunpack.c.l.b16 %v3201
    %v3495 = vunpack.c.h.b16 %v3201
    %v3496 = vunpack.c.l.b16 %v3202
    %v3497 = vunpack.c.h.b16 %v3202
    %v3498 = vunpack.c.l.b16 %v3203
    %v3499 = vunpack.c.h.b16 %v3203
    %v3500 = vunpack.c.l.b16 %v3204
    %v3501 = vunpack.c.h.b16 %v3204
    %v3502 = vunpack.c.l.b16 %v3205
    %v3503 = vunpack.c.h.b16 %v3205
    %v3504 = vunpack.c.l.b16 %v3206
    %v3505 = vunpack.c.h.b16 %v3206
    %v3506 = vunpack.c.l.b16 %v3207
    %v3507 = vunpack.c.h.b16 %v3207
    %v3508 = vunpack.c.l.b16 %v3208
    %v3509 = vunpack.c.h.b16 %v3208
    %v3510 = vunpack.c.l.b16 %v3209
    %v3511 = vunpack.c.h.b16 %v3209
    %v3512 = vunpack.c.l.b16 %v3210
    %v3513 = vunpack.c.h.b16 %v3210
    %v3514 = vunpack.c.l.b16 %v3211
    %v3515 = vunpack.c.h.b16 %v3211
    %v3516 = vunpack.c.l.b16 %v3212
    %v3517 = vunpack.c.h.b16 %v3212
    %v3518 = vunpack.c.l.b16 %v3213
    %v3519 = vunpack.c.h.b16 %v3213
    %v3520 = vunpack.c.l.b16 %v3214
    %v3521 = vunpack.c.h.b16 %v3214
    %v3522 = vunpack.c.l.b16 %v3215
    %v3523 = vunpack.c.h.b16 %v3215
    %v3524 = vunpack.c.l.b16 %v3216
    %v3525 = vunpack.c.h.b16 %v3216
    %v3526 = vunpack.c.l.b16 %v3217
    %v3527 = vunpack.c.h.b16 %v3217
    %v3528 = vunpack.c.l.b16 %v3218
    %v3529 = vunpack.c.h.b16 %v3218
    %v3530 = vunpack.c.l.b16 %v3219
    %v3531 = vunpack.c.h.b16 %v3219
    %v3532 = vunpack.c.l.b16 %v3220
    %v3533 = vunpack.c.h.b16 %v3220
    %v3534 = vunpack.c.l.b16 %v3221
    %v3535 = vunpack.c.h.b16 %v3221
    %v3536 = vunpack.c.l.b16 %v3222
    %v3537 = vunpack.c.h.b16 %v3222
    %v3538 = vunpack.c.l.b16 %v3223
    %v3539 = vunpack.c.h.b16 %v3223
    %v3540 = vunpack.c.l.b16 %v3224
    %v3541 = vunpack.c.h.b16 %v3224
    %v3542 = vunpack.c.l.b16 %v3225
    %v3543 = vunpack.c.h.b16 %v3225
    %v3544 = vunpack.c.l.b16 %v3226
    %v3545 = vunpack.c.h.b16 %v3226
    %v3546 = vunpack.c.l.b16 %v3227
    %v3547 = vunpack.c.h.b16 %v3227
    %v3548 = vunpack.c.l.b16 %v3228
    %v3549 = vunpack.c.h.b16 %v3228
    %v3550 = vunpack.c.l.b16 %v3229
    %v3551 = vunpack.c.h.b16 %v3229
    %v3552 = vunpack.c.l.b16 %v3230
    %v3553 = vunpack.c.h.b16 %v3230
    %v3554 = vunpack.c.l.b16 %v3231
    %v3555 = vunpack.c.h.b16 %v3231
    %v3556 = vunpack.c.l.b16 %v3232
    %v3557 = vunpack.c.h.b16 %v3232
    %v3558 = vunpack.c.l.b16 %v3233
    %v3559 = vunpack.c.h.b16 %v3233
    %v3560 = vunpack.c.l.b16 %v3234
    %v3561 = vunpack.c.h.b16 %v3234
    %v3562 = vunpack.c.l.b16 %v3235
    %v3563 = vunpack.c.h.b16 %v3235
    %v3564 = vunpack.c.l.b16 %v3236
    %v3565 = vunpack.c.h.b16 %v3236
    %v3566 = vunpack.c.l.b16 %v3237
    %v3567 = vunpack.c.h.b16 %v3237
    %v3568 = vunpack.c.l.b16 %v3238
    %v3569 = vunpack.c.h.b16 %v3238
    %v3570 = vunpack.c.l.b16 %v3239
    %v3571 = vunpack.c.h.b16 %v3239
    %v3572 = vunpack.c.l.b16 %v3240
    %v3573 = vunpack.c.h.b16 %v3240
    %v3574 = vunpack.c.l.b16 %v3241
    %v3575 = vunpack.c.h.b16 %v3241
    %v3576 = vunpack.c.l.b16 %v3242
    %v3577 = vunpack.c.h.b16 %v3242
    %v3578 = vunpack.c.l.b16 %v3243
    %v3579 = vunpack.c.h.b16 %v3243
    %v3580 = vunpack.c.l.b16 %v3244
    %v3581 = vunpack.c.h.b16 %v3244
    %v3582 = vunpack.c.l.b16 %v3245
    %v3583 = vunpack.c.h.b16 %v3245
    %v3584 = vunpack.c.l.b16 %v3246
    %v3585 = vunpack.c.h.b16 %v3246
    %v3586 = vunpack.c.l.b16 %v3247
    %v3587 = vunpack.c.h.b16 %v3247
    %v3588 = vunpack.c.l.b16 %v3248
    %v3589 = vunpack.c.h.b16 %v3248
    %v3590 = vunpack.c.l.b16 %v3249
    %v3591 = vunpack.c.h.b16 %v3249
    %v3592 = vunpack.c.l.b16 %v3250
    %v3593 = vunpack.c.h.b16 %v3250
    %v3594 = vunpack.c.l.b16 %v3251
    %v3595 = vunpack.c.h.b16 %v3251
    %v3596 = vunpack.c.l.b16 %v3252
    %v3597 = vunpack.c.h.b16 %v3252
    %v3598 = vunpack.c.l.b16 %v3253
    %v3599 = vunpack.c.h.b16 %v3253
    %v3600 = vunpack.c.l.b16 %v3254
    %v3601 = vunpack.c.h.b16 %v3254
    %v3602 = vunpack.c.l.b16 %v3255
    %v3603 = vunpack.c.h.b16 %v3255
    %v3604 = vunpack.c.l.b16 %v3256
    %v3605 = vunpack.c.h.b16 %v3256
    %v3606 = vunpack.c.l.b16 %v3257
    %v3607 = vunpack.c.h.b16 %v3257
    %v3608 = vunpack.c.l.b16 %v3258
    %v3609 = vunpack.c.h.b16 %v3258
    %v3610 = vunpack.c.l.b16 %v3259
    %v3611 = vunpack.c.h.b16 %v3259
    %v3612 = vunpack.c.l.b16 %v3260
    %v3613 = vunpack.c.h.b16 %v3260
    %v3614 = vunpack.c.l.b16 %v3261
    %v3615 = vunpack.c.h.b16 %v3261
    %v3616 = vunpack.c.l.b16 %v3262
    %v3617 = vunpack.c.h.b16 %v3262
    %v3618 = vunpack.c.l.b16 %v3263
    %v3619 = vunpack.c.h.b16 %v3263
    %v3620 = vunpack.c.l.b16 %v3264
    %v3621 = vunpack.c.h.b16 %v3264
    %v3622 = vunpack.c.l.b16 %v3265
    %v3623 = vunpack.c.h.b16 %v3265
    %v3624 = vunpack.c.l.b16 %v3266
    %v3625 = vunpack.c.h.b16 %v3266
    %v3626 = vunpack.c.l.b16 %v3267
    %v3627 = vunpack.c.h.b16 %v3267
    %v3628 = vunpack.c.l.b16 %v3268
    %v3629 = vunpack.c.h.b16 %v3268
    %v3630 = vunpack.c.l.b16 %v3269
    %v3631 = vunpack.c.h.b16 %v3269
    %v3632 = vunpack.c.l.b16 %v3270
    %v3633 = vunpack.c.h.b16 %v3270
    %v3634 = vunpack.c.l.b16 %v3271
    %v3635 = vunpack.c.h.b16 %v3271
    %v3636 = vunpack.c.l.b16 %v3272
    %v3637 = vunpack.c.h.b16 %v3272
    %v3638 = vunpack.c.l.b16 %v3273
    %v3639 = vunpack.c.h.b16 %v3273
    %v3640 = vunpack.c.l.b16 %v3274
    %v3641 = vunpack.c.h.b16 %v3274
    %v3642 = vunpack.c.l.b16 %v3275
    %v3643 = vunpack.c.h.b16 %v3275
    %v3644 = vunpack.c.l.b16 %v3276
    %v3645 = vunpack.c.h.b16 %v3276
    %v3646 = vunpack.c.l.b16 %v3277
    %v3647 = vunpack.c.h.b16 %v3277
    %v3648 = vunpack.c.l.b16 %v3278
    %v3649 = vunpack.c.h.b16 %v3278
    %v3650 = vunpack.c.l.b16 %v3279
    %v3651 = vunpack.c.h.b16 %v3279
    %v3652 = vunpack.c.l.b16 %v3280
    %v3653 = vunpack.c.h.b16 %v3280
    %v3654 = vunpack.c.l.b16 %v3281
    %v3655 = vunpack.c.h.b16 %v3281
    %v3656 = vunpack.c.l.b16 %v3282
    %v3657 = vunpack.c.h.b16 %v3282
    %v3658 = vunpack.c.l.b16 %v3283
    %v3659 = vunpack.c.h.b16 %v3283
    %v3660 = vunpack.c.l.b16 %v3284
    %v3661 = vunpack.c.h.b16 %v3284
    %v3662 = vunpack.c.l.b16 %v3285
    %v3663 = vunpack.c.h.b16 %v3285
    %v3664 = vunpack.c.l.b16 %v3286
    %v3665 = vunpack.c.h.b16 %v3286
    %v3666 = vunpack.c.l.b16 %v3287
    %v3667 = vunpack.c.h.b16 %v3287
    %v3668 = vunpack.c.l.b16 %v3288
    %v3669 = vunpack.c.h.b16 %v3288
    %v3670 = vunpack.c.l.b16 %v3289
    %v3671 = vunpack.c.h.b16 %v3289
    %v3672 = vunpack.c.l.b16 %v3290
    %v3673 = vunpack.c.h.b16 %v3290
    %v3674 = vunpack.c.l.b16 %v3291
    %v3675 = vunpack.c.h.b16 %v3291
    %v3676 = vpack.c.b16 %v3428, %v3420
    %v3677 = vpack.c.b16 %v3429, %v3421
    %v3678 = vpack.c.b16 %v3430, %v3422
    %v3679 = vpack.c.b16 %v3431, %v3423
    %v3680 = vpack.c.b16 %v3432, %v3424
    %v3681 = vpack.c.b16 %v3433, %v3425
    %v3682 = vpack.c.b16 %v3434, %v3426
    %v3683 = vpack.c.b16 %v3435, %v3427
    %v3684 = vpack.c.b16 %v3444, %v3436
    %v3685 = vpack.c.b16 %v3445, %v3437
    %v3686 = vpack.c.b16 %v3446, %v3438
    %v3687 = vpack.c.b16 %v3447, %v3439
    %v3688 = vpack.c.b16 %v3448, %v3440
    %v3689 = vpack.c.b16 %v3449, %v3441
    %v3690 = vpack.c.b16 %v3450, %v3442
    %v3691 = vpack.c.b16 %v3451, %v3443
    %v3692 = vpack.c.b16 %v3460, %v3452
    %v3693 = vpack.c.b16 %v3461, %v3453
    %v3694 = vpack.c.b16 %v3462, %v3454
    %v3695 = vpack.c.b16 %v3463, %v3455
    %v3696 = vpack.c.b16 %v3464, %v3456
    %v3697 = vpack.c.b16 %v3465, %v3457
    %v3698 = vpack.c.b16 %v3466, %v3458
    %v3699 = vpack.c.b16 %v3467, %v3459
    %v3700 = vpack.c.b16 %v3476, %v3468
    %v3701 = vpack.c.b16 %v3477, %v3469
    %v3702 = vpack.c.b16 %v3478, %v3470
    %v3703 = vpack.c.b16 %v3479, %v3471
    %v3704 = vpack.c.b16 %v3480, %v3472
    %v3705 = vpack.c.b16 %v3481, %v3473
    %v3706 = vpack.c.b16 %v3482, %v3474
    %v3707 = vpack.c.b16 %v3483, %v3475
    %v3708 = vpack.c.b16 %v3492, %v3484
    %v3709 = vpack.c.b16 %v3493, %v3485
    %v3710 = vpack.c.b16 %v3494, %v3486
    %v3711 = vpack.c.b16 %v3495, %v3487
    %v3712 = vpack.c.b16 %v3496, %v3488
    %v3713 = vpack.c.b16 %v3497, %v3489
    %v3714 = vpack.c.b16 %v3498, %v3490
    %v3715 = vpack.c.b16 %v3499, %v3491
    %v3716 = vpack.c.b16 %v3508, %v3500
    %v3717 = vpack.c.b16 %v3509, %v3501
    %v3718 = vpack.c.b16 %v3510, %v3502
    %v3719 = vpack.c.b16 %v3511, %v3503
    %v3720 = vpack.c.b16 %v3512, %v3504
    %v3721 = vpack.c.b16 %v3513, %v3505
    %v3722 = vpack.c.b16 %v3514, %v3506
    %v3723 = vpack.c.b16 %v3515, %v3507
    %v3724 = vpack.c.b16 %v3524, %v3516
    %v3725 = vpack.c.b16 %v3525, %v3517
    %v3726 = vpack.c.b16 %v3526, %v3518
    %v3727 = vpack.c.b16 %v3527, %v3519
    %v3728 = vpack.c.b16 %v3528, %v3520
    %v3729 = vpack.c.b16 %v3529, %v3521
    %v3730 = vpack.c.b16 %v3530, %v3522
    %v3731 = vpack.c.b16 %v3531, %v3523
    %v3732 = vpack.c.b16 %v3540, %v3532
    %v3733 = vpack.c.b16 %v3541, %v3533
    %v3734 = vpack.c.b16 %v3542, %v3534
    %v3735 = vpack.c.b16 %v3543, %v3535
    %v3736 = vpack.c.b16 %v3544, %v3536
    %v3737 = vpack.c.b16 %v3545, %v3537
    %v3738 = vpack.c.b16 %v3546, %v3538
    %v3739 = vpack.c.b16 %v3547, %v3539
    %v3740 = vpack.c.b16 %v3556, %v3548
    %v3741 = vpack.c.b16 %v3557, %v3549
    %v3742 = vpack.c.b16 %v3558, %v3550
    %v3743 = vpack.c.b16 %v3559, %v3551
    %v3744 = vpack.c.b16 %v3560, %v3552
    %v3745 = vpack.c.b16 %v3561, %v3553
    %v3746 = vpack.c.b16 %v3562, %v3554
    %v3747 = vpack.c.b16 %v3563, %v3555
    %v3748 = vpack.c.b16 %v3572, %v3564
    %v3749 = vpack.c.b16 %v3573, %v3565
    %v3750 = vpack.c.b16 %v3574, %v3566
    %v3751 = vpack.c.b16 %v3575, %v3567
    %v3752 = vpack.c.b16 %v3576, %v3568
    %v3753 = vpack.c.b16 %v3577, %v3569
    %v3754 = vpack.c.b16 %v3578, %v3570
    %v3755 = vpack.c.b16 %v3579, %v3571
    %v3756 = vpack.c.b16 %v3588, %v3580
    %v3757 = vpack.c.b16 %v3589, %v3581
    %v3758 = vpack.c.b16 %v3590, %v3582
    %v3759 = vpack.c.b16 %v3591, %v3583
    %v3760 = vpack.c.b16 %v3592, %v3584
    %v3761 = vpack.c.b16 %v3593, %v3585
    %v3762 = vpack.c.b16 %v3594, %v3586
    %v3763 = vpack.c.b16 %v3595, %v3587
    %v3764 = vpack.c.b16 %v3604, %v3596
    %v3765 = vpack.c.b16 %v3605, %v3597
    %v3766 = vpack.c.b16 %v3606, %v3598
    %v3767 = vpack.c.b16 %v3607, %v3599
    %v3768 = vpack.c.b16 %v3608, %v3600
    %v3769 = vpack.c.b16 %v3609, %v3601
    %v3770 = vpack.c.b16 %v3610, %v3602
    %v3771 = vpack.c.b16 %v3611, %v3603
    %v3772 = vpack.c.b16 %v3620, %v3612
    %v3773 = vpack.c.b16 %v3621, %v3613
    %v3774 = vpack.c.b16 %v3622, %v3614
    %v3775 = vpack.c.b16 %v3623, %v3615
    %v3776 = vpack.c.b16 %v3624, %v3616
    %v3777 = vpack.c.b16 %v3625, %v3617
    %v3778 = vpack.c.b16 %v3626, %v3618
    %v3779 = vpack.c.b16 %v3627, %v3619
    %v3780 = vpack.c.b16 %v3636, %v3628
    %v3781 = vpack.c.b16 %v3637, %v3629
    %v3782 = vpack.c.b16 %v3638, %v3630
    %v3783 = vpack.c.b16 %v3639, %v3631
    %v3784 = vpack.c.b16 %v3640, %v3632
    %v3785 = vpack.c.b16 %v3641, %v3633
    %v3786 = vpack.c.b16 %v3642, %v3634
    %v3787 = vpack.c.b16 %v3643, %v3635
    %v3788 = vpack.c.b16 %v3652, %v3644
    %v3789 = vpack.c.b16 %v3653, %v3645
    %v3790 = vpack.c.b16 %v3654, %v3646
    %v3791 = vpack.c.b16 %v3655, %v3647
    %v3792 = vpack.c.b16 %v3656, %v3648
    %v3793 = vpack.c.b16 %v3657, %v3649
    %v3794 = vpack.c.b16 %v3658, %v3650
    %v3795 = vpack.c.b16 %v3659, %v3651
    %v3796 = vpack.c.b16 %v3668, %v3660
    %v3797 = vpack.c.b16 %v3669, %v3661
    %v3798 = vpack.c.b16 %v3670, %v3662
    %v3799 = vpack.c.b16 %v3671, %v3663
    %v3800 = vpack.c.b16 %v3672, %v3664
    %v3801 = vpack.c.b16 %v3673, %v3665
    %v3802 = vpack.c.b16 %v3674, %v3666
    %v3803 = vpack.c.b16 %v3675, %v3667
    %3932 = vmatprep.subr.bf16.mxu0 %v3677
    %3933 = vmatpush1.bf16.msra.mxu0 %v3676
    %3934 = vmatprep.subr.bf16.mxu0 %v3685
    %3935 = vmatpush1.bf16.msra.mxu0 %v3684
    %3936 = vmatprep.subr.bf16.mxu0 %v3693
    %3937 = vmatpush1.bf16.msra.mxu0 %v3692
    %3938 = vmatprep.subr.bf16.mxu0 %v3701
    %3939 = vmatpush1.bf16.msra.mxu0 %v3700
    %3940 = vmatprep.subr.bf16.mxu0 %v3709
    %3941 = vmatpush1.bf16.msra.mxu0 %v3708
    %3942 = vmatprep.subr.bf16.mxu0 %v3717
    %3943 = vmatpush1.bf16.msra.mxu0 %v3716
    %3944 = vmatprep.subr.bf16.mxu0 %v3725
    %3945 = vmatpush1.bf16.msra.mxu0 %v3724
    %3946 = vmatprep.subr.bf16.mxu0 %v3733
    %3947 = vmatpush1.bf16.msra.mxu0 %v3732
    %3948 = vmatprep.subr.bf16.mxu0 %v3741
    %3949 = vmatpush1.bf16.msra.mxu0 %v3740
    %3950 = vmatprep.subr.bf16.mxu0 %v3749
    %3951 = vmatpush1.bf16.msra.mxu0 %v3748
    %3952 = vmatprep.subr.bf16.mxu0 %v3757
    %3953 = vmatpush1.bf16.msra.mxu0 %v3756
    %3954 = vmatprep.subr.bf16.mxu0 %v3765
    %3955 = vmatpush1.bf16.msra.mxu0 %v3764
    %3956 = vmatprep.subr.bf16.mxu0 %v3773
    %3957 = vmatpush1.bf16.msra.mxu0 %v3772
    %3958 = vmatprep.subr.bf16.mxu0 %v3781
    %3959 = vmatpush1.bf16.msra.mxu0 %v3780
    %3960 = vmatprep.subr.bf16.mxu0 %v3789
    %3961 = vmatpush1.bf16.msra.mxu0 %v3788
    %3962 = vmatprep.subr.bf16.mxu0 %v3797
    %3963 = vmatpush1.bf16.msra.mxu0 %v3796
    %3964 = vmatprep.mubr.bf16.mxu0 %v3161
    %3965 = vmatmul.mubr.bf16.gmra.mrb[0].mxu0 %v3160
    %v3966 = vpop.f32.mrb[0].mxu0
    %v3967 = vadd.f32 0.0, %v3966
    %v3968 = vpop.f32.mrb[0].mxu0
    %v3969 = vadd.f32 0.0, %v3968
    %v3970 = vpop.f32.mrb[0].mxu0
    %v3971 = vadd.f32 0.0, %v3970
    %v3972 = vpop.f32.mrb[0].mxu0
    %v3973 = vadd.f32 0.0, %v3972
    %3974 = vmatprep.mubr.bf16.mxu0 %v3163
    %3975 = vmatmul.mubr.bf16.gmra.mrb[0].mxu0 %v3162
    %v3976 = vpop.f32.mrb[0].mxu0
    %v3977 = vadd.f32 0.0, %v3976
    %v3978 = vpop.f32.mrb[0].mxu0
    %v3979 = vadd.f32 0.0, %v3978
    %v3980 = vpop.f32.mrb[0].mxu0
    %v3981 = vadd.f32 0.0, %v3980
    %v3982 = vpop.f32.mrb[0].mxu0
    %v3983 = vadd.f32 0.0, %v3982
    %3984 = vdwg.mxu0
    %3985 = vmatprep.subr.bf16.mxu0 %v3679
    %3986 = vmatpush1.bf16.msra.mxu0 %v3678
    %3987 = vmatprep.subr.bf16.mxu0 %v3687
    %3988 = vmatpush1.bf16.msra.mxu0 %v3686
    %3989 = vmatprep.subr.bf16.mxu0 %v3695
    %3990 = vmatpush1.bf16.msra.mxu0 %v3694
    %3991 = vmatprep.subr.bf16.mxu0 %v3703
    %3992 = vmatpush1.bf16.msra.mxu0 %v3702
    %3993 = vmatprep.subr.bf16.mxu0 %v3711
    %3994 = vmatpush1.bf16.msra.mxu0 %v3710
    %3995 = vmatprep.subr.bf16.mxu0 %v3719
    %3996 = vmatpush1.bf16.msra.mxu0 %v3718
    %3997 = vmatprep.subr.bf16.mxu0 %v3727
    %3998 = vmatpush1.bf16.msra.mxu0 %v3726
    %3999 = vmatprep.subr.bf16.mxu0 %v3735
    %4000 = vmatpush1.bf16.msra.mxu0 %v3734
    %4001 = vmatprep.subr.bf16.mxu0 %v3743
    %4002 = vmatpush1.bf16.msra.mxu0 %v3742
    %4003 = vmatprep.subr.bf16.mxu0 %v3751
    %4004 = vmatpush1.bf16.msra.mxu0 %v3750
    %4005 = vmatprep.subr.bf16.mxu0 %v3759
    %4006 = vmatpush1.bf16.msra.mxu0 %v3758
    %4007 = vmatprep.subr.bf16.mxu0 %v3767
    %4008 = vmatpush1.bf16.msra.mxu0 %v3766
    %4009 = vmatprep.subr.bf16.mxu0 %v3775
    %4010 = vmatpush1.bf16.msra.mxu0 %v3774
    %4011 = vmatprep.subr.bf16.mxu0 %v3783
    %4012 = vmatpush1.bf16.msra.mxu0 %v3782
    %4013 = vmatprep.subr.bf16.mxu0 %v3791
    %4014 = vmatpush1.bf16.msra.mxu0 %v3790
    %4015 = vmatprep.subr.bf16.mxu0 %v3799
    %4016 = vmatpush1.bf16.msra.mxu0 %v3798
    %4017 = vmatprep.mubr.bf16.mxu0 %v3161
    %4018 = vmatmul.mubr.bf16.gmra.mrb[0].mxu0 %v3160
    %v4019 = vpop.f32.mrb[0].mxu0
    %v4020 = vadd.f32 0.0, %v4019
    %v4021 = vpop.f32.mrb[0].mxu0
    %v4022 = vadd.f32 0.0, %v4021
    %v4023 = vpop.f32.mrb[0].mxu0
    %v4024 = vadd.f32 0.0, %v4023
    %v4025 = vpop.f32.mrb[0].mxu0
    %v4026 = vadd.f32 0.0, %v4025
    %4027 = vmatprep.mubr.bf16.mxu0 %v3163
    %4028 = vmatmul.mubr.bf16.gmra.mrb[0].mxu0 %v3162
    %v4029 = vpop.f32.mrb[0].mxu0
    %v4030 = vadd.f32 0.0, %v4029
    %v4031 = vpop.f32.mrb[0].mxu0
    %v4032 = vadd.f32 0.0, %v4031
    %v4033 = vpop.f32.mrb[0].mxu0
    %v4034 = vadd.f32 0.0, %v4033
    %v4035 = vpop.f32.mrb[0].mxu0
    %v4036 = vadd.f32 0.0, %v4035
    %4037 = vdwg.mxu0
    %4038 = vmatprep.subr.bf16.mxu0 %v3681
    %4039 = vmatpush1.bf16.msra.mxu0 %v3680
    %4040 = vmatprep.subr.bf16.mxu0 %v3689
    %4041 = vmatpush1.bf16.msra.mxu0 %v3688
    %4042 = vmatprep.subr.bf16.mxu0 %v3697
    %4043 = vmatpush1.bf16.msra.mxu0 %v3696
    %4044 = vmatprep.subr.bf16.mxu0 %v3705
    %4045 = vmatpush1.bf16.msra.mxu0 %v3704
    %4046 = vmatprep.subr.bf16.mxu0 %v3713
    %4047 = vmatpush1.bf16.msra.mxu0 %v3712
    %4048 = vmatprep.subr.bf16.mxu0 %v3721
    %4049 = vmatpush1.bf16.msra.mxu0 %v3720
    %4050 = vmatprep.subr.bf16.mxu0 %v3729
    %4051 = vmatpush1.bf16.msra.mxu0 %v3728
    %4052 = vmatprep.subr.bf16.mxu0 %v3737
    %4053 = vmatpush1.bf16.msra.mxu0 %v3736
    %4054 = vmatprep.subr.bf16.mxu0 %v3745
    %4055 = vmatpush1.bf16.msra.mxu0 %v3744
    %4056 = vmatprep.subr.bf16.mxu0 %v3753
    %4057 = vmatpush1.bf16.msra.mxu0 %v3752
    %4058 = vmatprep.subr.bf16.mxu0 %v3761
    %4059 = vmatpush1.bf16.msra.mxu0 %v3760
    %4060 = vmatprep.subr.bf16.mxu0 %v3769
    %4061 = vmatpush1.bf16.msra.mxu0 %v3768
    %4062 = vmatprep.subr.bf16.mxu0 %v3777
    %4063 = vmatpush1.bf16.msra.mxu0 %v3776
    %4064 = vmatprep.subr.bf16.mxu0 %v3785
    %4065 = vmatpush1.bf16.msra.mxu0 %v3784
    %4066 = vmatprep.subr.bf16.mxu0 %v3793
    %4067 = vmatpush1.bf16.msra.mxu0 %v3792
    %4068 = vmatprep.subr.bf16.mxu0 %v3801
    %4069 = vmatpush1.bf16.msra.mxu0 %v3800
    %4070 = vmatprep.mubr.bf16.mxu0 %v3161
    %4071 = vmatmul.mubr.bf16.gmra.mrb[0].mxu0 %v3160
    %v4072 = vpop.f32.mrb[0].mxu0
    %v4073 = vadd.f32 0.0, %v4072
    %v4074 = vpop.f32.mrb[0].mxu0
    %v4075 = vadd.f32 0.0, %v4074
    %v4076 = vpop.f32.mrb[0].mxu0
    %v4077 = vadd.f32 0.0, %v4076
    %v4078 = vpop.f32.mrb[0].mxu0
    %v4079 = vadd.f32 0.0, %v4078
    %4080 = vmatprep.mubr.bf16.mxu0 %v3163
    %4081 = vmatmul.mubr.bf16.gmra.mrb[0].mxu0 %v3162
    %v4082 = vpop.f32.mrb[0].mxu0
    %v4083 = vadd.f32 0.0, %v4082
    %v4084 = vpop.f32.mrb[0].mxu0
    %v4085 = vadd.f32 0.0, %v4084
    %v4086 = vpop.f32.mrb[0].mxu0
    %v4087 = vadd.f32 0.0, %v4086
    %v4088 = vpop.f32.mrb[0].mxu0
    %v4089 = vadd.f32 0.0, %v4088
    %4090 = vdwg.mxu0
    %4091 = vmatprep.subr.bf16.mxu0 %v3683
    %4092 = vmatpush1.bf16.msra.mxu0 %v3682
    %4093 = vmatprep.subr.bf16.mxu0 %v3691
    %4094 = vmatpush1.bf16.msra.mxu0 %v3690
    %4095 = vmatprep.subr.bf16.mxu0 %v3699
    %4096 = vmatpush1.bf16.msra.mxu0 %v3698
    %4097 = vmatprep.subr.bf16.mxu0 %v3707
    %4098 = vmatpush1.bf16.msra.mxu0 %v3706
    %4099 = vmatprep.subr.bf16.mxu0 %v3715
    %4100 = vmatpush1.bf16.msra.mxu0 %v3714
    %4101 = vmatprep.subr.bf16.mxu0 %v3723
    %4102 = vmatpush1.bf16.msra.mxu0 %v3722
    %4103 = vmatprep.subr.bf16.mxu0 %v3731
    %4104 = vmatpush1.bf16.msra.mxu0 %v3730
    %4105 = vmatprep.subr.bf16.mxu0 %v3739
    %4106 = vmatpush1.bf16.msra.mxu0 %v3738
    %4107 = vmatprep.subr.bf16.mxu0 %v3747
    %4108 = vmatpush1.bf16.msra.mxu0 %v3746
    %4109 = vmatprep.subr.bf16.mxu0 %v3755
    %4110 = vmatpush1.bf16.msra.mxu0 %v3754
    %4111 = vmatprep.subr.bf16.mxu0 %v3763
    %4112 = vmatpush1.bf16.msra.mxu0 %v3762
    %4113 = vmatprep.subr.bf16.mxu0 %v3771
    %4114 = vmatpush1.bf16.msra.mxu0 %v3770
    %4115 = vmatprep.subr.bf16.mxu0 %v3779
    %4116 = vmatpush1.bf16.msra.mxu0 %v3778
    %4117 = vmatprep.subr.bf16.mxu0 %v3787
    %4118 = vmatpush1.bf16.msra.mxu0 %v3786
    %4119 = vmatprep.subr.bf16.mxu0 %v3795
    %4120 = vmatpush1.bf16.msra.mxu0 %v3794
    %4121 = vmatprep.subr.bf16.mxu0 %v3803
    %4122 = vmatpush1.bf16.msra.mxu0 %v3802
    %4123 = vmatprep.mubr.bf16.mxu0 %v3161
    %4124 = vmatmul.mubr.bf16.gmra.mrb[0].mxu0 %v3160
    %v4125 = vpop.f32.mrb[0].mxu0
    %v4126 = vadd.f32 0.0, %v4125
    %v4127 = vpop.f32.mrb[0].mxu0
    %v4128 = vadd.f32 0.0, %v4127
    %v4129 = vpop.f32.mrb[0].mxu0
    %v4130 = vadd.f32 0.0, %v4129
    %v4131 = vpop.f32.mrb[0].mxu0
    %v4132 = vadd.f32 0.0, %v4131
    %4133 = vmatprep.mubr.bf16.mxu0 %v3163
    %4134 = vmatmul.mubr.bf16.gmra.mrb[0].mxu0 %v3162
    %v4135 = vpop.f32.mrb[0].mxu0
    %v4136 = vadd.f32 0.0, %v4135
    %v4137 = vpop.f32.mrb[0].mxu0
    %v4138 = vadd.f32 0.0, %v4137
    %v4139 = vpop.f32.mrb[0].mxu0
    %v4140 = vadd.f32 0.0, %v4139
    %v4141 = vpop.f32.mrb[0].mxu0
    %v4142 = vadd.f32 0.0, %v4141
    %4143 = vdwg.mxu0
    %v4144 = vmax.f32 %v3967, 0.0
    %v4145 = vmax.f32 %v3969, 0.0
    %v4146 = vmax.f32 %v4020, 0.0
    %v4147 = vmax.f32 %v4022, 0.0
    %v4148 = vmax.f32 %v4073, 0.0
    %v4149 = vmax.f32 %v4075, 0.0
    %v4150 = vmax.f32 %v4126, 0.0
    %v4151 = vmax.f32 %v4128, 0.0
    %v4152 = vmax.f32 %v3971, 0.0
    %v4153 = vmax.f32 %v3973, 0.0
    %v4154 = vmax.f32 %v4024, 0.0
    %v4155 = vmax.f32 %v4026, 0.0
    %v4156 = vmax.f32 %v4077, 0.0
    %v4157 = vmax.f32 %v4079, 0.0
    %v4158 = vmax.f32 %v4130, 0.0
    %v4159 = vmax.f32 %v4132, 0.0
    %v4160 = vmax.f32 %v3977, 0.0
    %v4161 = vmax.f32 %v3979, 0.0
    %v4162 = vmax.f32 %v4030, 0.0
    %v4163 = vmax.f32 %v4032, 0.0
    %v4164 = vmax.f32 %v4083, 0.0
    %v4165 = vmax.f32 %v4085, 0.0
    %v4166 = vmax.f32 %v4136, 0.0
    %v4167 = vmax.f32 %v4138, 0.0
    %v4168 = vmax.f32 %v3981, 0.0
    %v4169 = vmax.f32 %v3983, 0.0
    %v4170 = vmax.f32 %v4034, 0.0
    %v4171 = vmax.f32 %v4036, 0.0
    %v4172 = vmax.f32 %v4087, 0.0
    %v4173 = vmax.f32 %v4089, 0.0
    %v4174 = vmax.f32 %v4140, 0.0
    %v4175 = vmax.f32 %v4142, 0.0
    %v4176 = vpack.c.bf16 %v4152, %v4144
    %v4177 = vpack.c.bf16 %v4153, %v4145
    %v4178 = vpack.c.bf16 %v4154, %v4146
    %v4179 = vpack.c.bf16 %v4155, %v4147
    %v4180 = vpack.c.bf16 %v4156, %v4148
    %v4181 = vpack.c.bf16 %v4157, %v4149
    %v4182 = vpack.c.bf16 %v4158, %v4150
    %v4183 = vpack.c.bf16 %v4159, %v4151
    %v4184 = vpack.c.bf16 %v4168, %v4160
    %v4185 = vpack.c.bf16 %v4169, %v4161
    %v4186 = vpack.c.bf16 %v4170, %v4162
    %v4187 = vpack.c.bf16 %v4171, %v4163
    %v4188 = vpack.c.bf16 %v4172, %v4164
    %v4189 = vpack.c.bf16 %v4173, %v4165
    %v4190 = vpack.c.bf16 %v4174, %v4166
    %v4191 = vpack.c.bf16 %v4175, %v4167
    %v4192 = vld [vmem:[#allocation12] sm:$0xff]
    %v4193 = vld [vmem:[#allocation12 + $0x8] sm:$0xff]
    %v4194 = vld [vmem:[#allocation12 + $0x10] sm:$0xff]
    %v4195 = vld [vmem:[#allocation12 + $0x18] sm:$0xff]
    %v4196 = vld [vmem:[#allocation12 + $0x20] sm:$0xff]
    %v4197 = vld [vmem:[#allocation12 + $0x28] sm:$0xff]
    %v4198 = vld [vmem:[#allocation12 + $0x30] sm:$0xff]
    %v4199 = vld [vmem:[#allocation12 + $0x38] sm:$0xff]
    %v4200 = vld [vmem:[#allocation12 + $0x40] sm:$0xff]
    %v4201 = vld [vmem:[#allocation12 + $0x48] sm:$0xff]
    %v4202 = vld [vmem:[#allocation12 + $0x50] sm:$0xff]
    %v4203 = vld [vmem:[#allocation12 + $0x58] sm:$0xff]
    %v4204 = vld [vmem:[#allocation12 + $0x60] sm:$0xff]
    %v4205 = vld [vmem:[#allocation12 + $0x68] sm:$0xff]
    %v4206 = vld [vmem:[#allocation12 + $0x70] sm:$0xff]
    %v4207 = vld [vmem:[#allocation12 + $0x78] sm:$0xff]
    %v4208 = vld [vmem:[#allocation12 + $0x80] sm:$0xff]
    %v4209 = vld [vmem:[#allocation12 + $0x88] sm:$0xff]
    %v4210 = vld [vmem:[#allocation12 + $0x90] sm:$0xff]
    %v4211 = vld [vmem:[#allocation12 + $0x98] sm:$0xff]
    %v4212 = vld [vmem:[#allocation12 + $0xa0] sm:$0xff]
    %v4213 = vld [vmem:[#allocation12 + $0xa8] sm:$0xff]
    %v4214 = vld [vmem:[#allocation12 + $0xb0] sm:$0xff]
    %v4215 = vld [vmem:[#allocation12 + $0xb8] sm:$0xff]
    %v4216 = vld [vmem:[#allocation12 + $0xc0] sm:$0xff]
    %v4217 = vld [vmem:[#allocation12 + $0xc8] sm:$0xff]
    %v4218 = vld [vmem:[#allocation12 + $0xd0] sm:$0xff]
    %v4219 = vld [vmem:[#allocation12 + $0xd8] sm:$0xff]
    %v4220 = vld [vmem:[#allocation12 + $0xe0] sm:$0xff]
    %v4221 = vld [vmem:[#allocation12 + $0xe8] sm:$0xff]
    %v4222 = vld [vmem:[#allocation12 + $0xf0] sm:$0xff]
    %v4223 = vld [vmem:[#allocation12 + $0xf8] sm:$0xff]
    %v4224 = vld [vmem:[#allocation12 + $0x100] sm:$0xff]
    %v4225 = vld [vmem:[#allocation12 + $0x108] sm:$0xff]
    %v4226 = vld [vmem:[#allocation12 + $0x110] sm:$0xff]
    %v4227 = vld [vmem:[#allocation12 + $0x118] sm:$0xff]
    %v4228 = vld [vmem:[#allocation12 + $0x120] sm:$0xff]
    %v4229 = vld [vmem:[#allocation12 + $0x128] sm:$0xff]
    %v4230 = vld [vmem:[#allocation12 + $0x130] sm:$0xff]
    %v4231 = vld [vmem:[#allocation12 + $0x138] sm:$0xff]
    %v4232 = vld [vmem:[#allocation12 + $0x140] sm:$0xff]
    %v4233 = vld [vmem:[#allocation12 + $0x148] sm:$0xff]
    %v4234 = vld [vmem:[#allocation12 + $0x150] sm:$0xff]
    %v4235 = vld [vmem:[#allocation12 + $0x158] sm:$0xff]
    %v4236 = vld [vmem:[#allocation12 + $0x160] sm:$0xff]
    %v4237 = vld [vmem:[#allocation12 + $0x168] sm:$0xff]
    %v4238 = vld [vmem:[#allocation12 + $0x170] sm:$0xff]
    %v4239 = vld [vmem:[#allocation12 + $0x178] sm:$0xff]
    %v4240 = vld [vmem:[#allocation12 + $0x180] sm:$0xff]
    %v4241 = vld [vmem:[#allocation12 + $0x188] sm:$0xff]
    %v4242 = vld [vmem:[#allocation12 + $0x190] sm:$0xff]
    %v4243 = vld [vmem:[#allocation12 + $0x198] sm:$0xff]
    %v4244 = vld [vmem:[#allocation12 + $0x1a0] sm:$0xff]
    %v4245 = vld [vmem:[#allocation12 + $0x1a8] sm:$0xff]
    %v4246 = vld [vmem:[#allocation12 + $0x1b0] sm:$0xff]
    %v4247 = vld [vmem:[#allocation12 + $0x1b8] sm:$0xff]
    %v4248 = vld [vmem:[#allocation12 + $0x1c0] sm:$0xff]
    %v4249 = vld [vmem:[#allocation12 + $0x1c8] sm:$0xff]
    %v4250 = vld [vmem:[#allocation12 + $0x1d0] sm:$0xff]
    %v4251 = vld [vmem:[#allocation12 + $0x1d8] sm:$0xff]
    %v4252 = vld [vmem:[#allocation12 + $0x1e0] sm:$0xff]
    %v4253 = vld [vmem:[#allocation12 + $0x1e8] sm:$0xff]
    %v4254 = vld [vmem:[#allocation12 + $0x1f0] sm:$0xff]
    %v4255 = vld [vmem:[#allocation12 + $0x1f8] sm:$0xff]
    %v4256 = vld [vmem:[#allocation12 + $0x200] sm:$0xff]
    %v4257 = vld [vmem:[#allocation12 + $0x208] sm:$0xff]
    %v4258 = vld [vmem:[#allocation12 + $0x210] sm:$0xff]
    %v4259 = vld [vmem:[#allocation12 + $0x218] sm:$0xff]
    %v4260 = vld [vmem:[#allocation12 + $0x220] sm:$0xff]
    %v4261 = vld [vmem:[#allocation12 + $0x228] sm:$0xff]
    %v4262 = vld [vmem:[#allocation12 + $0x230] sm:$0xff]
    %v4263 = vld [vmem:[#allocation12 + $0x238] sm:$0xff]
    %v4264 = vld [vmem:[#allocation12 + $0x240] sm:$0xff]
    %v4265 = vld [vmem:[#allocation12 + $0x248] sm:$0xff]
    %v4266 = vld [vmem:[#allocation12 + $0x250] sm:$0xff]
    %v4267 = vld [vmem:[#allocation12 + $0x258] sm:$0xff]
    %v4268 = vld [vmem:[#allocation12 + $0x260] sm:$0xff]
    %v4269 = vld [vmem:[#allocation12 + $0x268] sm:$0xff]
    %v4270 = vld [vmem:[#allocation12 + $0x270] sm:$0xff]
    %v4271 = vld [vmem:[#allocation12 + $0x278] sm:$0xff]
    %v4272 = vld [vmem:[#allocation12 + $0x280] sm:$0xff]
    %v4273 = vld [vmem:[#allocation12 + $0x288] sm:$0xff]
    %v4274 = vld [vmem:[#allocation12 + $0x290] sm:$0xff]
    %v4275 = vld [vmem:[#allocation12 + $0x298] sm:$0xff]
    %v4276 = vld [vmem:[#allocation12 + $0x2a0] sm:$0xff]
    %v4277 = vld [vmem:[#allocation12 + $0x2a8] sm:$0xff]
    %v4278 = vld [vmem:[#allocation12 + $0x2b0] sm:$0xff]
    %v4279 = vld [vmem:[#allocation12 + $0x2b8] sm:$0xff]
    %v4280 = vld [vmem:[#allocation12 + $0x2c0] sm:$0xff]
    %v4281 = vld [vmem:[#allocation12 + $0x2c8] sm:$0xff]
    %v4282 = vld [vmem:[#allocation12 + $0x2d0] sm:$0xff]
    %v4283 = vld [vmem:[#allocation12 + $0x2d8] sm:$0xff]
    %v4284 = vld [vmem:[#allocation12 + $0x2e0] sm:$0xff]
    %v4285 = vld [vmem:[#allocation12 + $0x2e8] sm:$0xff]
    %v4286 = vld [vmem:[#allocation12 + $0x2f0] sm:$0xff]
    %v4287 = vld [vmem:[#allocation12 + $0x2f8] sm:$0xff]
    %v4288 = vld [vmem:[#allocation12 + $0x300] sm:$0xff]
    %v4289 = vld [vmem:[#allocation12 + $0x308] sm:$0xff]
    %v4290 = vld [vmem:[#allocation12 + $0x310] sm:$0xff]
    %v4291 = vld [vmem:[#allocation12 + $0x318] sm:$0xff]
    %v4292 = vld [vmem:[#allocation12 + $0x320] sm:$0xff]
    %v4293 = vld [vmem:[#allocation12 + $0x328] sm:$0xff]
    %v4294 = vld [vmem:[#allocation12 + $0x330] sm:$0xff]
    %v4295 = vld [vmem:[#allocation12 + $0x338] sm:$0xff]
    %v4296 = vld [vmem:[#allocation12 + $0x340] sm:$0xff]
    %v4297 = vld [vmem:[#allocation12 + $0x348] sm:$0xff]
    %v4298 = vld [vmem:[#allocation12 + $0x350] sm:$0xff]
    %v4299 = vld [vmem:[#allocation12 + $0x358] sm:$0xff]
    %v4300 = vld [vmem:[#allocation12 + $0x360] sm:$0xff]
    %v4301 = vld [vmem:[#allocation12 + $0x368] sm:$0xff]
    %v4302 = vld [vmem:[#allocation12 + $0x370] sm:$0xff]
    %v4303 = vld [vmem:[#allocation12 + $0x378] sm:$0xff]
    %v4304 = vld [vmem:[#allocation12 + $0x380] sm:$0xff]
    %v4305 = vld [vmem:[#allocation12 + $0x388] sm:$0xff]
    %v4306 = vld [vmem:[#allocation12 + $0x390] sm:$0xff]
    %v4307 = vld [vmem:[#allocation12 + $0x398] sm:$0xff]
    %v4308 = vld [vmem:[#allocation12 + $0x3a0] sm:$0xff]
    %v4309 = vld [vmem:[#allocation12 + $0x3a8] sm:$0xff]
    %v4310 = vld [vmem:[#allocation12 + $0x3b0] sm:$0xff]
    %v4311 = vld [vmem:[#allocation12 + $0x3b8] sm:$0xff]
    %v4312 = vld [vmem:[#allocation12 + $0x3c0] sm:$0xff]
    %v4313 = vld [vmem:[#allocation12 + $0x3c8] sm:$0xff]
    %v4314 = vld [vmem:[#allocation12 + $0x3d0] sm:$0xff]
    %v4315 = vld [vmem:[#allocation12 + $0x3d8] sm:$0xff]
    %v4316 = vld [vmem:[#allocation12 + $0x3e0] sm:$0xff]
    %v4317 = vld [vmem:[#allocation12 + $0x3e8] sm:$0xff]
    %v4318 = vld [vmem:[#allocation12 + $0x3f0] sm:$0xff]
    %v4319 = vld [vmem:[#allocation12 + $0x3f8] sm:$0xff]
    %v4448 = vunpack.c.l.b16 %v4192
    %v4449 = vunpack.c.h.b16 %v4192
    %v4450 = vunpack.c.l.b16 %v4193
    %v4451 = vunpack.c.h.b16 %v4193
    %v4452 = vunpack.c.l.b16 %v4194
    %v4453 = vunpack.c.h.b16 %v4194
    %v4454 = vunpack.c.l.b16 %v4195
    %v4455 = vunpack.c.h.b16 %v4195
    %v4456 = vunpack.c.l.b16 %v4196
    %v4457 = vunpack.c.h.b16 %v4196
    %v4458 = vunpack.c.l.b16 %v4197
    %v4459 = vunpack.c.h.b16 %v4197
    %v4460 = vunpack.c.l.b16 %v4198
    %v4461 = vunpack.c.h.b16 %v4198
    %v4462 = vunpack.c.l.b16 %v4199
    %v4463 = vunpack.c.h.b16 %v4199
    %v4464 = vunpack.c.l.b16 %v4200
    %v4465 = vunpack.c.h.b16 %v4200
    %v4466 = vunpack.c.l.b16 %v4201
    %v4467 = vunpack.c.h.b16 %v4201
    %v4468 = vunpack.c.l.b16 %v4202
    %v4469 = vunpack.c.h.b16 %v4202
    %v4470 = vunpack.c.l.b16 %v4203
    %v4471 = vunpack.c.h.b16 %v4203
    %v4472 = vunpack.c.l.b16 %v4204
    %v4473 = vunpack.c.h.b16 %v4204
    %v4474 = vunpack.c.l.b16 %v4205
    %v4475 = vunpack.c.h.b16 %v4205
    %v4476 = vunpack.c.l.b16 %v4206
    %v4477 = vunpack.c.h.b16 %v4206
    %v4478 = vunpack.c.l.b16 %v4207
    %v4479 = vunpack.c.h.b16 %v4207
    %v4480 = vunpack.c.l.b16 %v4208
    %v4481 = vunpack.c.h.b16 %v4208
    %v4482 = vunpack.c.l.b16 %v4209
    %v4483 = vunpack.c.h.b16 %v4209
    %v4484 = vunpack.c.l.b16 %v4210
    %v4485 = vunpack.c.h.b16 %v4210
    %v4486 = vunpack.c.l.b16 %v4211
    %v4487 = vunpack.c.h.b16 %v4211
    %v4488 = vunpack.c.l.b16 %v4212
    %v4489 = vunpack.c.h.b16 %v4212
    %v4490 = vunpack.c.l.b16 %v4213
    %v4491 = vunpack.c.h.b16 %v4213
    %v4492 = vunpack.c.l.b16 %v4214
    %v4493 = vunpack.c.h.b16 %v4214
    %v4494 = vunpack.c.l.b16 %v4215
    %v4495 = vunpack.c.h.b16 %v4215
    %v4496 = vunpack.c.l.b16 %v4216
    %v4497 = vunpack.c.h.b16 %v4216
    %v4498 = vunpack.c.l.b16 %v4217
    %v4499 = vunpack.c.h.b16 %v4217
    %v4500 = vunpack.c.l.b16 %v4218
    %v4501 = vunpack.c.h.b16 %v4218
    %v4502 = vunpack.c.l.b16 %v4219
    %v4503 = vunpack.c.h.b16 %v4219
    %v4504 = vunpack.c.l.b16 %v4220
    %v4505 = vunpack.c.h.b16 %v4220
    %v4506 = vunpack.c.l.b16 %v4221
    %v4507 = vunpack.c.h.b16 %v4221
    %v4508 = vunpack.c.l.b16 %v4222
    %v4509 = vunpack.c.h.b16 %v4222
    %v4510 = vunpack.c.l.b16 %v4223
    %v4511 = vunpack.c.h.b16 %v4223
    %v4512 = vunpack.c.l.b16 %v4224
    %v4513 = vunpack.c.h.b16 %v4224
    %v4514 = vunpack.c.l.b16 %v4225
    %v4515 = vunpack.c.h.b16 %v4225
    %v4516 = vunpack.c.l.b16 %v4226
    %v4517 = vunpack.c.h.b16 %v4226
    %v4518 = vunpack.c.l.b16 %v4227
    %v4519 = vunpack.c.h.b16 %v4227
    %v4520 = vunpack.c.l.b16 %v4228
    %v4521 = vunpack.c.h.b16 %v4228
    %v4522 = vunpack.c.l.b16 %v4229
    %v4523 = vunpack.c.h.b16 %v4229
    %v4524 = vunpack.c.l.b16 %v4230
    %v4525 = vunpack.c.h.b16 %v4230
    %v4526 = vunpack.c.l.b16 %v4231
    %v4527 = vunpack.c.h.b16 %v4231
    %v4528 = vunpack.c.l.b16 %v4232
    %v4529 = vunpack.c.h.b16 %v4232
    %v4530 = vunpack.c.l.b16 %v4233
    %v4531 = vunpack.c.h.b16 %v4233
    %v4532 = vunpack.c.l.b16 %v4234
    %v4533 = vunpack.c.h.b16 %v4234
    %v4534 = vunpack.c.l.b16 %v4235
    %v4535 = vunpack.c.h.b16 %v4235
    %v4536 = vunpack.c.l.b16 %v4236
    %v4537 = vunpack.c.h.b16 %v4236
    %v4538 = vunpack.c.l.b16 %v4237
    %v4539 = vunpack.c.h.b16 %v4237
    %v4540 = vunpack.c.l.b16 %v4238
    %v4541 = vunpack.c.h.b16 %v4238
    %v4542 = vunpack.c.l.b16 %v4239
    %v4543 = vunpack.c.h.b16 %v4239
    %v4544 = vunpack.c.l.b16 %v4240
    %v4545 = vunpack.c.h.b16 %v4240
    %v4546 = vunpack.c.l.b16 %v4241
    %v4547 = vunpack.c.h.b16 %v4241
    %v4548 = vunpack.c.l.b16 %v4242
    %v4549 = vunpack.c.h.b16 %v4242
    %v4550 = vunpack.c.l.b16 %v4243
    %v4551 = vunpack.c.h.b16 %v4243
    %v4552 = vunpack.c.l.b16 %v4244
    %v4553 = vunpack.c.h.b16 %v4244
    %v4554 = vunpack.c.l.b16 %v4245
    %v4555 = vunpack.c.h.b16 %v4245
    %v4556 = vunpack.c.l.b16 %v4246
    %v4557 = vunpack.c.h.b16 %v4246
    %v4558 = vunpack.c.l.b16 %v4247
    %v4559 = vunpack.c.h.b16 %v4247
    %v4560 = vunpack.c.l.b16 %v4248
    %v4561 = vunpack.c.h.b16 %v4248
    %v4562 = vunpack.c.l.b16 %v4249
    %v4563 = vunpack.c.h.b16 %v4249
    %v4564 = vunpack.c.l.b16 %v4250
    %v4565 = vunpack.c.h.b16 %v4250
    %v4566 = vunpack.c.l.b16 %v4251
    %v4567 = vunpack.c.h.b16 %v4251
    %v4568 = vunpack.c.l.b16 %v4252
    %v4569 = vunpack.c.h.b16 %v4252
    %v4570 = vunpack.c.l.b16 %v4253
    %v4571 = vunpack.c.h.b16 %v4253
    %v4572 = vunpack.c.l.b16 %v4254
    %v4573 = vunpack.c.h.b16 %v4254
    %v4574 = vunpack.c.l.b16 %v4255
    %v4575 = vunpack.c.h.b16 %v4255
    %v4576 = vunpack.c.l.b16 %v4256
    %v4577 = vunpack.c.h.b16 %v4256
    %v4578 = vunpack.c.l.b16 %v4257
    %v4579 = vunpack.c.h.b16 %v4257
    %v4580 = vunpack.c.l.b16 %v4258
    %v4581 = vunpack.c.h.b16 %v4258
    %v4582 = vunpack.c.l.b16 %v4259
    %v4583 = vunpack.c.h.b16 %v4259
    %v4584 = vunpack.c.l.b16 %v4260
    %v4585 = vunpack.c.h.b16 %v4260
    %v4586 = vunpack.c.l.b16 %v4261
    %v4587 = vunpack.c.h.b16 %v4261
    %v4588 = vunpack.c.l.b16 %v4262
    %v4589 = vunpack.c.h.b16 %v4262
    %v4590 = vunpack.c.l.b16 %v4263
    %v4591 = vunpack.c.h.b16 %v4263
    %v4592 = vunpack.c.l.b16 %v4264
    %v4593 = vunpack.c.h.b16 %v4264
    %v4594 = vunpack.c.l.b16 %v4265
    %v4595 = vunpack.c.h.b16 %v4265
    %v4596 = vunpack.c.l.b16 %v4266
    %v4597 = vunpack.c.h.b16 %v4266
    %v4598 = vunpack.c.l.b16 %v4267
    %v4599 = vunpack.c.h.b16 %v4267
    %v4600 = vunpack.c.l.b16 %v4268
    %v4601 = vunpack.c.h.b16 %v4268
    %v4602 = vunpack.c.l.b16 %v4269
    %v4603 = vunpack.c.h.b16 %v4269
    %v4604 = vunpack.c.l.b16 %v4270
    %v4605 = vunpack.c.h.b16 %v4270
    %v4606 = vunpack.c.l.b16 %v4271
    %v4607 = vunpack.c.h.b16 %v4271
    %v4608 = vunpack.c.l.b16 %v4272
    %v4609 = vunpack.c.h.b16 %v4272
    %v4610 = vunpack.c.l.b16 %v4273
    %v4611 = vunpack.c.h.b16 %v4273
    %v4612 = vunpack.c.l.b16 %v4274
    %v4613 = vunpack.c.h.b16 %v4274
    %v4614 = vunpack.c.l.b16 %v4275
    %v4615 = vunpack.c.h.b16 %v4275
    %v4616 = vunpack.c.l.b16 %v4276
    %v4617 = vunpack.c.h.b16 %v4276
    %v4618 = vunpack.c.l.b16 %v4277
    %v4619 = vunpack.c.h.b16 %v4277
    %v4620 = vunpack.c.l.b16 %v4278
    %v4621 = vunpack.c.h.b16 %v4278
    %v4622 = vunpack.c.l.b16 %v4279
    %v4623 = vunpack.c.h.b16 %v4279
    %v4624 = vunpack.c.l.b16 %v4280
    %v4625 = vunpack.c.h.b16 %v4280
    %v4626 = vunpack.c.l.b16 %v4281
    %v4627 = vunpack.c.h.b16 %v4281
    %v4628 = vunpack.c.l.b16 %v4282
    %v4629 = vunpack.c.h.b16 %v4282
    %v4630 = vunpack.c.l.b16 %v4283
    %v4631 = vunpack.c.h.b16 %v4283
    %v4632 = vunpack.c.l.b16 %v4284
    %v4633 = vunpack.c.h.b16 %v4284
    %v4634 = vunpack.c.l.b16 %v4285
    %v4635 = vunpack.c.h.b16 %v4285
    %v4636 = vunpack.c.l.b16 %v4286
    %v4637 = vunpack.c.h.b16 %v4286
    %v4638 = vunpack.c.l.b16 %v4287
    %v4639 = vunpack.c.h.b16 %v4287
    %v4640 = vunpack.c.l.b16 %v4288
    %v4641 = vunpack.c.h.b16 %v4288
    %v4642 = vunpack.c.l.b16 %v4289
    %v4643 = vunpack.c.h.b16 %v4289
    %v4644 = vunpack.c.l.b16 %v4290
    %v4645 = vunpack.c.h.b16 %v4290
    %v4646 = vunpack.c.l.b16 %v4291
    %v4647 = vunpack.c.h.b16 %v4291
    %v4648 = vunpack.c.l.b16 %v4292
    %v4649 = vunpack.c.h.b16 %v4292
    %v4650 = vunpack.c.l.b16 %v4293
    %v4651 = vunpack.c.h.b16 %v4293
    %v4652 = vunpack.c.l.b16 %v4294
    %v4653 = vunpack.c.h.b16 %v4294
    %v4654 = vunpack.c.l.b16 %v4295
    %v4655 = vunpack.c.h.b16 %v4295
    %v4656 = vunpack.c.l.b16 %v4296
    %v4657 = vunpack.c.h.b16 %v4296
    %v4658 = vunpack.c.l.b16 %v4297
    %v4659 = vunpack.c.h.b16 %v4297
    %v4660 = vunpack.c.l.b16 %v4298
    %v4661 = vunpack.c.h.b16 %v4298
    %v4662 = vunpack.c.l.b16 %v4299
    %v4663 = vunpack.c.h.b16 %v4299
    %v4664 = vunpack.c.l.b16 %v4300
    %v4665 = vunpack.c.h.b16 %v4300
    %v4666 = vunpack.c.l.b16 %v4301
    %v4667 = vunpack.c.h.b16 %v4301
    %v4668 = vunpack.c.l.b16 %v4302
    %v4669 = vunpack.c.h.b16 %v4302
    %v4670 = vunpack.c.l.b16 %v4303
    %v4671 = vunpack.c.h.b16 %v4303
    %v4672 = vunpack.c.l.b16 %v4304
    %v4673 = vunpack.c.h.b16 %v4304
    %v4674 = vunpack.c.l.b16 %v4305
    %v4675 = vunpack.c.h.b16 %v4305
    %v4676 = vunpack.c.l.b16 %v4306
    %v4677 = vunpack.c.h.b16 %v4306
    %v4678 = vunpack.c.l.b16 %v4307
    %v4679 = vunpack.c.h.b16 %v4307
    %v4680 = vunpack.c.l.b16 %v4308
    %v4681 = vunpack.c.h.b16 %v4308
    %v4682 = vunpack.c.l.b16 %v4309
    %v4683 = vunpack.c.h.b16 %v4309
    %v4684 = vunpack.c.l.b16 %v4310
    %v4685 = vunpack.c.h.b16 %v4310
    %v4686 = vunpack.c.l.b16 %v4311
    %v4687 = vunpack.c.h.b16 %v4311
    %v4688 = vunpack.c.l.b16 %v4312
    %v4689 = vunpack.c.h.b16 %v4312
    %v4690 = vunpack.c.l.b16 %v4313
    %v4691 = vunpack.c.h.b16 %v4313
    %v4692 = vunpack.c.l.b16 %v4314
    %v4693 = vunpack.c.h.b16 %v4314
    %v4694 = vunpack.c.l.b16 %v4315
    %v4695 = vunpack.c.h.b16 %v4315
    %v4696 = vunpack.c.l.b16 %v4316
    %v4697 = vunpack.c.h.b16 %v4316
    %v4698 = vunpack.c.l.b16 %v4317
    %v4699 = vunpack.c.h.b16 %v4317
    %v4700 = vunpack.c.l.b16 %v4318
    %v4701 = vunpack.c.h.b16 %v4318
    %v4702 = vunpack.c.l.b16 %v4319
    %v4703 = vunpack.c.h.b16 %v4319
    %v4704 = vpack.c.b16 %v4450, %v4448
    %v4705 = vpack.c.b16 %v4451, %v4449
    %v4706 = vpack.c.b16 %v4454, %v4452
    %v4707 = vpack.c.b16 %v4455, %v4453
    %v4708 = vpack.c.b16 %v4458, %v4456
    %v4709 = vpack.c.b16 %v4459, %v4457
    %v4710 = vpack.c.b16 %v4462, %v4460
    %v4711 = vpack.c.b16 %v4463, %v4461
    %v4712 = vpack.c.b16 %v4466, %v4464
    %v4713 = vpack.c.b16 %v4467, %v4465
    %v4714 = vpack.c.b16 %v4470, %v4468
    %v4715 = vpack.c.b16 %v4471, %v4469
    %v4716 = vpack.c.b16 %v4474, %v4472
    %v4717 = vpack.c.b16 %v4475, %v4473
    %v4718 = vpack.c.b16 %v4478, %v4476
    %v4719 = vpack.c.b16 %v4479, %v4477
    %v4720 = vpack.c.b16 %v4482, %v4480
    %v4721 = vpack.c.b16 %v4483, %v4481
    %v4722 = vpack.c.b16 %v4486, %v4484
    %v4723 = vpack.c.b16 %v4487, %v4485
    %v4724 = vpack.c.b16 %v4490, %v4488
    %v4725 = vpack.c.b16 %v4491, %v4489
    %v4726 = vpack.c.b16 %v4494, %v4492
    %v4727 = vpack.c.b16 %v4495, %v4493
    %v4728 = vpack.c.b16 %v4498, %v4496
    %v4729 = vpack.c.b16 %v4499, %v4497
    %v4730 = vpack.c.b16 %v4502, %v4500
    %v4731 = vpack.c.b16 %v4503, %v4501
    %v4732 = vpack.c.b16 %v4506, %v4504
    %v4733 = vpack.c.b16 %v4507, %v4505
    %v4734 = vpack.c.b16 %v4510, %v4508
    %v4735 = vpack.c.b16 %v4511, %v4509
    %v4736 = vpack.c.b16 %v4514, %v4512
    %v4737 = vpack.c.b16 %v4515, %v4513
    %v4738 = vpack.c.b16 %v4518, %v4516
    %v4739 = vpack.c.b16 %v4519, %v4517
    %v4740 = vpack.c.b16 %v4522, %v4520
    %v4741 = vpack.c.b16 %v4523, %v4521
    %v4742 = vpack.c.b16 %v4526, %v4524
    %v4743 = vpack.c.b16 %v4527, %v4525
    %v4744 = vpack.c.b16 %v4530, %v4528
    %v4745 = vpack.c.b16 %v4531, %v4529
    %v4746 = vpack.c.b16 %v4534, %v4532
    %v4747 = vpack.c.b16 %v4535, %v4533
    %v4748 = vpack.c.b16 %v4538, %v4536
    %v4749 = vpack.c.b16 %v4539, %v4537
    %v4750 = vpack.c.b16 %v4542, %v4540
    %v4751 = vpack.c.b16 %v4543, %v4541
    %v4752 = vpack.c.b16 %v4546, %v4544
    %v4753 = vpack.c.b16 %v4547, %v4545
    %v4754 = vpack.c.b16 %v4550, %v4548
    %v4755 = vpack.c.b16 %v4551, %v4549
    %v4756 = vpack.c.b16 %v4554, %v4552
    %v4757 = vpack.c.b16 %v4555, %v4553
    %v4758 = vpack.c.b16 %v4558, %v4556
    %v4759 = vpack.c.b16 %v4559, %v4557
    %v4760 = vpack.c.b16 %v4562, %v4560
    %v4761 = vpack.c.b16 %v4563, %v4561
    %v4762 = vpack.c.b16 %v4566, %v4564
    %v4763 = vpack.c.b16 %v4567, %v4565
    %v4764 = vpack.c.b16 %v4570, %v4568
    %v4765 = vpack.c.b16 %v4571, %v4569
    %v4766 = vpack.c.b16 %v4574, %v4572
    %v4767 = vpack.c.b16 %v4575, %v4573
    %v4768 = vpack.c.b16 %v4578, %v4576
    %v4769 = vpack.c.b16 %v4579, %v4577
    %v4770 = vpack.c.b16 %v4582, %v4580
    %v4771 = vpack.c.b16 %v4583, %v4581
    %v4772 = vpack.c.b16 %v4586, %v4584
    %v4773 = vpack.c.b16 %v4587, %v4585
    %v4774 = vpack.c.b16 %v4590, %v4588
    %v4775 = vpack.c.b16 %v4591, %v4589
    %v4776 = vpack.c.b16 %v4594, %v4592
    %v4777 = vpack.c.b16 %v4595, %v4593
    %v4778 = vpack.c.b16 %v4598, %v4596
    %v4779 = vpack.c.b16 %v4599, %v4597
    %v4780 = vpack.c.b16 %v4602, %v4600
    %v4781 = vpack.c.b16 %v4603, %v4601
    %v4782 = vpack.c.b16 %v4606, %v4604
    %v4783 = vpack.c.b16 %v4607, %v4605
    %v4784 = vpack.c.b16 %v4610, %v4608
    %v4785 = vpack.c.b16 %v4611, %v4609
    %v4786 = vpack.c.b16 %v4614, %v4612
    %v4787 = vpack.c.b16 %v4615, %v4613
    %v4788 = vpack.c.b16 %v4618, %v4616
    %v4789 = vpack.c.b16 %v4619, %v4617
    %v4790 = vpack.c.b16 %v4622, %v4620
    %v4791 = vpack.c.b16 %v4623, %v4621
    %v4792 = vpack.c.b16 %v4626, %v4624
    %v4793 = vpack.c.b16 %v4627, %v4625
    %v4794 = vpack.c.b16 %v4630, %v4628
    %v4795 = vpack.c.b16 %v4631, %v4629
    %v4796 = vpack.c.b16 %v4634, %v4632
    %v4797 = vpack.c.b16 %v4635, %v4633
    %v4798 = vpack.c.b16 %v4638, %v4636
    %v4799 = vpack.c.b16 %v4639, %v4637
    %v4800 = vpack.c.b16 %v4642, %v4640
    %v4801 = vpack.c.b16 %v4643, %v4641
    %v4802 = vpack.c.b16 %v4646, %v4644
    %v4803 = vpack.c.b16 %v4647, %v4645
    %v4804 = vpack.c.b16 %v4650, %v4648
    %v4805 = vpack.c.b16 %v4651, %v4649
    %v4806 = vpack.c.b16 %v4654, %v4652
    %v4807 = vpack.c.b16 %v4655, %v4653
    %v4808 = vpack.c.b16 %v4658, %v4656
    %v4809 = vpack.c.b16 %v4659, %v4657
    %v4810 = vpack.c.b16 %v4662, %v4660
    %v4811 = vpack.c.b16 %v4663, %v4661
    %v4812 = vpack.c.b16 %v4666, %v4664
    %v4813 = vpack.c.b16 %v4667, %v4665
    %v4814 = vpack.c.b16 %v4670, %v4668
    %v4815 = vpack.c.b16 %v4671, %v4669
    %v4816 = vpack.c.b16 %v4674, %v4672
    %v4817 = vpack.c.b16 %v4675, %v4673
    %v4818 = vpack.c.b16 %v4678, %v4676
    %v4819 = vpack.c.b16 %v4679, %v4677
    %v4820 = vpack.c.b16 %v4682, %v4680
    %v4821 = vpack.c.b16 %v4683, %v4681
    %v4822 = vpack.c.b16 %v4686, %v4684
    %v4823 = vpack.c.b16 %v4687, %v4685
    %v4824 = vpack.c.b16 %v4690, %v4688
    %v4825 = vpack.c.b16 %v4691, %v4689
    %v4826 = vpack.c.b16 %v4694, %v4692
    %v4827 = vpack.c.b16 %v4695, %v4693
    %v4828 = vpack.c.b16 %v4698, %v4696
    %v4829 = vpack.c.b16 %v4699, %v4697
    %v4830 = vpack.c.b16 %v4702, %v4700
    %v4831 = vpack.c.b16 %v4703, %v4701
    %4960 = vmatprep.subr.bf16.mxu0 %v4705
    %4961 = vmatpush1.bf16.msra.mxu0 %v4704
    %4962 = vmatprep.subr.bf16.mxu0 %v4707
    %4963 = vmatpush1.bf16.msra.mxu0 %v4706
    %4964 = vmatprep.subr.bf16.mxu0 %v4709
    %4965 = vmatpush1.bf16.msra.mxu0 %v4708
    %4966 = vmatprep.subr.bf16.mxu0 %v4711
    %4967 = vmatpush1.bf16.msra.mxu0 %v4710
    %4968 = vmatprep.subr.bf16.mxu0 %v4713
    %4969 = vmatpush1.bf16.msra.mxu0 %v4712
    %4970 = vmatprep.subr.bf16.mxu0 %v4715
    %4971 = vmatpush1.bf16.msra.mxu0 %v4714
    %4972 = vmatprep.subr.bf16.mxu0 %v4717
    %4973 = vmatpush1.bf16.msra.mxu0 %v4716
    %4974 = vmatprep.subr.bf16.mxu0 %v4719
    %4975 = vmatpush1.bf16.msra.mxu0 %v4718
    %4976 = vmatprep.subr.bf16.mxu0 %v4721
    %4977 = vmatpush1.bf16.msra.mxu0 %v4720
    %4978 = vmatprep.subr.bf16.mxu0 %v4723
    %4979 = vmatpush1.bf16.msra.mxu0 %v4722
    %4980 = vmatprep.subr.bf16.mxu0 %v4725
    %4981 = vmatpush1.bf16.msra.mxu0 %v4724
    %4982 = vmatprep.subr.bf16.mxu0 %v4727
    %4983 = vmatpush1.bf16.msra.mxu0 %v4726
    %4984 = vmatprep.subr.bf16.mxu0 %v4729
    %4985 = vmatpush1.bf16.msra.mxu0 %v4728
    %4986 = vmatprep.subr.bf16.mxu0 %v4731
    %4987 = vmatpush1.bf16.msra.mxu0 %v4730
    %4988 = vmatprep.subr.bf16.mxu0 %v4733
    %4989 = vmatpush1.bf16.msra.mxu0 %v4732
    %4990 = vmatprep.subr.bf16.mxu0 %v4735
    %4991 = vmatpush1.bf16.msra.mxu0 %v4734
    %4992 = vmatprep.mubr.bf16.mxu0 %v4177
    %4993 = vmatmul.mubr.bf16.gmra.mrb[0].mxu0 %v4176
    %v4994 = vpop.f32.mrb[0].mxu0
    %v4995 = vadd.f32 0.0, %v4994
    %v4996 = vpop.f32.mrb[0].mxu0
    %v4997 = vadd.f32 0.0, %v4996
    %v4998 = vpop.f32.mrb[0].mxu0
    %v4999 = vadd.f32 0.0, %v4998
    %v5000 = vpop.f32.mrb[0].mxu0
    %v5001 = vadd.f32 0.0, %v5000
    %5002 = vmatprep.mubr.bf16.mxu0 %v4185
    %5003 = vmatmul.mubr.bf16.gmra.mrb[0].mxu0 %v4184
    %v5004 = vpop.f32.mrb[0].mxu0
    %v5005 = vadd.f32 0.0, %v5004
    %v5006 = vpop.f32.mrb[0].mxu0
    %v5007 = vadd.f32 0.0, %v5006
    %v5008 = vpop.f32.mrb[0].mxu0
    %v5009 = vadd.f32 0.0, %v5008
    %v5010 = vpop.f32.mrb[0].mxu0
    %v5011 = vadd.f32 0.0, %v5010
    %5012 = vdwg.mxu0
    %5013 = vmatprep.subr.bf16.mxu0 %v4737
    %5014 = vmatpush1.bf16.msra.mxu0 %v4736
    %5015 = vmatprep.subr.bf16.mxu0 %v4739
    %5016 = vmatpush1.bf16.msra.mxu0 %v4738
    %5017 = vmatprep.subr.bf16.mxu0 %v4741
    %5018 = vmatpush1.bf16.msra.mxu0 %v4740
    %5019 = vmatprep.subr.bf16.mxu0 %v4743
    %5020 = vmatpush1.bf16.msra.mxu0 %v4742
    %5021 = vmatprep.subr.bf16.mxu0 %v4745
    %5022 = vmatpush1.bf16.msra.mxu0 %v4744
    %5023 = vmatprep.subr.bf16.mxu0 %v4747
    %5024 = vmatpush1.bf16.msra.mxu0 %v4746
    %5025 = vmatprep.subr.bf16.mxu0 %v4749
    %5026 = vmatpush1.bf16.msra.mxu0 %v4748
    %5027 = vmatprep.subr.bf16.mxu0 %v4751
    %5028 = vmatpush1.bf16.msra.mxu0 %v4750
    %5029 = vmatprep.subr.bf16.mxu0 %v4753
    %5030 = vmatpush1.bf16.msra.mxu0 %v4752
    %5031 = vmatprep.subr.bf16.mxu0 %v4755
    %5032 = vmatpush1.bf16.msra.mxu0 %v4754
    %5033 = vmatprep.subr.bf16.mxu0 %v4757
    %5034 = vmatpush1.bf16.msra.mxu0 %v4756
    %5035 = vmatprep.subr.bf16.mxu0 %v4759
    %5036 = vmatpush1.bf16.msra.mxu0 %v4758
    %5037 = vmatprep.subr.bf16.mxu0 %v4761
    %5038 = vmatpush1.bf16.msra.mxu0 %v4760
    %5039 = vmatprep.subr.bf16.mxu0 %v4763
    %5040 = vmatpush1.bf16.msra.mxu0 %v4762
    %5041 = vmatprep.subr.bf16.mxu0 %v4765
    %5042 = vmatpush1.bf16.msra.mxu0 %v4764
    %5043 = vmatprep.subr.bf16.mxu0 %v4767
    %5044 = vmatpush1.bf16.msra.mxu0 %v4766
    %5045 = vmatprep.mubr.bf16.mxu0 %v4179
    %5046 = vmatmul.mubr.bf16.gmra.mrb[0].mxu0 %v4178
    %v5047 = vpop.f32.mrb[0].mxu0
    %v5048 = vadd.f32 %v4995, %v5047
    %v5049 = vpop.f32.mrb[0].mxu0
    %v5050 = vadd.f32 %v4997, %v5049
    %v5051 = vpop.f32.mrb[0].mxu0
    %v5052 = vadd.f32 %v4999, %v5051
    %v5053 = vpop.f32.mrb[0].mxu0
    %v5054 = vadd.f32 %v5001, %v5053
    %5055 = vmatprep.mubr.bf16.mxu0 %v4187
    %5056 = vmatmul.mubr.bf16.gmra.mrb[0].mxu0 %v4186
    %v5057 = vpop.f32.mrb[0].mxu0
    %v5058 = vadd.f32 %v5005, %v5057
    %v5059 = vpop.f32.mrb[0].mxu0
    %v5060 = vadd.f32 %v5007, %v5059
    %v5061 = vpop.f32.mrb[0].mxu0
    %v5062 = vadd.f32 %v5009, %v5061
    %v5063 = vpop.f32.mrb[0].mxu0
    %v5064 = vadd.f32 %v5011, %v5063
    %5065 = vdwg.mxu0
    %5066 = vmatprep.subr.bf16.mxu0 %v4769
    %5067 = vmatpush1.bf16.msra.mxu0 %v4768
    %5068 = vmatprep.subr.bf16.mxu0 %v4771
    %5069 = vmatpush1.bf16.msra.mxu0 %v4770
    %5070 = vmatprep.subr.bf16.mxu0 %v4773
    %5071 = vmatpush1.bf16.msra.mxu0 %v4772
    %5072 = vmatprep.subr.bf16.mxu0 %v4775
    %5073 = vmatpush1.bf16.msra.mxu0 %v4774
    %5074 = vmatprep.subr.bf16.mxu0 %v4777
    %5075 = vmatpush1.bf16.msra.mxu0 %v4776
    %5076 = vmatprep.subr.bf16.mxu0 %v4779
    %5077 = vmatpush1.bf16.msra.mxu0 %v4778
    %5078 = vmatprep.subr.bf16.mxu0 %v4781
    %5079 = vmatpush1.bf16.msra.mxu0 %v4780
    %5080 = vmatprep.subr.bf16.mxu0 %v4783
    %5081 = vmatpush1.bf16.msra.mxu0 %v4782
    %5082 = vmatprep.subr.bf16.mxu0 %v4785
    %5083 = vmatpush1.bf16.msra.mxu0 %v4784
    %5084 = vmatprep.subr.bf16.mxu0 %v4787
    %5085 = vmatpush1.bf16.msra.mxu0 %v4786
    %5086 = vmatprep.subr.bf16.mxu0 %v4789
    %5087 = vmatpush1.bf16.msra.mxu0 %v4788
    %5088 = vmatprep.subr.bf16.mxu0 %v4791
    %5089 = vmatpush1.bf16.msra.mxu0 %v4790
    %5090 = vmatprep.subr.bf16.mxu0 %v4793
    %5091 = vmatpush1.bf16.msra.mxu0 %v4792
    %5092 = vmatprep.subr.bf16.mxu0 %v4795
    %5093 = vmatpush1.bf16.msra.mxu0 %v4794
    %5094 = vmatprep.subr.bf16.mxu0 %v4797
    %5095 = vmatpush1.bf16.msra.mxu0 %v4796
    %5096 = vmatprep.subr.bf16.mxu0 %v4799
    %5097 = vmatpush1.bf16.msra.mxu0 %v4798
    %5098 = vmatprep.mubr.bf16.mxu0 %v4181
    %5099 = vmatmul.mubr.bf16.gmra.mrb[0].mxu0 %v4180
    %v5100 = vpop.f32.mrb[0].mxu0
    %v5101 = vadd.f32 %v5048, %v5100
    %v5102 = vpop.f32.mrb[0].mxu0
    %v5103 = vadd.f32 %v5050, %v5102
    %v5104 = vpop.f32.mrb[0].mxu0
    %v5105 = vadd.f32 %v5052, %v5104
    %v5106 = vpop.f32.mrb[0].mxu0
    %v5107 = vadd.f32 %v5054, %v5106
    %5108 = vmatprep.mubr.bf16.mxu0 %v4189
    %5109 = vmatmul.mubr.bf16.gmra.mrb[0].mxu0 %v4188
    %v5110 = vpop.f32.mrb[0].mxu0
    %v5111 = vadd.f32 %v5058, %v5110
    %v5112 = vpop.f32.mrb[0].mxu0
    %v5113 = vadd.f32 %v5060, %v5112
    %v5114 = vpop.f32.mrb[0].mxu0
    %v5115 = vadd.f32 %v5062, %v5114
    %v5116 = vpop.f32.mrb[0].mxu0
    %v5117 = vadd.f32 %v5064, %v5116
    %5118 = vdwg.mxu0
    %5119 = vmatprep.subr.bf16.mxu0 %v4801
    %5120 = vmatpush1.bf16.msra.mxu0 %v4800
    %5121 = vmatprep.subr.bf16.mxu0 %v4803
    %5122 = vmatpush1.bf16.msra.mxu0 %v4802
    %5123 = vmatprep.subr.bf16.mxu0 %v4805
    %5124 = vmatpush1.bf16.msra.mxu0 %v4804
    %5125 = vmatprep.subr.bf16.mxu0 %v4807
    %5126 = vmatpush1.bf16.msra.mxu0 %v4806
    %5127 = vmatprep.subr.bf16.mxu0 %v4809
    %5128 = vmatpush1.bf16.msra.mxu0 %v4808
    %5129 = vmatprep.subr.bf16.mxu0 %v4811
    %5130 = vmatpush1.bf16.msra.mxu0 %v4810
    %5131 = vmatprep.subr.bf16.mxu0 %v4813
    %5132 = vmatpush1.bf16.msra.mxu0 %v4812
    %5133 = vmatprep.subr.bf16.mxu0 %v4815
    %5134 = vmatpush1.bf16.msra.mxu0 %v4814
    %5135 = vmatprep.subr.bf16.mxu0 %v4817
    %5136 = vmatpush1.bf16.msra.mxu0 %v4816
    %5137 = vmatprep.subr.bf16.mxu0 %v4819
    %5138 = vmatpush1.bf16.msra.mxu0 %v4818
    %5139 = vmatprep.subr.bf16.mxu0 %v4821
    %5140 = vmatpush1.bf16.msra.mxu0 %v4820
    %5141 = vmatprep.subr.bf16.mxu0 %v4823
    %5142 = vmatpush1.bf16.msra.mxu0 %v4822
    %5143 = vmatprep.subr.bf16.mxu0 %v4825
    %5144 = vmatpush1.bf16.msra.mxu0 %v4824
    %5145 = vmatprep.subr.bf16.mxu0 %v4827
    %5146 = vmatpush1.bf16.msra.mxu0 %v4826
    %5147 = vmatprep.subr.bf16.mxu0 %v4829
    %5148 = vmatpush1.bf16.msra.mxu0 %v4828
    %5149 = vmatprep.subr.bf16.mxu0 %v4831
    %5150 = vmatpush1.bf16.msra.mxu0 %v4830
    %5151 = vmatprep.mubr.bf16.mxu0 %v4183
    %5152 = vmatmul.mubr.bf16.gmra.mrb[0].mxu0 %v4182
    %v5153 = vpop.f32.mrb[0].mxu0
    %v5154 = vadd.f32 %v5101, %v5153
    %v5155 = vpop.f32.mrb[0].mxu0
    %v5156 = vadd.f32 %v5103, %v5155
    %v5157 = vpop.f32.mrb[0].mxu0
    %v5158 = vadd.f32 %v5105, %v5157
    %v5159 = vpop.f32.mrb[0].mxu0
    %v5160 = vadd.f32 %v5107, %v5159
    %5161 = vmatprep.mubr.bf16.mxu0 %v4191
    %5162 = vmatmul.mubr.bf16.gmra.mrb[0].mxu0 %v4190
    %v5163 = vpop.f32.mrb[0].mxu0
    %v5164 = vadd.f32 %v5111, %v5163
    %v5165 = vpop.f32.mrb[0].mxu0
    %v5166 = vadd.f32 %v5113, %v5165
    %v5167 = vpop.f32.mrb[0].mxu0
    %v5168 = vadd.f32 %v5115, %v5167
    %v5169 = vpop.f32.mrb[0].mxu0
    %v5170 = vadd.f32 %v5117, %v5169
    %5171 = vdwg.mxu0
    %v5172 = vmax.f32 %v5154, 0.0
    %v5173 = vmax.f32 %v5156, 0.0
    %v5174 = vmax.f32 %v5158, 0.0
    %v5175 = vmax.f32 %v5160, 0.0
    %v5176 = vmax.f32 %v5164, 0.0
    %v5177 = vmax.f32 %v5166, 0.0
    %v5178 = vmax.f32 %v5168, 0.0
    %v5179 = vmax.f32 %v5170, 0.0
    %v5180 = vld [vmem:[%s8] sm:$0x3]
    %v5181 = vld [vmem:[%s9] sm:$0x3]
    %v5182 = vadd.f32 %v5172, %v5173
    %5183 = vadd.xlane.f32.xlu0 %v5182
    %v5184 = vpop.xlane.xlu0 %5183
    %v5185 = vadd.f32 %v5174, %v5175
    %5186 = vadd.xlane.f32.xlu0 %v5185
    %v5187 = vpop.xlane.xlu0 %5186
    %v5188 = vadd.f32 %v5176, %v5177
    %5189 = vadd.xlane.f32.xlu0 %v5188
    %v5190 = vpop.xlane.xlu0 %5189
    %v5191 = vadd.f32 %v5178, %v5179
    %5192 = vadd.xlane.f32.xlu0 %v5191
    %v5193 = vpop.xlane.xlu0 %5192
    %v5194 = vmul.f32 %v5184, %v3061
    %v5195 = vmul.f32 %v5187, %v3061
    %v5196 = vmul.f32 %v5190, %v3061
    %v5197 = vmul.f32 %v5193, %v3061
    %v5198 = vsub.f32 %v5172, %v5194
    %v5199 = vsub.f32 %v5173, %v5194
    %v5200 = vsub.f32 %v5174, %v5195
    %v5201 = vsub.f32 %v5175, %v5195
    %v5202 = vsub.f32 %v5176, %v5196
    %v5203 = vsub.f32 %v5177, %v5196
    %v5204 = vsub.f32 %v5178, %v5197
    %v5205 = vsub.f32 %v5179, %v5197
    %v5206 = vmul.f32 %v5198, %v5198
    %v5207 = vmul.f32 %v5199, %v5199
    %v5208 = vmul.f32 %v5200, %v5200
    %v5209 = vmul.f32 %v5201, %v5201
    %v5210 = vmul.f32 %v5202, %v5202
    %v5211 = vmul.f32 %v5203, %v5203
    %v5212 = vmul.f32 %v5204, %v5204
    %v5213 = vmul.f32 %v5205, %v5205
    %v5214 = vadd.f32 %v5206, %v5207
    %5215 = vadd.xlane.f32.xlu0 %v5214
    %v5216 = vpop.xlane.xlu0 %5215
    %v5217 = vadd.f32 %v5208, %v5209
    %5218 = vadd.xlane.f32.xlu0 %v5217
    %v5219 = vpop.xlane.xlu0 %5218
    %v5220 = vadd.f32 %v5210, %v5211
    %5221 = vadd.xlane.f32.xlu0 %v5220
    %v5222 = vpop.xlane.xlu0 %5221
    %v5223 = vadd.f32 %v5212, %v5213
    %5224 = vadd.xlane.f32.xlu0 %v5223
    %v5225 = vpop.xlane.xlu0 %5224
    %v5226 = vmul.f32 %v5216, %v3061
    %v5227 = vmul.f32 %v5219, %v3061
    %v5228 = vmul.f32 %v5222, %v3061
    %v5229 = vmul.f32 %v5225, %v3061
    %v5230 = vadd.f32 %v5226, 1e-05
    %v5231 = vadd.f32 %v5227, 1e-05
    %v5232 = vadd.f32 %v5228, 1e-05
    %v5233 = vadd.f32 %v5229, 1e-05
    %v5234 = vrsqrt.pop %v5230
    %v5235 = vrsqrt.pop %v5231
    %v5236 = vrsqrt.pop %v5232
    %v5237 = vrsqrt.pop %v5233
    %v5238 = vmul.f32 %v5198, %v5234
    %v5239 = vmul.f32 %v5199, %v5234
    %v5240 = vmul.f32 %v5200, %v5235
    %v5241 = vmul.f32 %v5201, %v5235
    %v5242 = vmul.f32 %v5202, %v5236
    %v5243 = vmul.f32 %v5203, %v5236
    %v5244 = vmul.f32 %v5204, %v5237
    %v5245 = vmul.f32 %v5205, %v5237
    %v5247 = vlaneseq
    %v5248 = vshrl.u32 %v5247, 7
    %v5249 = vsub.s32 0, %v5248
    %v5250 = vrot.slane %v5180, %v5249
    %v5251 = vlaneseq
    %v5252 = vshrl.u32 %v5251, 7
    %v5253 = vsub.s32 1, %v5252
    %v5254 = vrot.slane %v5180, %v5253
    %v5257 = vmul.f32 %v5238, %v5250
    %v5258 = vmul.f32 %v5239, %v5254
    %v5259 = vmul.f32 %v5240, %v5250
    %v5260 = vmul.f32 %v5241, %v5254
    %v5261 = vmul.f32 %v5242, %v5250
    %v5262 = vmul.f32 %v5243, %v5254
    %v5263 = vmul.f32 %v5244, %v5250
    %v5264 = vmul.f32 %v5245, %v5254
    %v5266 = vlaneseq
    %v5267 = vshrl.u32 %v5266, 7
    %v5268 = vsub.s32 0, %v5267
    %v5269 = vrot.slane %v5181, %v5268
    %v5270 = vlaneseq
    %v5271 = vshrl.u32 %v5270, 7
    %v5272 = vsub.s32 1, %v5271
    %v5273 = vrot.slane %v5181, %v5272
    %v5276 = vadd.f32 %v5257, %v5269
    %v5277 = vadd.f32 %v5258, %v5273
    %v5278 = vadd.f32 %v5259, %v5269
    %v5279 = vadd.f32 %v5260, %v5273
    %v5280 = vadd.f32 %v5261, %v5269
    %v5281 = vadd.f32 %v5262, %v5273
    %v5282 = vadd.f32 %v5263, %v5269
    %v5283 = vadd.f32 %v5264, %v5273
    %v5284 = vadd.f32 %v3152, %v5276
    %v5285 = vadd.f32 %v3153, %v5277
    %v5286 = vadd.f32 %v3154, %v5278
    %v5287 = vadd.f32 %v3155, %v5279
    %v5288 = vadd.f32 %v3156, %v5280
    %v5289 = vadd.f32 %v3157, %v5281
    %v5290 = vadd.f32 %v3158, %v5282
    %v5291 = vadd.f32 %v3159, %v5283
    %5292 = vst [vmem:[#allocation14] sm:$0xff] %v5284
    %5293 = vst [vmem:[#allocation14 + $0x8] sm:$0xff] %v5285
    %5294 = vst [vmem:[#allocation14 + $0x10] sm:$0xff] %v5286
    %5295 = vst [vmem:[#allocation14 + $0x18] sm:$0xff] %v5287
    %5296 = vst [vmem:[#allocation14 + $0x20] sm:$0xff] %v5288
    %5297 = vst [vmem:[#allocation14 + $0x28] sm:$0xff] %v5289
    %5298 = vst [vmem:[#allocation14 + $0x30] sm:$0xff] %v5290
    %5299 = vst [vmem:[#allocation14 + $0x38] sm:$0xff] %v5291
    // Predicated region
    $region66: #{tpu_custom_call.1} parent=1 // pred_check
      _
    $region67: #{tpu_custom_call.1} parent=1 // pred_check_branch
      %5301 = sbr.rel (0) target = $region69
    $region68: #{tpu_custom_call.1} parent=1 // pred_region
      %s5303 = ssub.s32 1024, 1024
      %5304 = vsyncadd [#allocation5], %s5303
      %s5305 = sshll.u32 [#allocation14], 4
      %s5306 = int_to_ptr.vmem [resolvable:$true] %s5305
      %5311 = dma.vmem_to_hbm [thread:$0]  %s5306, 1024, %s10, [#allocation5], 256, 256, 16
    $region69: #{tpu_custom_call.1} parent=1 // pred_fallthru
      _
    // Predicated region
    $region70: #{tpu_custom_call.1} parent=1 // pred_check
      _
    $region71: #{tpu_custom_call.1} parent=1 // pred_check_branch
      %5313 = sbr.rel (0) target = $region73
    $region72: #{tpu_custom_call.1} parent=1 // pred_region
      %5314 = dma.done [#allocation5], 1024
    $region73: #{tpu_custom_call.1} parent=1 // pred_fallthru
      _
    %5315 = vsyncpa [#allocation4], 1
    %5316 = vsyncpa [#allocation7], 1
    %5317 = vsyncpa [#allocation10], 1
    %5318 = vsyncpa [#allocation13], 1
    %5319 = vsyncpa [#allocation5], 1

</llo_original>
